<compile_context>
chip_gen: v5e
topology: v5e:2x2
jax: 0.10.0
libtpu: 0.0.40
codegen_flags: <defaults>
</compile_context>

<pallas_src>
import math
import functools

import jax
import jax.numpy as jnp
from jax.experimental import pallas as pl
from jax.experimental.pallas import tpu as pltpu


def _round_up(x, m):
    return (x + m - 1) // m * m


def _l1_attn_kernel(qT_ref, k_ref, o_ref, *, n_heads, width, scale):
    # qT_ref: (hw, TJ)        pre-transposed queries: row c = feature column c
    # k_ref : (TI, hw)        keys of this i-tile, heads flattened in lanes
    # o_ref : (n_heads, TI, TJ)  head-major output tile (lane dim = TJ, dense)
    ti = k_ref.shape[0]
    tj = qT_ref.shape[1]

    for h in range(n_heads):
        acc = jnp.zeros((ti, tj), jnp.float32)
        base = h * width
        w = 0
        while w < width:
            c = base + w
            # Outer L1 difference for one feature column, sliced from refs:
            #   k_ref[:, c]   -> (TI, 1) lane-broadcast
            #   qT_ref[c, :]  -> (1, TJ) sublane-broadcast
            # Pure VPU work in the input dtype (packed bf16 on v6e/v7x).
            d = jnp.abs(k_ref[:, c:c + 1] - qT_ref[c:c + 1, :])      # (TI, TJ)
            if w + 1 < width:
                c1 = c + 1
                # Pair-sum the next width step in the input dtype before the
                # single f32 accumulate (halves convert/f32-add sweeps for bf16).
                d = d + jnp.abs(k_ref[:, c1:c1 + 1] - qT_ref[c1:c1 + 1, :])
                w += 2
            else:
                w += 1
            acc = acc + d.astype(jnp.float32)
        o_ref[h] = (acc * scale).astype(o_ref.dtype)


def l1_attn(q, k, *, tile_i=128, tile_j=128, head_major=False, compute_dtype=None):
    """q, k: [bs, n_ctx, n_heads, width].

    head_major=False (default): returns [bs, n_ctx_i, n_ctx_j, n_heads] (PyTorch layout).
    head_major=True:            returns [bs, n_heads, n_ctx_i, n_ctx_j] (no extra HBM pass).
    compute_dtype: optional cast of q/k before the kernel (use jnp.float32 on
    v5e with bf16 inputs — v5e has no bf16 VALU).
    """
    bs, n_ctx, n_heads, width = q.shape
    assert k.shape == q.shape
    scale = -1.0 / math.sqrt(width)
    hw = n_heads * width

    # Heads/width flattened into lanes — a free reshape, no HBM transpose of k.
    k2 = k.reshape(bs, n_ctx, hw)
    # q (the small tensor) is transposed once so the kernel reads per-feature
    # rows directly; removes the per-i-block in-kernel q.T.
    qT = q.reshape(bs, n_ctx, hw).transpose(0, 2, 1)          # (bs, hw, n_ctx)

    if compute_dtype is not None:
        k2 = k2.astype(compute_dtype)
        qT = qT.astype(compute_dtype)

    # ---- tile sizes / padding -------------------------------------------
    # j (query) axis is the lane dim of every store: keep it a multiple of 128
    # so stores are unmasked / lane-dense.
    tj = tile_j
    nj_pad = _round_up(max(n_ctx, tj), tj)
    # i (key) axis is the sublane dim: a multiple of 8 suffices.
    ti = tile_i if n_ctx >= tile_i else _round_up(n_ctx, 8)
    ni_pad = _round_up(max(n_ctx, ti), ti)

    # v7x has 2 TensorCores: make sure the all-"parallel" grid has >= 2 steps
    # for tiny bs / n_ctx by splitting the i axis (sublane dim -> stores stay
    # lane-dense). No effect on v5e/v6e (1 TC).
    if bs * (ni_pad // ti) * (nj_pad // tj) == 1 and n_ctx >= 16:
        ti = _round_up(pl.cdiv(n_ctx, 2), 8)
        ni_pad = 2 * ti

    if qT.shape[2] != nj_pad:
        qT = jnp.pad(qT, ((0, 0), (0, 0), (0, nj_pad - qT.shape[2])))
    if k2.shape[1] != ni_pad:
        k2 = jnp.pad(k2, ((0, 0), (0, ni_pad - k2.shape[1]), (0, 0)))

    ni, nj = ni_pad // ti, nj_pad // tj
    grid = (bs, ni, nj)

    itemsize = jnp.dtype(qT.dtype).itemsize
    out_itemsize = jnp.dtype(q.dtype).itemsize
    cost = pl.CostEstimate(
        flops=int(3 * bs * n_heads * ni_pad * nj_pad * width),
        transcendentals=0,
        bytes_accessed=int(
            bs * hw * nj_pad * ni * itemsize            # q tiles (re-read per i block)
            + bs * hw * ni_pad * nj * itemsize          # k tiles (re-read per j block)
            + bs * n_heads * ni_pad * nj_pad * out_itemsize),  # padded output
    )

    out = pl.pallas_call(
        functools.partial(_l1_attn_kernel, n_heads=n_heads, width=width, scale=scale),
        out_shape=jax.ShapeDtypeStruct((bs, n_heads, ni_pad, nj_pad), q.dtype),
        grid=grid,
        in_specs=[
            pl.BlockSpec((None, hw, tj), lambda b, i, j: (b, 0, j)),   # qT tile (j)
            pl.BlockSpec((None, ti, hw), lambda b, i, j: (b, i, 0)),   # k  tile (i)
        ],
        out_specs=pl.BlockSpec((None, n_heads, ti, tj), lambda b, i, j: (b, 0, i, j)),
        compiler_params=pltpu.CompilerParams(
            dimension_semantics=("parallel", "parallel", "parallel"),
        ),
        cost_estimate=cost,
    )(qT, k2)

    if head_major:
        # Recommended fast path for a fused consumer: no layout round trip.
        return out[:, :, :n_ctx, :n_ctx]
    # PyTorch layout [bs, i, j, h]; the slice + permute fuse into one XLA copy.
    return jnp.transpose(out[:, :, :n_ctx, :n_ctx], (0, 2, 3, 1))


def l1_attn_reference(q, k):
    """Pure-JAX reference mirroring the PyTorch module exactly."""
    scale = -1.0 / math.sqrt(q.shape[-1])
    qq = q[:, None, :, :, :]                      # [bs, 1, n_ctx_j, h, w]
    kk = k[:, :, None, :, :]                      # [bs, n_ctx_i, 1, h, w]
    ww = jnp.abs(qq - kk) * scale
    return jnp.sum(ww, axis=-1)                   # [bs, n_ctx_i, n_ctx_j, h]


if __name__ == "__main__":
    key = jax.random.PRNGKey(0)
    rk = jax.random.split(key, 6)

    # 1) Small shape (bs=2 -> two grid steps, single i/j tile each).
    bs, n_ctx, n_heads, width = 2, 8, 4, 32
    q1 = jax.random.normal(rk[0], (bs, n_ctx, n_heads, width), dtype=jnp.float32)
    k1 = jax.random.normal(rk[1], (bs, n_ctx, n_heads, width), dtype=jnp.float32)
    attn1 = jax.block_until_ready(l1_attn(q1, k1))
    ref1 = jax.block_until_ready(l1_attn_reference(q1, k1))
    assert attn1.shape == (bs, n_ctx, n_ctx, n_heads), attn1.shape
    assert jnp.allclose(attn1, ref1, atol=1e-5, rtol=1e-5), "mismatch (small case)"

    # 2) Larger, non-multiple-of-tile shape -> tiled + padded path.
    bs2, n_ctx2, n_heads2, width2 = 1, 200, 2, 16
    q2 = jax.random.normal(rk[2], (bs2, n_ctx2, n_heads2, width2), dtype=jnp.float32)
    k2 = jax.random.normal(rk[3], (bs2, n_ctx2, n_heads2, width2), dtype=jnp.float32)
    attn2 = jax.block_until_ready(l1_attn(q2, k2))
    ref2 = jax.block_until_ready(l1_attn_reference(q2, k2))
    assert attn2.shape == (bs2, n_ctx2, n_ctx2, n_heads2), attn2.shape
    assert jnp.allclose(attn2, ref2, atol=1e-5, rtol=1e-5), "mismatch (tiled case)"

    # 3) bs=1, n_ctx<=128 -> exercises the i-axis split (>=2 grid steps for v7x)
    #    and the head_major fast path.
    bs3, n_ctx3, n_heads3, width3 = 1, 64, 2, 8
    q3 = jax.random.normal(rk[4], (bs3, n_ctx3, n_heads3, width3), dtype=jnp.float32)
    k3 = jax.random.normal(rk[5], (bs3, n_ctx3, n_heads3, width3), dtype=jnp.float32)
    attn3 = jax.block_until_ready(l1_attn(q3, k3))
    ref3 = jax.block_until_ready(l1_attn_reference(q3, k3))
    assert attn3.shape == (bs3, n_ctx3, n_ctx3, n_heads3), attn3.shape
    assert jnp.allclose(attn3, ref3, atol=1e-5, rtol=1e-5), "mismatch (split case)"

    hm3 = jax.block_until_ready(l1_attn(q3, k3, head_major=True))
    assert hm3.shape == (bs3, n_heads3, n_ctx3, n_ctx3), hm3.shape
    assert jnp.allclose(jnp.transpose(hm3, (0, 2, 3, 1)), ref3, atol=1e-5, rtol=1e-5), \
        "mismatch (head-major case)"

    print("KERNEL_OK")
</pallas_src>

<mosaic_0001>
module attributes {stable_mosaic.version = 11 : i64} {
  func.func @_l1_attn_kernel(%arg0: i32, %arg1: i32, %arg2: i32, %arg3: memref<1x128x128xf32, #tpu.memory_space<vmem>>, %arg4: memref<1x8x128xf32, #tpu.memory_space<vmem>>, %arg5: memref<1x4x8x128xf32, #tpu.memory_space<vmem>>) attributes {dimension_semantics = [#tpu.dimension_semantics<parallel>, #tpu.dimension_semantics<parallel>, #tpu.dimension_semantics<parallel>], iteration_bounds = array<i64: 2, 1, 1>, scalar_prefetch = 0 : i64, scratch_operands = 0 : i64, tpu.core_type = #tpu.core_type<tc>, window_params = [{transform_indices = @transform_0, window_bounds = array<i64: 1, 128, 128>}, {transform_indices = @transform_1, window_bounds = array<i64: 1, 8, 128>}, {transform_indices = @transform_2, window_bounds = array<i64: 1, 4, 8, 128>}]} {
    %cst = arith.constant 0.000000e+00 : f32
    %0 = vector.broadcast %cst : f32 to vector<8x128xf32>
    %c0 = arith.constant 0 : index
    %c0_0 = arith.constant 0 : index
    %c0_1 = arith.constant 0 : index
    %1 = vector.load %arg4[%c0, %c0_0, %c0_1] : memref<1x8x128xf32, #tpu.memory_space<vmem>>, vector<1x8x1xf32>
    %2 = vector.shape_cast %1 : vector<1x8x1xf32> to vector<8x1xf32>
    %c0_2 = arith.constant 0 : index
    %c0_3 = arith.constant 0 : index
    %c0_4 = arith.constant 0 : index
    %3 = vector.load %arg3[%c0_2, %c0_3, %c0_4] : memref<1x128x128xf32, #tpu.memory_space<vmem>>, vector<1x1x128xf32>
    %4 = vector.shape_cast %3 : vector<1x1x128xf32> to vector<1x128xf32>
    %5 = vector.broadcast %2 : vector<8x1xf32> to vector<8x128xf32>
    %6 = vector.broadcast %4 : vector<1x128xf32> to vector<8x128xf32>
    %7 = arith.subf %5, %6 : vector<8x128xf32>
    %8 = math.absf %7 : vector<8x128xf32>
    %c0_5 = arith.constant 0 : index
    %c0_6 = arith.constant 0 : index
    %c1 = arith.constant 1 : index
    %9 = vector.load %arg4[%c0_5, %c0_6, %c1] : memref<1x8x128xf32, #tpu.memory_space<vmem>>, vector<1x8x1xf32>
    %10 = vector.shape_cast %9 : vector<1x8x1xf32> to vector<8x1xf32>
    %c0_7 = arith.constant 0 : index
    %c1_8 = arith.constant 1 : index
    %c0_9 = arith.constant 0 : index
    %11 = vector.load %arg3[%c0_7, %c1_8, %c0_9] : memref<1x128x128xf32, #tpu.memory_space<vmem>>, vector<1x1x128xf32>
    %12 = vector.shape_cast %11 : vector<1x1x128xf32> to vector<1x128xf32>
    %13 = vector.broadcast %10 : vector<8x1xf32> to vector<8x128xf32>
    %14 = vector.broadcast %12 : vector<1x128xf32> to vector<8x128xf32>
    %15 = arith.subf %13, %14 : vector<8x128xf32>
    %16 = math.absf %15 : vector<8x128xf32>
    %17 = arith.addf %8, %16 : vector<8x128xf32>
    %18 = arith.addf %0, %17 : vector<8x128xf32>
    %c0_10 = arith.constant 0 : index
    %c0_11 = arith.constant 0 : index
    %c2 = arith.constant 2 : index
    %19 = vector.load %arg4[%c0_10, %c0_11, %c2] : memref<1x8x128xf32, #tpu.memory_space<vmem>>, vector<1x8x1xf32>
    %20 = vector.shape_cast %19 : vector<1x8x1xf32> to vector<8x1xf32>
    %c0_12 = arith.constant 0 : index
    %c2_13 = arith.constant 2 : index
    %c0_14 = arith.constant 0 : index
    %21 = vector.load %arg3[%c0_12, %c2_13, %c0_14] : memref<1x128x128xf32, #tpu.memory_space<vmem>>, vector<1x1x128xf32>
    %22 = vector.shape_cast %21 : vector<1x1x128xf32> to vector<1x128xf32>
    %23 = vector.broadcast %20 : vector<8x1xf32> to vector<8x128xf32>
    %24 = vector.broadcast %22 : vector<1x128xf32> to vector<8x128xf32>
    %25 = arith.subf %23, %24 : vector<8x128xf32>
    %26 = math.absf %25 : vector<8x128xf32>
    %c0_15 = arith.constant 0 : index
    %c0_16 = arith.constant 0 : index
    %c3 = arith.constant 3 : index
    %27 = vector.load %arg4[%c0_15, %c0_16, %c3] : memref<1x8x128xf32, #tpu.memory_space<vmem>>, vector<1x8x1xf32>
    %28 = vector.shape_cast %27 : vector<1x8x1xf32> to vector<8x1xf32>
    %c0_17 = arith.constant 0 : index
    %c3_18 = arith.constant 3 : index
    %c0_19 = arith.constant 0 : index
    %29 = vector.load %arg3[%c0_17, %c3_18, %c0_19] : memref<1x128x128xf32, #tpu.memory_space<vmem>>, vector<1x1x128xf32>
    %30 = vector.shape_cast %29 : vector<1x1x128xf32> to vector<1x128xf32>
    %31 = vector.broadcast %28 : vector<8x1xf32> to vector<8x128xf32>
    %32 = vector.broadcast %30 : vector<1x128xf32> to vector<8x128xf32>
    %33 = arith.subf %31, %32 : vector<8x128xf32>
    %34 = math.absf %33 : vector<8x128xf32>
    %35 = arith.addf %26, %34 : vector<8x128xf32>
    %36 = arith.addf %18, %35 : vector<8x128xf32>
    %c0_20 = arith.constant 0 : index
    %c0_21 = arith.constant 0 : index
    %c4 = arith.constant 4 : index
    %37 = vector.load %arg4[%c0_20, %c0_21, %c4] : memref<1x8x128xf32, #tpu.memory_space<vmem>>, vector<1x8x1xf32>
    %38 = vector.shape_cast %37 : vector<1x8x1xf32> to vector<8x1xf32>
    %c0_22 = arith.constant 0 : index
    %c4_23 = arith.constant 4 : index
    %c0_24 = arith.constant 0 : index
    %39 = vector.load %arg3[%c0_22, %c4_23, %c0_24] : memref<1x128x128xf32, #tpu.memory_space<vmem>>, vector<1x1x128xf32>
    %40 = vector.shape_cast %39 : vector<1x1x128xf32> to vector<1x128xf32>
    %41 = vector.broadcast %38 : vector<8x1xf32> to vector<8x128xf32>
    %42 = vector.broadcast %40 : vector<1x128xf32> to vector<8x128xf32>
    %43 = arith.subf %41, %42 : vector<8x128xf32>
    %44 = math.absf %43 : vector<8x128xf32>
    %c0_25 = arith.constant 0 : index
    %c0_26 = arith.constant 0 : index
    %c5 = arith.constant 5 : index
    %45 = vector.load %arg4[%c0_25, %c0_26, %c5] : memref<1x8x128xf32, #tpu.memory_space<vmem>>, vector<1x8x1xf32>
    %46 = vector.shape_cast %45 : vector<1x8x1xf32> to vector<8x1xf32>
    %c0_27 = arith.constant 0 : index
    %c5_28 = arith.constant 5 : index
    %c0_29 = arith.constant 0 : index
    %47 = vector.load %arg3[%c0_27, %c5_28, %c0_29] : memref<1x128x128xf32, #tpu.memory_space<vmem>>, vector<1x1x128xf32>
    %48 = vector.shape_cast %47 : vector<1x1x128xf32> to vector<1x128xf32>
    %49 = vector.broadcast %46 : vector<8x1xf32> to vector<8x128xf32>
    %50 = vector.broadcast %48 : vector<1x128xf32> to vector<8x128xf32>
    %51 = arith.subf %49, %50 : vector<8x128xf32>
    %52 = math.absf %51 : vector<8x128xf32>
    %53 = arith.addf %44, %52 : vector<8x128xf32>
    %54 = arith.addf %36, %53 : vector<8x128xf32>
    %c0_30 = arith.constant 0 : index
    %c0_31 = arith.constant 0 : index
    %c6 = arith.constant 6 : index
    %55 = vector.load %arg4[%c0_30, %c0_31, %c6] : memref<1x8x128xf32, #tpu.memory_space<vmem>>, vector<1x8x1xf32>
    %56 = vector.shape_cast %55 : vector<1x8x1xf32> to vector<8x1xf32>
    %c0_32 = arith.constant 0 : index
    %c6_33 = arith.constant 6 : index
    %c0_34 = arith.constant 0 : index
    %57 = vector.load %arg3[%c0_32, %c6_33, %c0_34] : memref<1x128x128xf32, #tpu.memory_space<vmem>>, vector<1x1x128xf32>
    %58 = vector.shape_cast %57 : vector<1x1x128xf32> to vector<1x128xf32>
    %59 = vector.broadcast %56 : vector<8x1xf32> to vector<8x128xf32>
    %60 = vector.broadcast %58 : vector<1x128xf32> to vector<8x128xf32>
    %61 = arith.subf %59, %60 : vector<8x128xf32>
    %62 = math.absf %61 : vector<8x128xf32>
    %c0_35 = arith.constant 0 : index
    %c0_36 = arith.constant 0 : index
    %c7 = arith.constant 7 : index
    %63 = vector.load %arg4[%c0_35, %c0_36, %c7] : memref<1x8x128xf32, #tpu.memory_space<vmem>>, vector<1x8x1xf32>
    %64 = vector.shape_cast %63 : vector<1x8x1xf32> to vector<8x1xf32>
    %c0_37 = arith.constant 0 : index
    %c7_38 = arith.constant 7 : index
    %c0_39 = arith.constant 0 : index
    %65 = vector.load %arg3[%c0_37, %c7_38, %c0_39] : memref<1x128x128xf32, #tpu.memory_space<vmem>>, vector<1x1x128xf32>
    %66 = vector.shape_cast %65 : vector<1x1x128xf32> to vector<1x128xf32>
    %67 = vector.broadcast %64 : vector<8x1xf32> to vector<8x128xf32>
    %68 = vector.broadcast %66 : vector<1x128xf32> to vector<8x128xf32>
    %69 = arith.subf %67, %68 : vector<8x128xf32>
    %70 = math.absf %69 : vector<8x128xf32>
    %71 = arith.addf %62, %70 : vector<8x128xf32>
    %72 = arith.addf %54, %71 : vector<8x128xf32>
    %c0_40 = arith.constant 0 : index
    %c0_41 = arith.constant 0 : index
    %c8 = arith.constant 8 : index
    %73 = vector.load %arg4[%c0_40, %c0_41, %c8] : memref<1x8x128xf32, #tpu.memory_space<vmem>>, vector<1x8x1xf32>
    %74 = vector.shape_cast %73 : vector<1x8x1xf32> to vector<8x1xf32>
    %c0_42 = arith.constant 0 : index
    %c8_43 = arith.constant 8 : index
    %c0_44 = arith.constant 0 : index
    %75 = vector.load %arg3[%c0_42, %c8_43, %c0_44] : memref<1x128x128xf32, #tpu.memory_space<vmem>>, vector<1x1x128xf32>
    %76 = vector.shape_cast %75 : vector<1x1x128xf32> to vector<1x128xf32>
    %77 = vector.broadcast %74 : vector<8x1xf32> to vector<8x128xf32>
    %78 = vector.broadcast %76 : vector<1x128xf32> to vector<8x128xf32>
    %79 = arith.subf %77, %78 : vector<8x128xf32>
    %80 = math.absf %79 : vector<8x128xf32>
    %c0_45 = arith.constant 0 : index
    %c0_46 = arith.constant 0 : index
    %c9 = arith.constant 9 : index
    %81 = vector.load %arg4[%c0_45, %c0_46, %c9] : memref<1x8x128xf32, #tpu.memory_space<vmem>>, vector<1x8x1xf32>
    %82 = vector.shape_cast %81 : vector<1x8x1xf32> to vector<8x1xf32>
    %c0_47 = arith.constant 0 : index
    %c9_48 = arith.constant 9 : index
    %c0_49 = arith.constant 0 : index
    %83 = vector.load %arg3[%c0_47, %c9_48, %c0_49] : memref<1x128x128xf32, #tpu.memory_space<vmem>>, vector<1x1x128xf32>
    %84 = vector.shape_cast %83 : vector<1x1x128xf32> to vector<1x128xf32>
    %85 = vector.broadcast %82 : vector<8x1xf32> to vector<8x128xf32>
    %86 = vector.broadcast %84 : vector<1x128xf32> to vector<8x128xf32>
    %87 = arith.subf %85, %86 : vector<8x128xf32>
    %88 = math.absf %87 : vector<8x128xf32>
    %89 = arith.addf %80, %88 : vector<8x128xf32>
    %90 = arith.addf %72, %89 : vector<8x128xf32>
    %c0_50 = arith.constant 0 : index
    %c0_51 = arith.constant 0 : index
    %c10 = arith.constant 10 : index
    %91 = vector.load %arg4[%c0_50, %c0_51, %c10] : memref<1x8x128xf32, #tpu.memory_space<vmem>>, vector<1x8x1xf32>
    %92 = vector.shape_cast %91 : vector<1x8x1xf32> to vector<8x1xf32>
    %c0_52 = arith.constant 0 : index
    %c10_53 = arith.constant 10 : index
    %c0_54 = arith.constant 0 : index
    %93 = vector.load %arg3[%c0_52, %c10_53, %c0_54] : memref<1x128x128xf32, #tpu.memory_space<vmem>>, vector<1x1x128xf32>
    %94 = vector.shape_cast %93 : vector<1x1x128xf32> to vector<1x128xf32>
    %95 = vector.broadcast %92 : vector<8x1xf32> to vector<8x128xf32>
    %96 = vector.broadcast %94 : vector<1x128xf32> to vector<8x128xf32>
    %97 = arith.subf %95, %96 : vector<8x128xf32>
    %98 = math.absf %97 : vector<8x128xf32>
    %c0_55 = arith.constant 0 : index
    %c0_56 = arith.constant 0 : index
    %c11 = arith.constant 11 : index
    %99 = vector.load %arg4[%c0_55, %c0_56, %c11] : memref<1x8x128xf32, #tpu.memory_space<vmem>>, vector<1x8x1xf32>
    %100 = vector.shape_cast %99 : vector<1x8x1xf32> to vector<8x1xf32>
    %c0_57 = arith.constant 0 : index
    %c11_58 = arith.constant 11 : index
    %c0_59 = arith.constant 0 : index
    %101 = vector.load %arg3[%c0_57, %c11_58, %c0_59] : memref<1x128x128xf32, #tpu.memory_space<vmem>>, vector<1x1x128xf32>
    %102 = vector.shape_cast %101 : vector<1x1x128xf32> to vector<1x128xf32>
    %103 = vector.broadcast %100 : vector<8x1xf32> to vector<8x128xf32>
    %104 = vector.broadcast %102 : vector<1x128xf32> to vector<8x128xf32>
    %105 = arith.subf %103, %104 : vector<8x128xf32>
    %106 = math.absf %105 : vector<8x128xf32>
    %107 = arith.addf %98, %106 : vector<8x128xf32>
    %108 = arith.addf %90, %107 : vector<8x128xf32>
    %c0_60 = arith.constant 0 : index
    %c0_61 = arith.constant 0 : index
    %c12 = arith.constant 12 : index
    %109 = vector.load %arg4[%c0_60, %c0_61, %c12] : memref<1x8x128xf32, #tpu.memory_space<vmem>>, vector<1x8x1xf32>
    %110 = vector.shape_cast %109 : vector<1x8x1xf32> to vector<8x1xf32>
    %c0_62 = arith.constant 0 : index
    %c12_63 = arith.constant 12 : index
    %c0_64 = arith.constant 0 : index
    %111 = vector.load %arg3[%c0_62, %c12_63, %c0_64] : memref<1x128x128xf32, #tpu.memory_space<vmem>>, vector<1x1x128xf32>
    %112 = vector.shape_cast %111 : vector<1x1x128xf32> to vector<1x128xf32>
    %113 = vector.broadcast %110 : vector<8x1xf32> to vector<8x128xf32>
    %114 = vector.broadcast %112 : vector<1x128xf32> to vector<8x128xf32>
    %115 = arith.subf %113, %114 : vector<8x128xf32>
    %116 = math.absf %115 : vector<8x128xf32>
    %c0_65 = arith.constant 0 : index
    %c0_66 = arith.constant 0 : index
    %c13 = arith.constant 13 : index
    %117 = vector.load %arg4[%c0_65, %c0_66, %c13] : memref<1x8x128xf32, #tpu.memory_space<vmem>>, vector<1x8x1xf32>
    %118 = vector.shape_cast %117 : vector<1x8x1xf32> to vector<8x1xf32>
    %c0_67 = arith.constant 0 : index
    %c13_68 = arith.constant 13 : index
    %c0_69 = arith.constant 0 : index
    %119 = vector.load %arg3[%c0_67, %c13_68, %c0_69] : memref<1x128x128xf32, #tpu.memory_space<vmem>>, vector<1x1x128xf32>
    %120 = vector.shape_cast %119 : vector<1x1x128xf32> to vector<1x128xf32>
    %121 = vector.broadcast %118 : vector<8x1xf32> to vector<8x128xf32>
    %122 = vector.broadcast %120 : vector<1x128xf32> to vector<8x128xf32>
    %123 = arith.subf %121, %122 : vector<8x128xf32>
    %124 = math.absf %123 : vector<8x128xf32>
    %125 = arith.addf %116, %124 : vector<8x128xf32>
    %126 = arith.addf %108, %125 : vector<8x128xf32>
    %c0_70 = arith.constant 0 : index
    %c0_71 = arith.constant 0 : index
    %c14 = arith.constant 14 : index
    %127 = vector.load %arg4[%c0_70, %c0_71, %c14] : memref<1x8x128xf32, #tpu.memory_space<vmem>>, vector<1x8x1xf32>
    %128 = vector.shape_cast %127 : vector<1x8x1xf32> to vector<8x1xf32>
    %c0_72 = arith.constant 0 : index
    %c14_73 = arith.constant 14 : index
    %c0_74 = arith.constant 0 : index
    %129 = vector.load %arg3[%c0_72, %c14_73, %c0_74] : memref<1x128x128xf32, #tpu.memory_space<vmem>>, vector<1x1x128xf32>
    %130 = vector.shape_cast %129 : vector<1x1x128xf32> to vector<1x128xf32>
    %131 = vector.broadcast %128 : vector<8x1xf32> to vector<8x128xf32>
    %132 = vector.broadcast %130 : vector<1x128xf32> to vector<8x128xf32>
    %133 = arith.subf %131, %132 : vector<8x128xf32>
    %134 = math.absf %133 : vector<8x128xf32>
    %c0_75 = arith.constant 0 : index
    %c0_76 = arith.constant 0 : index
    %c15 = arith.constant 15 : index
    %135 = vector.load %arg4[%c0_75, %c0_76, %c15] : memref<1x8x128xf32, #tpu.memory_space<vmem>>, vector<1x8x1xf32>
    %136 = vector.shape_cast %135 : vector<1x8x1xf32> to vector<8x1xf32>
    %c0_77 = arith.constant 0 : index
    %c15_78 = arith.constant 15 : index
    %c0_79 = arith.constant 0 : index
    %137 = vector.load %arg3[%c0_77, %c15_78, %c0_79] : memref<1x128x128xf32, #tpu.memory_space<vmem>>, vector<1x1x128xf32>
    %138 = vector.shape_cast %137 : vector<1x1x128xf32> to vector<1x128xf32>
    %139 = vector.broadcast %136 : vector<8x1xf32> to vector<8x128xf32>
    %140 = vector.broadcast %138 : vector<1x128xf32> to vector<8x128xf32>
    %141 = arith.subf %139, %140 : vector<8x128xf32>
    %142 = math.absf %141 : vector<8x128xf32>
    %143 = arith.addf %134, %142 : vector<8x128xf32>
    %144 = arith.addf %126, %143 : vector<8x128xf32>
    %c0_80 = arith.constant 0 : index
    %c0_81 = arith.constant 0 : index
    %c16 = arith.constant 16 : index
    %145 = vector.load %arg4[%c0_80, %c0_81, %c16] : memref<1x8x128xf32, #tpu.memory_space<vmem>>, vector<1x8x1xf32>
    %146 = vector.shape_cast %145 : vector<1x8x1xf32> to vector<8x1xf32>
    %c0_82 = arith.constant 0 : index
    %c16_83 = arith.constant 16 : index
    %c0_84 = arith.constant 0 : index
    %147 = vector.load %arg3[%c0_82, %c16_83, %c0_84] : memref<1x128x128xf32, #tpu.memory_space<vmem>>, vector<1x1x128xf32>
    %148 = vector.shape_cast %147 : vector<1x1x128xf32> to vector<1x128xf32>
    %149 = vector.broadcast %146 : vector<8x1xf32> to vector<8x128xf32>
    %150 = vector.broadcast %148 : vector<1x128xf32> to vector<8x128xf32>
    %151 = arith.subf %149, %150 : vector<8x128xf32>
    %152 = math.absf %151 : vector<8x128xf32>
    %c0_85 = arith.constant 0 : index
    %c0_86 = arith.constant 0 : index
    %c17 = arith.constant 17 : index
    %153 = vector.load %arg4[%c0_85, %c0_86, %c17] : memref<1x8x128xf32, #tpu.memory_space<vmem>>, vector<1x8x1xf32>
    %154 = vector.shape_cast %153 : vector<1x8x1xf32> to vector<8x1xf32>
    %c0_87 = arith.constant 0 : index
    %c17_88 = arith.constant 17 : index
    %c0_89 = arith.constant 0 : index
    %155 = vector.load %arg3[%c0_87, %c17_88, %c0_89] : memref<1x128x128xf32, #tpu.memory_space<vmem>>, vector<1x1x128xf32>
    %156 = vector.shape_cast %155 : vector<1x1x128xf32> to vector<1x128xf32>
    %157 = vector.broadcast %154 : vector<8x1xf32> to vector<8x128xf32>
    %158 = vector.broadcast %156 : vector<1x128xf32> to vector<8x128xf32>
    %159 = arith.subf %157, %158 : vector<8x128xf32>
    %160 = math.absf %159 : vector<8x128xf32>
    %161 = arith.addf %152, %160 : vector<8x128xf32>
    %162 = arith.addf %144, %161 : vector<8x128xf32>
    %c0_90 = arith.constant 0 : index
    %c0_91 = arith.constant 0 : index
    %c18 = arith.constant 18 : index
    %163 = vector.load %arg4[%c0_90, %c0_91, %c18] : memref<1x8x128xf32, #tpu.memory_space<vmem>>, vector<1x8x1xf32>
    %164 = vector.shape_cast %163 : vector<1x8x1xf32> to vector<8x1xf32>
    %c0_92 = arith.constant 0 : index
    %c18_93 = arith.constant 18 : index
    %c0_94 = arith.constant 0 : index
    %165 = vector.load %arg3[%c0_92, %c18_93, %c0_94] : memref<1x128x128xf32, #tpu.memory_space<vmem>>, vector<1x1x128xf32>
    %166 = vector.shape_cast %165 : vector<1x1x128xf32> to vector<1x128xf32>
    %167 = vector.broadcast %164 : vector<8x1xf32> to vector<8x128xf32>
    %168 = vector.broadcast %166 : vector<1x128xf32> to vector<8x128xf32>
    %169 = arith.subf %167, %168 : vector<8x128xf32>
    %170 = math.absf %169 : vector<8x128xf32>
    %c0_95 = arith.constant 0 : index
    %c0_96 = arith.constant 0 : index
    %c19 = arith.constant 19 : index
    %171 = vector.load %arg4[%c0_95, %c0_96, %c19] : memref<1x8x128xf32, #tpu.memory_space<vmem>>, vector<1x8x1xf32>
    %172 = vector.shape_cast %171 : vector<1x8x1xf32> to vector<8x1xf32>
    %c0_97 = arith.constant 0 : index
    %c19_98 = arith.constant 19 : index
    %c0_99 = arith.constant 0 : index
    %173 = vector.load %arg3[%c0_97, %c19_98, %c0_99] : memref<1x128x128xf32, #tpu.memory_space<vmem>>, vector<1x1x128xf32>
    %174 = vector.shape_cast %173 : vector<1x1x128xf32> to vector<1x128xf32>
    %175 = vector.broadcast %172 : vector<8x1xf32> to vector<8x128xf32>
    %176 = vector.broadcast %174 : vector<1x128xf32> to vector<8x128xf32>
    %177 = arith.subf %175, %176 : vector<8x128xf32>
    %178 = math.absf %177 : vector<8x128xf32>
    %179 = arith.addf %170, %178 : vector<8x128xf32>
    %180 = arith.addf %162, %179 : vector<8x128xf32>
    %c0_100 = arith.constant 0 : index
    %c0_101 = arith.constant 0 : index
    %c20 = arith.constant 20 : index
    %181 = vector.load %arg4[%c0_100, %c0_101, %c20] : memref<1x8x128xf32, #tpu.memory_space<vmem>>, vector<1x8x1xf32>
    %182 = vector.shape_cast %181 : vector<1x8x1xf32> to vector<8x1xf32>
    %c0_102 = arith.constant 0 : index
    %c20_103 = arith.constant 20 : index
    %c0_104 = arith.constant 0 : index
    %183 = vector.load %arg3[%c0_102, %c20_103, %c0_104] : memref<1x128x128xf32, #tpu.memory_space<vmem>>, vector<1x1x128xf32>
    %184 = vector.shape_cast %183 : vector<1x1x128xf32> to vector<1x128xf32>
    %185 = vector.broadcast %182 : vector<8x1xf32> to vector<8x128xf32>
    %186 = vector.broadcast %184 : vector<1x128xf32> to vector<8x128xf32>
    %187 = arith.subf %185, %186 : vector<8x128xf32>
    %188 = math.absf %187 : vector<8x128xf32>
    %c0_105 = arith.constant 0 : index
    %c0_106 = arith.constant 0 : index
    %c21 = arith.constant 21 : index
    %189 = vector.load %arg4[%c0_105, %c0_106, %c21] : memref<1x8x128xf32, #tpu.memory_space<vmem>>, vector<1x8x1xf32>
    %190 = vector.shape_cast %189 : vector<1x8x1xf32> to vector<8x1xf32>
    %c0_107 = arith.constant 0 : index
    %c21_108 = arith.constant 21 : index
    %c0_109 = arith.constant 0 : index
    %191 = vector.load %arg3[%c0_107, %c21_108, %c0_109] : memref<1x128x128xf32, #tpu.memory_space<vmem>>, vector<1x1x128xf32>
    %192 = vector.shape_cast %191 : vector<1x1x128xf32> to vector<1x128xf32>
    %193 = vector.broadcast %190 : vector<8x1xf32> to vector<8x128xf32>
    %194 = vector.broadcast %192 : vector<1x128xf32> to vector<8x128xf32>
    %195 = arith.subf %193, %194 : vector<8x128xf32>
    %196 = math.absf %195 : vector<8x128xf32>
    %197 = arith.addf %188, %196 : vector<8x128xf32>
    %198 = arith.addf %180, %197 : vector<8x128xf32>
    %c0_110 = arith.constant 0 : index
    %c0_111 = arith.constant 0 : index
    %c22 = arith.constant 22 : index
    %199 = vector.load %arg4[%c0_110, %c0_111, %c22] : memref<1x8x128xf32, #tpu.memory_space<vmem>>, vector<1x8x1xf32>
    %200 = vector.shape_cast %199 : vector<1x8x1xf32> to vector<8x1xf32>
    %c0_112 = arith.constant 0 : index
    %c22_113 = arith.constant 22 : index
    %c0_114 = arith.constant 0 : index
    %201 = vector.load %arg3[%c0_112, %c22_113, %c0_114] : memref<1x128x128xf32, #tpu.memory_space<vmem>>, vector<1x1x128xf32>
    %202 = vector.shape_cast %201 : vector<1x1x128xf32> to vector<1x128xf32>
    %203 = vector.broadcast %200 : vector<8x1xf32> to vector<8x128xf32>
    %204 = vector.broadcast %202 : vector<1x128xf32> to vector<8x128xf32>
    %205 = arith.subf %203, %204 : vector<8x128xf32>
    %206 = math.absf %205 : vector<8x128xf32>
    %c0_115 = arith.constant 0 : index
    %c0_116 = arith.constant 0 : index
    %c23 = arith.constant 23 : index
    %207 = vector.load %arg4[%c0_115, %c0_116, %c23] : memref<1x8x128xf32, #tpu.memory_space<vmem>>, vector<1x8x1xf32>
    %208 = vector.shape_cast %207 : vector<1x8x1xf32> to vector<8x1xf32>
    %c0_117 = arith.constant 0 : index
    %c23_118 = arith.constant 23 : index
    %c0_119 = arith.constant 0 : index
    %209 = vector.load %arg3[%c0_117, %c23_118, %c0_119] : memref<1x128x128xf32, #tpu.memory_space<vmem>>, vector<1x1x128xf32>
    %210 = vector.shape_cast %209 : vector<1x1x128xf32> to vector<1x128xf32>
    %211 = vector.broadcast %208 : vector<8x1xf32> to vector<8x128xf32>
    %212 = vector.broadcast %210 : vector<1x128xf32> to vector<8x128xf32>
    %213 = arith.subf %211, %212 : vector<8x128xf32>
    %214 = math.absf %213 : vector<8x128xf32>
    %215 = arith.addf %206, %214 : vector<8x128xf32>
    %216 = arith.addf %198, %215 : vector<8x128xf32>
    %c0_120 = arith.constant 0 : index
    %c0_121 = arith.constant 0 : index
    %c24 = arith.constant 24 : index
    %217 = vector.load %arg4[%c0_120, %c0_121, %c24] : memref<1x8x128xf32, #tpu.memory_space<vmem>>, vector<1x8x1xf32>
    %218 = vector.shape_cast %217 : vector<1x8x1xf32> to vector<8x1xf32>
    %c0_122 = arith.constant 0 : index
    %c24_123 = arith.constant 24 : index
    %c0_124 = arith.constant 0 : index
    %219 = vector.load %arg3[%c0_122, %c24_123, %c0_124] : memref<1x128x128xf32, #tpu.memory_space<vmem>>, vector<1x1x128xf32>
    %220 = vector.shape_cast %219 : vector<1x1x128xf32> to vector<1x128xf32>
    %221 = vector.broadcast %218 : vector<8x1xf32> to vector<8x128xf32>
    %222 = vector.broadcast %220 : vector<1x128xf32> to vector<8x128xf32>
    %223 = arith.subf %221, %222 : vector<8x128xf32>
    %224 = math.absf %223 : vector<8x128xf32>
    %c0_125 = arith.constant 0 : index
    %c0_126 = arith.constant 0 : index
    %c25 = arith.constant 25 : index
    %225 = vector.load %arg4[%c0_125, %c0_126, %c25] : memref<1x8x128xf32, #tpu.memory_space<vmem>>, vector<1x8x1xf32>
    %226 = vector.shape_cast %225 : vector<1x8x1xf32> to vector<8x1xf32>
    %c0_127 = arith.constant 0 : index
    %c25_128 = arith.constant 25 : index
    %c0_129 = arith.constant 0 : index
    %227 = vector.load %arg3[%c0_127, %c25_128, %c0_129] : memref<1x128x128xf32, #tpu.memory_space<vmem>>, vector<1x1x128xf32>
    %228 = vector.shape_cast %227 : vector<1x1x128xf32> to vector<1x128xf32>
    %229 = vector.broadcast %226 : vector<8x1xf32> to vector<8x128xf32>
    %230 = vector.broadcast %228 : vector<1x128xf32> to vector<8x128xf32>
    %231 = arith.subf %229, %230 : vector<8x128xf32>
    %232 = math.absf %231 : vector<8x128xf32>
    %233 = arith.addf %224, %232 : vector<8x128xf32>
    %234 = arith.addf %216, %233 : vector<8x128xf32>
    %c0_130 = arith.constant 0 : index
    %c0_131 = arith.constant 0 : index
    %c26 = arith.constant 26 : index
    %235 = vector.load %arg4[%c0_130, %c0_131, %c26] : memref<1x8x128xf32, #tpu.memory_space<vmem>>, vector<1x8x1xf32>
    %236 = vector.shape_cast %235 : vector<1x8x1xf32> to vector<8x1xf32>
    %c0_132 = arith.constant 0 : index
    %c26_133 = arith.constant 26 : index
    %c0_134 = arith.constant 0 : index
    %237 = vector.load %arg3[%c0_132, %c26_133, %c0_134] : memref<1x128x128xf32, #tpu.memory_space<vmem>>, vector<1x1x128xf32>
    %238 = vector.shape_cast %237 : vector<1x1x128xf32> to vector<1x128xf32>
    %239 = vector.broadcast %236 : vector<8x1xf32> to vector<8x128xf32>
    %240 = vector.broadcast %238 : vector<1x128xf32> to vector<8x128xf32>
    %241 = arith.subf %239, %240 : vector<8x128xf32>
    %242 = math.absf %241 : vector<8x128xf32>
    %c0_135 = arith.constant 0 : index
    %c0_136 = arith.constant 0 : index
    %c27 = arith.constant 27 : index
    %243 = vector.load %arg4[%c0_135, %c0_136, %c27] : memref<1x8x128xf32, #tpu.memory_space<vmem>>, vector<1x8x1xf32>
    %244 = vector.shape_cast %243 : vector<1x8x1xf32> to vector<8x1xf32>
    %c0_137 = arith.constant 0 : index
    %c27_138 = arith.constant 27 : index
    %c0_139 = arith.constant 0 : index
    %245 = vector.load %arg3[%c0_137, %c27_138, %c0_139] : memref<1x128x128xf32, #tpu.memory_space<vmem>>, vector<1x1x128xf32>
    %246 = vector.shape_cast %245 : vector<1x1x128xf32> to vector<1x128xf32>
    %247 = vector.broadcast %244 : vector<8x1xf32> to vector<8x128xf32>
    %248 = vector.broadcast %246 : vector<1x128xf32> to vector<8x128xf32>
    %249 = arith.subf %247, %248 : vector<8x128xf32>
    %250 = math.absf %249 : vector<8x128xf32>
    %251 = arith.addf %242, %250 : vector<8x128xf32>
    %252 = arith.addf %234, %251 : vector<8x128xf32>
    %c0_140 = arith.constant 0 : index
    %c0_141 = arith.constant 0 : index
    %c28 = arith.constant 28 : index
    %253 = vector.load %arg4[%c0_140, %c0_141, %c28] : memref<1x8x128xf32, #tpu.memory_space<vmem>>, vector<1x8x1xf32>
    %254 = vector.shape_cast %253 : vector<1x8x1xf32> to vector<8x1xf32>
    %c0_142 = arith.constant 0 : index
    %c28_143 = arith.constant 28 : index
    %c0_144 = arith.constant 0 : index
    %255 = vector.load %arg3[%c0_142, %c28_143, %c0_144] : memref<1x128x128xf32, #tpu.memory_space<vmem>>, vector<1x1x128xf32>
    %256 = vector.shape_cast %255 : vector<1x1x128xf32> to vector<1x128xf32>
    %257 = vector.broadcast %254 : vector<8x1xf32> to vector<8x128xf32>
    %258 = vector.broadcast %256 : vector<1x128xf32> to vector<8x128xf32>
    %259 = arith.subf %257, %258 : vector<8x128xf32>
    %260 = math.absf %259 : vector<8x128xf32>
    %c0_145 = arith.constant 0 : index
    %c0_146 = arith.constant 0 : index
    %c29 = arith.constant 29 : index
    %261 = vector.load %arg4[%c0_145, %c0_146, %c29] : memref<1x8x128xf32, #tpu.memory_space<vmem>>, vector<1x8x1xf32>
    %262 = vector.shape_cast %261 : vector<1x8x1xf32> to vector<8x1xf32>
    %c0_147 = arith.constant 0 : index
    %c29_148 = arith.constant 29 : index
    %c0_149 = arith.constant 0 : index
    %263 = vector.load %arg3[%c0_147, %c29_148, %c0_149] : memref<1x128x128xf32, #tpu.memory_space<vmem>>, vector<1x1x128xf32>
    %264 = vector.shape_cast %263 : vector<1x1x128xf32> to vector<1x128xf32>
    %265 = vector.broadcast %262 : vector<8x1xf32> to vector<8x128xf32>
    %266 = vector.broadcast %264 : vector<1x128xf32> to vector<8x128xf32>
    %267 = arith.subf %265, %266 : vector<8x128xf32>
    %268 = math.absf %267 : vector<8x128xf32>
    %269 = arith.addf %260, %268 : vector<8x128xf32>
    %270 = arith.addf %252, %269 : vector<8x128xf32>
    %c0_150 = arith.constant 0 : index
    %c0_151 = arith.constant 0 : index
    %c30 = arith.constant 30 : index
    %271 = vector.load %arg4[%c0_150, %c0_151, %c30] : memref<1x8x128xf32, #tpu.memory_space<vmem>>, vector<1x8x1xf32>
    %272 = vector.shape_cast %271 : vector<1x8x1xf32> to vector<8x1xf32>
    %c0_152 = arith.constant 0 : index
    %c30_153 = arith.constant 30 : index
    %c0_154 = arith.constant 0 : index
    %273 = vector.load %arg3[%c0_152, %c30_153, %c0_154] : memref<1x128x128xf32, #tpu.memory_space<vmem>>, vector<1x1x128xf32>
    %274 = vector.shape_cast %273 : vector<1x1x128xf32> to vector<1x128xf32>
    %275 = vector.broadcast %272 : vector<8x1xf32> to vector<8x128xf32>
    %276 = vector.broadcast %274 : vector<1x128xf32> to vector<8x128xf32>
    %277 = arith.subf %275, %276 : vector<8x128xf32>
    %278 = math.absf %277 : vector<8x128xf32>
    %c0_155 = arith.constant 0 : index
    %c0_156 = arith.constant 0 : index
    %c31 = arith.constant 31 : index
    %279 = vector.load %arg4[%c0_155, %c0_156, %c31] : memref<1x8x128xf32, #tpu.memory_space<vmem>>, vector<1x8x1xf32>
    %280 = vector.shape_cast %279 : vector<1x8x1xf32> to vector<8x1xf32>
    %c0_157 = arith.constant 0 : index
    %c31_158 = arith.constant 31 : index
    %c0_159 = arith.constant 0 : index
    %281 = vector.load %arg3[%c0_157, %c31_158, %c0_159] : memref<1x128x128xf32, #tpu.memory_space<vmem>>, vector<1x1x128xf32>
    %282 = vector.shape_cast %281 : vector<1x1x128xf32> to vector<1x128xf32>
    %283 = vector.broadcast %280 : vector<8x1xf32> to vector<8x128xf32>
    %284 = vector.broadcast %282 : vector<1x128xf32> to vector<8x128xf32>
    %285 = arith.subf %283, %284 : vector<8x128xf32>
    %286 = math.absf %285 : vector<8x128xf32>
    %287 = arith.addf %278, %286 : vector<8x128xf32>
    %288 = arith.addf %270, %287 : vector<8x128xf32>
    %cst_160 = arith.constant -0.176776692 : f32
    %289 = vector.broadcast %cst_160 : f32 to vector<8x128xf32>
    %290 = arith.mulf %288, %289 : vector<8x128xf32>
    %c0_161 = arith.constant 0 : index
    %c0_162 = arith.constant 0 : index
    %c0_163 = arith.constant 0 : index
    %c0_164 = arith.constant 0 : index
    %291 = vector.load %arg5[%c0_161, %c0_162, %c0_163, %c0_164] : memref<1x4x8x128xf32, #tpu.memory_space<vmem>>, vector<1x1x8x128xf32>
    %292 = vector.shape_cast %291 : vector<1x1x8x128xf32> to vector<8x128xf32>
    %293 = vector.shape_cast %290 : vector<8x128xf32> to vector<1x1x8x128xf32>
    tpu.vector_store %arg5[%c0_161, %c0_162, %c0_163, %c0_164], %293 {strides = array<i32>} : memref<1x4x8x128xf32, #tpu.memory_space<vmem>>, vector<1x1x8x128xf32>,
    %cst_165 = arith.constant 0.000000e+00 : f32
    %294 = vector.broadcast %cst_165 : f32 to vector<8x128xf32>
    %c0_166 = arith.constant 0 : index
    %c0_167 = arith.constant 0 : index
    %c32 = arith.constant 32 : index
    %295 = vector.load %arg4[%c0_166, %c0_167, %c32] : memref<1x8x128xf32, #tpu.memory_space<vmem>>, vector<1x8x1xf32>
    %296 = vector.shape_cast %295 : vector<1x8x1xf32> to vector<8x1xf32>
    %c0_168 = arith.constant 0 : index
    %c32_169 = arith.constant 32 : index
    %c0_170 = arith.constant 0 : index
    %297 = vector.load %arg3[%c0_168, %c32_169, %c0_170] : memref<1x128x128xf32, #tpu.memory_space<vmem>>, vector<1x1x128xf32>
    %298 = vector.shape_cast %297 : vector<1x1x128xf32> to vector<1x128xf32>
    %299 = vector.broadcast %296 : vector<8x1xf32> to vector<8x128xf32>
    %300 = vector.broadcast %298 : vector<1x128xf32> to vector<8x128xf32>
    %301 = arith.subf %299, %300 : vector<8x128xf32>
    %302 = math.absf %301 : vector<8x128xf32>
    %c0_171 = arith.constant 0 : index
    %c0_172 = arith.constant 0 : index
    %c33 = arith.constant 33 : index
    %303 = vector.load %arg4[%c0_171, %c0_172, %c33] : memref<1x8x128xf32, #tpu.memory_space<vmem>>, vector<1x8x1xf32>
    %304 = vector.shape_cast %303 : vector<1x8x1xf32> to vector<8x1xf32>
    %c0_173 = arith.constant 0 : index
    %c33_174 = arith.constant 33 : index
    %c0_175 = arith.constant 0 : index
    %305 = vector.load %arg3[%c0_173, %c33_174, %c0_175] : memref<1x128x128xf32, #tpu.memory_space<vmem>>, vector<1x1x128xf32>
    %306 = vector.shape_cast %305 : vector<1x1x128xf32> to vector<1x128xf32>
    %307 = vector.broadcast %304 : vector<8x1xf32> to vector<8x128xf32>
    %308 = vector.broadcast %306 : vector<1x128xf32> to vector<8x128xf32>
    %309 = arith.subf %307, %308 : vector<8x128xf32>
    %310 = math.absf %309 : vector<8x128xf32>
    %311 = arith.addf %302, %310 : vector<8x128xf32>
    %312 = arith.addf %294, %311 : vector<8x128xf32>
    %c0_176 = arith.constant 0 : index
    %c0_177 = arith.constant 0 : index
    %c34 = arith.constant 34 : index
    %313 = vector.load %arg4[%c0_176, %c0_177, %c34] : memref<1x8x128xf32, #tpu.memory_space<vmem>>, vector<1x8x1xf32>
    %314 = vector.shape_cast %313 : vector<1x8x1xf32> to vector<8x1xf32>
    %c0_178 = arith.constant 0 : index
    %c34_179 = arith.constant 34 : index
    %c0_180 = arith.constant 0 : index
    %315 = vector.load %arg3[%c0_178, %c34_179, %c0_180] : memref<1x128x128xf32, #tpu.memory_space<vmem>>, vector<1x1x128xf32>
    %316 = vector.shape_cast %315 : vector<1x1x128xf32> to vector<1x128xf32>
    %317 = vector.broadcast %314 : vector<8x1xf32> to vector<8x128xf32>
    %318 = vector.broadcast %316 : vector<1x128xf32> to vector<8x128xf32>
    %319 = arith.subf %317, %318 : vector<8x128xf32>
    %320 = math.absf %319 : vector<8x128xf32>
    %c0_181 = arith.constant 0 : index
    %c0_182 = arith.constant 0 : index
    %c35 = arith.constant 35 : index
    %321 = vector.load %arg4[%c0_181, %c0_182, %c35] : memref<1x8x128xf32, #tpu.memory_space<vmem>>, vector<1x8x1xf32>
    %322 = vector.shape_cast %321 : vector<1x8x1xf32> to vector<8x1xf32>
    %c0_183 = arith.constant 0 : index
    %c35_184 = arith.constant 35 : index
    %c0_185 = arith.constant 0 : index
    %323 = vector.load %arg3[%c0_183, %c35_184, %c0_185] : memref<1x128x128xf32, #tpu.memory_space<vmem>>, vector<1x1x128xf32>
    %324 = vector.shape_cast %323 : vector<1x1x128xf32> to vector<1x128xf32>
    %325 = vector.broadcast %322 : vector<8x1xf32> to vector<8x128xf32>
    %326 = vector.broadcast %324 : vector<1x128xf32> to vector<8x128xf32>
    %327 = arith.subf %325, %326 : vector<8x128xf32>
    %328 = math.absf %327 : vector<8x128xf32>
    %329 = arith.addf %320, %328 : vector<8x128xf32>
    %330 = arith.addf %312, %329 : vector<8x128xf32>
    %c0_186 = arith.constant 0 : index
    %c0_187 = arith.constant 0 : index
    %c36 = arith.constant 36 : index
    %331 = vector.load %arg4[%c0_186, %c0_187, %c36] : memref<1x8x128xf32, #tpu.memory_space<vmem>>, vector<1x8x1xf32>
    %332 = vector.shape_cast %331 : vector<1x8x1xf32> to vector<8x1xf32>
    %c0_188 = arith.constant 0 : index
    %c36_189 = arith.constant 36 : index
    %c0_190 = arith.constant 0 : index
    %333 = vector.load %arg3[%c0_188, %c36_189, %c0_190] : memref<1x128x128xf32, #tpu.memory_space<vmem>>, vector<1x1x128xf32>
    %334 = vector.shape_cast %333 : vector<1x1x128xf32> to vector<1x128xf32>
    %335 = vector.broadcast %332 : vector<8x1xf32> to vector<8x128xf32>
    %336 = vector.broadcast %334 : vector<1x128xf32> to vector<8x128xf32>
    %337 = arith.subf %335, %336 : vector<8x128xf32>
    %338 = math.absf %337 : vector<8x128xf32>
    %c0_191 = arith.constant 0 : index
    %c0_192 = arith.constant 0 : index
    %c37 = arith.constant 37 : index
    %339 = vector.load %arg4[%c0_191, %c0_192, %c37] : memref<1x8x128xf32, #tpu.memory_space<vmem>>, vector<1x8x1xf32>
    %340 = vector.shape_cast %339 : vector<1x8x1xf32> to vector<8x1xf32>
    %c0_193 = arith.constant 0 : index
    %c37_194 = arith.constant 37 : index
    %c0_195 = arith.constant 0 : index
    %341 = vector.load %arg3[%c0_193, %c37_194, %c0_195] : memref<1x128x128xf32, #tpu.memory_space<vmem>>, vector<1x1x128xf32>
    %342 = vector.shape_cast %341 : vector<1x1x128xf32> to vector<1x128xf32>
    %343 = vector.broadcast %340 : vector<8x1xf32> to vector<8x128xf32>
    %344 = vector.broadcast %342 : vector<1x128xf32> to vector<8x128xf32>
    %345 = arith.subf %343, %344 : vector<8x128xf32>
    %346 = math.absf %345 : vector<8x128xf32>
    %347 = arith.addf %338, %346 : vector<8x128xf32>
    %348 = arith.addf %330, %347 : vector<8x128xf32>
    %c0_196 = arith.constant 0 : index
    %c0_197 = arith.constant 0 : index
    %c38 = arith.constant 38 : index
    %349 = vector.load %arg4[%c0_196, %c0_197, %c38] : memref<1x8x128xf32, #tpu.memory_space<vmem>>, vector<1x8x1xf32>
    %350 = vector.shape_cast %349 : vector<1x8x1xf32> to vector<8x1xf32>
    %c0_198 = arith.constant 0 : index
    %c38_199 = arith.constant 38 : index
    %c0_200 = arith.constant 0 : index
    %351 = vector.load %arg3[%c0_198, %c38_199, %c0_200] : memref<1x128x128xf32, #tpu.memory_space<vmem>>, vector<1x1x128xf32>
    %352 = vector.shape_cast %351 : vector<1x1x128xf32> to vector<1x128xf32>
    %353 = vector.broadcast %350 : vector<8x1xf32> to vector<8x128xf32>
    %354 = vector.broadcast %352 : vector<1x128xf32> to vector<8x128xf32>
    %355 = arith.subf %353, %354 : vector<8x128xf32>
    %356 = math.absf %355 : vector<8x128xf32>
    %c0_201 = arith.constant 0 : index
    %c0_202 = arith.constant 0 : index
    %c39 = arith.constant 39 : index
    %357 = vector.load %arg4[%c0_201, %c0_202, %c39] : memref<1x8x128xf32, #tpu.memory_space<vmem>>, vector<1x8x1xf32>
    %358 = vector.shape_cast %357 : vector<1x8x1xf32> to vector<8x1xf32>
    %c0_203 = arith.constant 0 : index
    %c39_204 = arith.constant 39 : index
    %c0_205 = arith.constant 0 : index
    %359 = vector.load %arg3[%c0_203, %c39_204, %c0_205] : memref<1x128x128xf32, #tpu.memory_space<vmem>>, vector<1x1x128xf32>
    %360 = vector.shape_cast %359 : vector<1x1x128xf32> to vector<1x128xf32>
    %361 = vector.broadcast %358 : vector<8x1xf32> to vector<8x128xf32>
    %362 = vector.broadcast %360 : vector<1x128xf32> to vector<8x128xf32>
    %363 = arith.subf %361, %362 : vector<8x128xf32>
    %364 = math.absf %363 : vector<8x128xf32>
    %365 = arith.addf %356, %364 : vector<8x128xf32>
    %366 = arith.addf %348, %365 : vector<8x128xf32>
    %c0_206 = arith.constant 0 : index
    %c0_207 = arith.constant 0 : index
    %c40 = arith.constant 40 : index
    %367 = vector.load %arg4[%c0_206, %c0_207, %c40] : memref<1x8x128xf32, #tpu.memory_space<vmem>>, vector<1x8x1xf32>
    %368 = vector.shape_cast %367 : vector<1x8x1xf32> to vector<8x1xf32>
    %c0_208 = arith.constant 0 : index
    %c40_209 = arith.constant 40 : index
    %c0_210 = arith.constant 0 : index
    %369 = vector.load %arg3[%c0_208, %c40_209, %c0_210] : memref<1x128x128xf32, #tpu.memory_space<vmem>>, vector<1x1x128xf32>
    %370 = vector.shape_cast %369 : vector<1x1x128xf32> to vector<1x128xf32>
    %371 = vector.broadcast %368 : vector<8x1xf32> to vector<8x128xf32>
    %372 = vector.broadcast %370 : vector<1x128xf32> to vector<8x128xf32>
    %373 = arith.subf %371, %372 : vector<8x128xf32>
    %374 = math.absf %373 : vector<8x128xf32>
    %c0_211 = arith.constant 0 : index
    %c0_212 = arith.constant 0 : index
    %c41 = arith.constant 41 : index
    %375 = vector.load %arg4[%c0_211, %c0_212, %c41] : memref<1x8x128xf32, #tpu.memory_space<vmem>>, vector<1x8x1xf32>
    %376 = vector.shape_cast %375 : vector<1x8x1xf32> to vector<8x1xf32>
    %c0_213 = arith.constant 0 : index
    %c41_214 = arith.constant 41 : index
    %c0_215 = arith.constant 0 : index
    %377 = vector.load %arg3[%c0_213, %c41_214, %c0_215] : memref<1x128x128xf32, #tpu.memory_space<vmem>>, vector<1x1x128xf32>
    %378 = vector.shape_cast %377 : vector<1x1x128xf32> to vector<1x128xf32>
    %379 = vector.broadcast %376 : vector<8x1xf32> to vector<8x128xf32>
    %380 = vector.broadcast %378 : vector<1x128xf32> to vector<8x128xf32>
    %381 = arith.subf %379, %380 : vector<8x128xf32>
    %382 = math.absf %381 : vector<8x128xf32>
    %383 = arith.addf %374, %382 : vector<8x128xf32>
    %384 = arith.addf %366, %383 : vector<8x128xf32>
    %c0_216 = arith.constant 0 : index
    %c0_217 = arith.constant 0 : index
    %c42 = arith.constant 42 : index
    %385 = vector.load %arg4[%c0_216, %c0_217, %c42] : memref<1x8x128xf32, #tpu.memory_space<vmem>>, vector<1x8x1xf32>
    %386 = vector.shape_cast %385 : vector<1x8x1xf32> to vector<8x1xf32>
    %c0_218 = arith.constant 0 : index
    %c42_219 = arith.constant 42 : index
    %c0_220 = arith.constant 0 : index
    %387 = vector.load %arg3[%c0_218, %c42_219, %c0_220] : memref<1x128x128xf32, #tpu.memory_space<vmem>>, vector<1x1x128xf32>
    %388 = vector.shape_cast %387 : vector<1x1x128xf32> to vector<1x128xf32>
    %389 = vector.broadcast %386 : vector<8x1xf32> to vector<8x128xf32>
    %390 = vector.broadcast %388 : vector<1x128xf32> to vector<8x128xf32>
    %391 = arith.subf %389, %390 : vector<8x128xf32>
    %392 = math.absf %391 : vector<8x128xf32>
    %c0_221 = arith.constant 0 : index
    %c0_222 = arith.constant 0 : index
    %c43 = arith.constant 43 : index
    %393 = vector.load %arg4[%c0_221, %c0_222, %c43] : memref<1x8x128xf32, #tpu.memory_space<vmem>>, vector<1x8x1xf32>
    %394 = vector.shape_cast %393 : vector<1x8x1xf32> to vector<8x1xf32>
    %c0_223 = arith.constant 0 : index
    %c43_224 = arith.constant 43 : index
    %c0_225 = arith.constant 0 : index
    %395 = vector.load %arg3[%c0_223, %c43_224, %c0_225] : memref<1x128x128xf32, #tpu.memory_space<vmem>>, vector<1x1x128xf32>
    %396 = vector.shape_cast %395 : vector<1x1x128xf32> to vector<1x128xf32>
    %397 = vector.broadcast %394 : vector<8x1xf32> to vector<8x128xf32>
    %398 = vector.broadcast %396 : vector<1x128xf32> to vector<8x128xf32>
    %399 = arith.subf %397, %398 : vector<8x128xf32>
    %400 = math.absf %399 : vector<8x128xf32>
    %401 = arith.addf %392, %400 : vector<8x128xf32>
    %402 = arith.addf %384, %401 : vector<8x128xf32>
    %c0_226 = arith.constant 0 : index
    %c0_227 = arith.constant 0 : index
    %c44 = arith.constant 44 : index
    %403 = vector.load %arg4[%c0_226, %c0_227, %c44] : memref<1x8x128xf32, #tpu.memory_space<vmem>>, vector<1x8x1xf32>
    %404 = vector.shape_cast %403 : vector<1x8x1xf32> to vector<8x1xf32>
    %c0_228 = arith.constant 0 : index
    %c44_229 = arith.constant 44 : index
    %c0_230 = arith.constant 0 : index
    %405 = vector.load %arg3[%c0_228, %c44_229, %c0_230] : memref<1x128x128xf32, #tpu.memory_space<vmem>>, vector<1x1x128xf32>
    %406 = vector.shape_cast %405 : vector<1x1x128xf32> to vector<1x128xf32>
    %407 = vector.broadcast %404 : vector<8x1xf32> to vector<8x128xf32>
    %408 = vector.broadcast %406 : vector<1x128xf32> to vector<8x128xf32>
    %409 = arith.subf %407, %408 : vector<8x128xf32>
    %410 = math.absf %409 : vector<8x128xf32>
    %c0_231 = arith.constant 0 : index
    %c0_232 = arith.constant 0 : index
    %c45 = arith.constant 45 : index
    %411 = vector.load %arg4[%c0_231, %c0_232, %c45] : memref<1x8x128xf32, #tpu.memory_space<vmem>>, vector<1x8x1xf32>
    %412 = vector.shape_cast %411 : vector<1x8x1xf32> to vector<8x1xf32>
    %c0_233 = arith.constant 0 : index
    %c45_234 = arith.constant 45 : index
    %c0_235 = arith.constant 0 : index
    %413 = vector.load %arg3[%c0_233, %c45_234, %c0_235] : memref<1x128x128xf32, #tpu.memory_space<vmem>>, vector<1x1x128xf32>
    %414 = vector.shape_cast %413 : vector<1x1x128xf32> to vector<1x128xf32>
    %415 = vector.broadcast %412 : vector<8x1xf32> to vector<8x128xf32>
    %416 = vector.broadcast %414 : vector<1x128xf32> to vector<8x128xf32>
    %417 = arith.subf %415, %416 : vector<8x128xf32>
    %418 = math.absf %417 : vector<8x128xf32>
    %419 = arith.addf %410, %418 : vector<8x128xf32>
    %420 = arith.addf %402, %419 : vector<8x128xf32>
    %c0_236 = arith.constant 0 : index
    %c0_237 = arith.constant 0 : index
    %c46 = arith.constant 46 : index
    %421 = vector.load %arg4[%c0_236, %c0_237, %c46] : memref<1x8x128xf32, #tpu.memory_space<vmem>>, vector<1x8x1xf32>
    %422 = vector.shape_cast %421 : vector<1x8x1xf32> to vector<8x1xf32>
    %c0_238 = arith.constant 0 : index
    %c46_239 = arith.constant 46 : index
    %c0_240 = arith.constant 0 : index
    %423 = vector.load %arg3[%c0_238, %c46_239, %c0_240] : memref<1x128x128xf32, #tpu.memory_space<vmem>>, vector<1x1x128xf32>
    %424 = vector.shape_cast %423 : vector<1x1x128xf32> to vector<1x128xf32>
    %425 = vector.broadcast %422 : vector<8x1xf32> to vector<8x128xf32>
    %426 = vector.broadcast %424 : vector<1x128xf32> to vector<8x128xf32>
    %427 = arith.subf %425, %426 : vector<8x128xf32>
    %428 = math.absf %427 : vector<8x128xf32>
    %c0_241 = arith.constant 0 : index
    %c0_242 = arith.constant 0 : index
    %c47 = arith.constant 47 : index
    %429 = vector.load %arg4[%c0_241, %c0_242, %c47] : memref<1x8x128xf32, #tpu.memory_space<vmem>>, vector<1x8x1xf32>
    %430 = vector.shape_cast %429 : vector<1x8x1xf32> to vector<8x1xf32>
    %c0_243 = arith.constant 0 : index
    %c47_244 = arith.constant 47 : index
    %c0_245 = arith.constant 0 : index
    %431 = vector.load %arg3[%c0_243, %c47_244, %c0_245] : memref<1x128x128xf32, #tpu.memory_space<vmem>>, vector<1x1x128xf32>
    %432 = vector.shape_cast %431 : vector<1x1x128xf32> to vector<1x128xf32>
    %433 = vector.broadcast %430 : vector<8x1xf32> to vector<8x128xf32>
    %434 = vector.broadcast %432 : vector<1x128xf32> to vector<8x128xf32>
    %435 = arith.subf %433, %434 : vector<8x128xf32>
    %436 = math.absf %435 : vector<8x128xf32>
    %437 = arith.addf %428, %436 : vector<8x128xf32>
    %438 = arith.addf %420, %437 : vector<8x128xf32>
    %c0_246 = arith.constant 0 : index
    %c0_247 = arith.constant 0 : index
    %c48 = arith.constant 48 : index
    %439 = vector.load %arg4[%c0_246, %c0_247, %c48] : memref<1x8x128xf32, #tpu.memory_space<vmem>>, vector<1x8x1xf32>
    %440 = vector.shape_cast %439 : vector<1x8x1xf32> to vector<8x1xf32>
    %c0_248 = arith.constant 0 : index
    %c48_249 = arith.constant 48 : index
    %c0_250 = arith.constant 0 : index
    %441 = vector.load %arg3[%c0_248, %c48_249, %c0_250] : memref<1x128x128xf32, #tpu.memory_space<vmem>>, vector<1x1x128xf32>
    %442 = vector.shape_cast %441 : vector<1x1x128xf32> to vector<1x128xf32>
    %443 = vector.broadcast %440 : vector<8x1xf32> to vector<8x128xf32>
    %444 = vector.broadcast %442 : vector<1x128xf32> to vector<8x128xf32>
    %445 = arith.subf %443, %444 : vector<8x128xf32>
    %446 = math.absf %445 : vector<8x128xf32>
    %c0_251 = arith.constant 0 : index
    %c0_252 = arith.constant 0 : index
    %c49 = arith.constant 49 : index
    %447 = vector.load %arg4[%c0_251, %c0_252, %c49] : memref<1x8x128xf32, #tpu.memory_space<vmem>>, vector<1x8x1xf32>
    %448 = vector.shape_cast %447 : vector<1x8x1xf32> to vector<8x1xf32>
    %c0_253 = arith.constant 0 : index
    %c49_254 = arith.constant 49 : index
    %c0_255 = arith.constant 0 : index
    %449 = vector.load %arg3[%c0_253, %c49_254, %c0_255] : memref<1x128x128xf32, #tpu.memory_space<vmem>>, vector<1x1x128xf32>
    %450 = vector.shape_cast %449 : vector<1x1x128xf32> to vector<1x128xf32>
    %451 = vector.broadcast %448 : vector<8x1xf32> to vector<8x128xf32>
    %452 = vector.broadcast %450 : vector<1x128xf32> to vector<8x128xf32>
    %453 = arith.subf %451, %452 : vector<8x128xf32>
    %454 = math.absf %453 : vector<8x128xf32>
    %455 = arith.addf %446, %454 : vector<8x128xf32>
    %456 = arith.addf %438, %455 : vector<8x128xf32>
    %c0_256 = arith.constant 0 : index
    %c0_257 = arith.constant 0 : index
    %c50 = arith.constant 50 : index
    %457 = vector.load %arg4[%c0_256, %c0_257, %c50] : memref<1x8x128xf32, #tpu.memory_space<vmem>>, vector<1x8x1xf32>
    %458 = vector.shape_cast %457 : vector<1x8x1xf32> to vector<8x1xf32>
    %c0_258 = arith.constant 0 : index
    %c50_259 = arith.constant 50 : index
    %c0_260 = arith.constant 0 : index
    %459 = vector.load %arg3[%c0_258, %c50_259, %c0_260] : memref<1x128x128xf32, #tpu.memory_space<vmem>>, vector<1x1x128xf32>
    %460 = vector.shape_cast %459 : vector<1x1x128xf32> to vector<1x128xf32>
    %461 = vector.broadcast %458 : vector<8x1xf32> to vector<8x128xf32>
    %462 = vector.broadcast %460 : vector<1x128xf32> to vector<8x128xf32>
    %463 = arith.subf %461, %462 : vector<8x128xf32>
    %464 = math.absf %463 : vector<8x128xf32>
    %c0_261 = arith.constant 0 : index
    %c0_262 = arith.constant 0 : index
    %c51 = arith.constant 51 : index
    %465 = vector.load %arg4[%c0_261, %c0_262, %c51] : memref<1x8x128xf32, #tpu.memory_space<vmem>>, vector<1x8x1xf32>
    %466 = vector.shape_cast %465 : vector<1x8x1xf32> to vector<8x1xf32>
    %c0_263 = arith.constant 0 : index
    %c51_264 = arith.constant 51 : index
    %c0_265 = arith.constant 0 : index
    %467 = vector.load %arg3[%c0_263, %c51_264, %c0_265] : memref<1x128x128xf32, #tpu.memory_space<vmem>>, vector<1x1x128xf32>
    %468 = vector.shape_cast %467 : vector<1x1x128xf32> to vector<1x128xf32>
    %469 = vector.broadcast %466 : vector<8x1xf32> to vector<8x128xf32>
    %470 = vector.broadcast %468 : vector<1x128xf32> to vector<8x128xf32>
    %471 = arith.subf %469, %470 : vector<8x128xf32>
    %472 = math.absf %471 : vector<8x128xf32>
    %473 = arith.addf %464, %472 : vector<8x128xf32>
    %474 = arith.addf %456, %473 : vector<8x128xf32>
    %c0_266 = arith.constant 0 : index
    %c0_267 = arith.constant 0 : index
    %c52 = arith.constant 52 : index
    %475 = vector.load %arg4[%c0_266, %c0_267, %c52] : memref<1x8x128xf32, #tpu.memory_space<vmem>>, vector<1x8x1xf32>
    %476 = vector.shape_cast %475 : vector<1x8x1xf32> to vector<8x1xf32>
    %c0_268 = arith.constant 0 : index
    %c52_269 = arith.constant 52 : index
    %c0_270 = arith.constant 0 : index
    %477 = vector.load %arg3[%c0_268, %c52_269, %c0_270] : memref<1x128x128xf32, #tpu.memory_space<vmem>>, vector<1x1x128xf32>
    %478 = vector.shape_cast %477 : vector<1x1x128xf32> to vector<1x128xf32>
    %479 = vector.broadcast %476 : vector<8x1xf32> to vector<8x128xf32>
    %480 = vector.broadcast %478 : vector<1x128xf32> to vector<8x128xf32>
    %481 = arith.subf %479, %480 : vector<8x128xf32>
    %482 = math.absf %481 : vector<8x128xf32>
    %c0_271 = arith.constant 0 : index
    %c0_272 = arith.constant 0 : index
    %c53 = arith.constant 53 : index
    %483 = vector.load %arg4[%c0_271, %c0_272, %c53] : memref<1x8x128xf32, #tpu.memory_space<vmem>>, vector<1x8x1xf32>
    %484 = vector.shape_cast %483 : vector<1x8x1xf32> to vector<8x1xf32>
    %c0_273 = arith.constant 0 : index
    %c53_274 = arith.constant 53 : index
    %c0_275 = arith.constant 0 : index
    %485 = vector.load %arg3[%c0_273, %c53_274, %c0_275] : memref<1x128x128xf32, #tpu.memory_space<vmem>>, vector<1x1x128xf32>
    %486 = vector.shape_cast %485 : vector<1x1x128xf32> to vector<1x128xf32>
    %487 = vector.broadcast %484 : vector<8x1xf32> to vector<8x128xf32>
    %488 = vector.broadcast %486 : vector<1x128xf32> to vector<8x128xf32>
    %489 = arith.subf %487, %488 : vector<8x128xf32>
    %490 = math.absf %489 : vector<8x128xf32>
    %491 = arith.addf %482, %490 : vector<8x128xf32>
    %492 = arith.addf %474, %491 : vector<8x128xf32>
    %c0_276 = arith.constant 0 : index
    %c0_277 = arith.constant 0 : index
    %c54 = arith.constant 54 : index
    %493 = vector.load %arg4[%c0_276, %c0_277, %c54] : memref<1x8x128xf32, #tpu.memory_space<vmem>>, vector<1x8x1xf32>
    %494 = vector.shape_cast %493 : vector<1x8x1xf32> to vector<8x1xf32>
    %c0_278 = arith.constant 0 : index
    %c54_279 = arith.constant 54 : index
    %c0_280 = arith.constant 0 : index
    %495 = vector.load %arg3[%c0_278, %c54_279, %c0_280] : memref<1x128x128xf32, #tpu.memory_space<vmem>>, vector<1x1x128xf32>
    %496 = vector.shape_cast %495 : vector<1x1x128xf32> to vector<1x128xf32>
    %497 = vector.broadcast %494 : vector<8x1xf32> to vector<8x128xf32>
    %498 = vector.broadcast %496 : vector<1x128xf32> to vector<8x128xf32>
    %499 = arith.subf %497, %498 : vector<8x128xf32>
    %500 = math.absf %499 : vector<8x128xf32>
    %c0_281 = arith.constant 0 : index
    %c0_282 = arith.constant 0 : index
    %c55 = arith.constant 55 : index
    %501 = vector.load %arg4[%c0_281, %c0_282, %c55] : memref<1x8x128xf32, #tpu.memory_space<vmem>>, vector<1x8x1xf32>
    %502 = vector.shape_cast %501 : vector<1x8x1xf32> to vector<8x1xf32>
    %c0_283 = arith.constant 0 : index
    %c55_284 = arith.constant 55 : index
    %c0_285 = arith.constant 0 : index
    %503 = vector.load %arg3[%c0_283, %c55_284, %c0_285] : memref<1x128x128xf32, #tpu.memory_space<vmem>>, vector<1x1x128xf32>
    %504 = vector.shape_cast %503 : vector<1x1x128xf32> to vector<1x128xf32>
    %505 = vector.broadcast %502 : vector<8x1xf32> to vector<8x128xf32>
    %506 = vector.broadcast %504 : vector<1x128xf32> to vector<8x128xf32>
    %507 = arith.subf %505, %506 : vector<8x128xf32>
    %508 = math.absf %507 : vector<8x128xf32>
    %509 = arith.addf %500, %508 : vector<8x128xf32>
    %510 = arith.addf %492, %509 : vector<8x128xf32>
    %c0_286 = arith.constant 0 : index
    %c0_287 = arith.constant 0 : index
    %c56 = arith.constant 56 : index
    %511 = vector.load %arg4[%c0_286, %c0_287, %c56] : memref<1x8x128xf32, #tpu.memory_space<vmem>>, vector<1x8x1xf32>
    %512 = vector.shape_cast %511 : vector<1x8x1xf32> to vector<8x1xf32>
    %c0_288 = arith.constant 0 : index
    %c56_289 = arith.constant 56 : index
    %c0_290 = arith.constant 0 : index
    %513 = vector.load %arg3[%c0_288, %c56_289, %c0_290] : memref<1x128x128xf32, #tpu.memory_space<vmem>>, vector<1x1x128xf32>
    %514 = vector.shape_cast %513 : vector<1x1x128xf32> to vector<1x128xf32>
    %515 = vector.broadcast %512 : vector<8x1xf32> to vector<8x128xf32>
    %516 = vector.broadcast %514 : vector<1x128xf32> to vector<8x128xf32>
    %517 = arith.subf %515, %516 : vector<8x128xf32>
    %518 = math.absf %517 : vector<8x128xf32>
    %c0_291 = arith.constant 0 : index
    %c0_292 = arith.constant 0 : index
    %c57 = arith.constant 57 : index
    %519 = vector.load %arg4[%c0_291, %c0_292, %c57] : memref<1x8x128xf32, #tpu.memory_space<vmem>>, vector<1x8x1xf32>
    %520 = vector.shape_cast %519 : vector<1x8x1xf32> to vector<8x1xf32>
    %c0_293 = arith.constant 0 : index
    %c57_294 = arith.constant 57 : index
    %c0_295 = arith.constant 0 : index
    %521 = vector.load %arg3[%c0_293, %c57_294, %c0_295] : memref<1x128x128xf32, #tpu.memory_space<vmem>>, vector<1x1x128xf32>
    %522 = vector.shape_cast %521 : vector<1x1x128xf32> to vector<1x128xf32>
    %523 = vector.broadcast %520 : vector<8x1xf32> to vector<8x128xf32>
    %524 = vector.broadcast %522 : vector<1x128xf32> to vector<8x128xf32>
    %525 = arith.subf %523, %524 : vector<8x128xf32>
    %526 = math.absf %525 : vector<8x128xf32>
    %527 = arith.addf %518, %526 : vector<8x128xf32>
    %528 = arith.addf %510, %527 : vector<8x128xf32>
    %c0_296 = arith.constant 0 : index
    %c0_297 = arith.constant 0 : index
    %c58 = arith.constant 58 : index
    %529 = vector.load %arg4[%c0_296, %c0_297, %c58] : memref<1x8x128xf32, #tpu.memory_space<vmem>>, vector<1x8x1xf32>
    %530 = vector.shape_cast %529 : vector<1x8x1xf32> to vector<8x1xf32>
    %c0_298 = arith.constant 0 : index
    %c58_299 = arith.constant 58 : index
    %c0_300 = arith.constant 0 : index
    %531 = vector.load %arg3[%c0_298, %c58_299, %c0_300] : memref<1x128x128xf32, #tpu.memory_space<vmem>>, vector<1x1x128xf32>
    %532 = vector.shape_cast %531 : vector<1x1x128xf32> to vector<1x128xf32>
    %533 = vector.broadcast %530 : vector<8x1xf32> to vector<8x128xf32>
    %534 = vector.broadcast %532 : vector<1x128xf32> to vector<8x128xf32>
    %535 = arith.subf %533, %534 : vector<8x128xf32>
    %536 = math.absf %535 : vector<8x128xf32>
    %c0_301 = arith.constant 0 : index
    %c0_302 = arith.constant 0 : index
    %c59 = arith.constant 59 : index
    %537 = vector.load %arg4[%c0_301, %c0_302, %c59] : memref<1x8x128xf32, #tpu.memory_space<vmem>>, vector<1x8x1xf32>
    %538 = vector.shape_cast %537 : vector<1x8x1xf32> to vector<8x1xf32>
    %c0_303 = arith.constant 0 : index
    %c59_304 = arith.constant 59 : index
    %c0_305 = arith.constant 0 : index
    %539 = vector.load %arg3[%c0_303, %c59_304, %c0_305] : memref<1x128x128xf32, #tpu.memory_space<vmem>>, vector<1x1x128xf32>
    %540 = vector.shape_cast %539 : vector<1x1x128xf32> to vector<1x128xf32>
    %541 = vector.broadcast %538 : vector<8x1xf32> to vector<8x128xf32>
    %542 = vector.broadcast %540 : vector<1x128xf32> to vector<8x128xf32>
    %543 = arith.subf %541, %542 : vector<8x128xf32>
    %544 = math.absf %543 : vector<8x128xf32>
    %545 = arith.addf %536, %544 : vector<8x128xf32>
    %546 = arith.addf %528, %545 : vector<8x128xf32>
    %c0_306 = arith.constant 0 : index
    %c0_307 = arith.constant 0 : index
    %c60 = arith.constant 60 : index
    %547 = vector.load %arg4[%c0_306, %c0_307, %c60] : memref<1x8x128xf32, #tpu.memory_space<vmem>>, vector<1x8x1xf32>
    %548 = vector.shape_cast %547 : vector<1x8x1xf32> to vector<8x1xf32>
    %c0_308 = arith.constant 0 : index
    %c60_309 = arith.constant 60 : index
    %c0_310 = arith.constant 0 : index
    %549 = vector.load %arg3[%c0_308, %c60_309, %c0_310] : memref<1x128x128xf32, #tpu.memory_space<vmem>>, vector<1x1x128xf32>
    %550 = vector.shape_cast %549 : vector<1x1x128xf32> to vector<1x128xf32>
    %551 = vector.broadcast %548 : vector<8x1xf32> to vector<8x128xf32>
    %552 = vector.broadcast %550 : vector<1x128xf32> to vector<8x128xf32>
    %553 = arith.subf %551, %552 : vector<8x128xf32>
    %554 = math.absf %553 : vector<8x128xf32>
    %c0_311 = arith.constant 0 : index
    %c0_312 = arith.constant 0 : index
    %c61 = arith.constant 61 : index
    %555 = vector.load %arg4[%c0_311, %c0_312, %c61] : memref<1x8x128xf32, #tpu.memory_space<vmem>>, vector<1x8x1xf32>
    %556 = vector.shape_cast %555 : vector<1x8x1xf32> to vector<8x1xf32>
    %c0_313 = arith.constant 0 : index
    %c61_314 = arith.constant 61 : index
    %c0_315 = arith.constant 0 : index
    %557 = vector.load %arg3[%c0_313, %c61_314, %c0_315] : memref<1x128x128xf32, #tpu.memory_space<vmem>>, vector<1x1x128xf32>
    %558 = vector.shape_cast %557 : vector<1x1x128xf32> to vector<1x128xf32>
    %559 = vector.broadcast %556 : vector<8x1xf32> to vector<8x128xf32>
    %560 = vector.broadcast %558 : vector<1x128xf32> to vector<8x128xf32>
    %561 = arith.subf %559, %560 : vector<8x128xf32>
    %562 = math.absf %561 : vector<8x128xf32>
    %563 = arith.addf %554, %562 : vector<8x128xf32>
    %564 = arith.addf %546, %563 : vector<8x128xf32>
    %c0_316 = arith.constant 0 : index
    %c0_317 = arith.constant 0 : index
    %c62 = arith.constant 62 : index
    %565 = vector.load %arg4[%c0_316, %c0_317, %c62] : memref<1x8x128xf32, #tpu.memory_space<vmem>>, vector<1x8x1xf32>
    %566 = vector.shape_cast %565 : vector<1x8x1xf32> to vector<8x1xf32>
    %c0_318 = arith.constant 0 : index
    %c62_319 = arith.constant 62 : index
    %c0_320 = arith.constant 0 : index
    %567 = vector.load %arg3[%c0_318, %c62_319, %c0_320] : memref<1x128x128xf32, #tpu.memory_space<vmem>>, vector<1x1x128xf32>
    %568 = vector.shape_cast %567 : vector<1x1x128xf32> to vector<1x128xf32>
    %569 = vector.broadcast %566 : vector<8x1xf32> to vector<8x128xf32>
    %570 = vector.broadcast %568 : vector<1x128xf32> to vector<8x128xf32>
    %571 = arith.subf %569, %570 : vector<8x128xf32>
    %572 = math.absf %571 : vector<8x128xf32>
    %c0_321 = arith.constant 0 : index
    %c0_322 = arith.constant 0 : index
    %c63 = arith.constant 63 : index
    %573 = vector.load %arg4[%c0_321, %c0_322, %c63] : memref<1x8x128xf32, #tpu.memory_space<vmem>>, vector<1x8x1xf32>
    %574 = vector.shape_cast %573 : vector<1x8x1xf32> to vector<8x1xf32>
    %c0_323 = arith.constant 0 : index
    %c63_324 = arith.constant 63 : index
    %c0_325 = arith.constant 0 : index
    %575 = vector.load %arg3[%c0_323, %c63_324, %c0_325] : memref<1x128x128xf32, #tpu.memory_space<vmem>>, vector<1x1x128xf32>
    %576 = vector.shape_cast %575 : vector<1x1x128xf32> to vector<1x128xf32>
    %577 = vector.broadcast %574 : vector<8x1xf32> to vector<8x128xf32>
    %578 = vector.broadcast %576 : vector<1x128xf32> to vector<8x128xf32>
    %579 = arith.subf %577, %578 : vector<8x128xf32>
    %580 = math.absf %579 : vector<8x128xf32>
    %581 = arith.addf %572, %580 : vector<8x128xf32>
    %582 = arith.addf %564, %581 : vector<8x128xf32>
    %cst_326 = arith.constant -0.176776692 : f32
    %583 = vector.broadcast %cst_326 : f32 to vector<8x128xf32>
    %584 = arith.mulf %582, %583 : vector<8x128xf32>
    %c0_327 = arith.constant 0 : index
    %c1_328 = arith.constant 1 : index
    %c0_329 = arith.constant 0 : index
    %c0_330 = arith.constant 0 : index
    %585 = vector.load %arg5[%c0_327, %c1_328, %c0_329, %c0_330] : memref<1x4x8x128xf32, #tpu.memory_space<vmem>>, vector<1x1x8x128xf32>
    %586 = vector.shape_cast %585 : vector<1x1x8x128xf32> to vector<8x128xf32>
    %587 = vector.shape_cast %584 : vector<8x128xf32> to vector<1x1x8x128xf32>
    tpu.vector_store %arg5[%c0_327, %c1_328, %c0_329, %c0_330], %587 {strides = array<i32>} : memref<1x4x8x128xf32, #tpu.memory_space<vmem>>, vector<1x1x8x128xf32>,
    %cst_331 = arith.constant 0.000000e+00 : f32
    %588 = vector.broadcast %cst_331 : f32 to vector<8x128xf32>
    %c0_332 = arith.constant 0 : index
    %c0_333 = arith.constant 0 : index
    %c64 = arith.constant 64 : index
    %589 = vector.load %arg4[%c0_332, %c0_333, %c64] : memref<1x8x128xf32, #tpu.memory_space<vmem>>, vector<1x8x1xf32>
    %590 = vector.shape_cast %589 : vector<1x8x1xf32> to vector<8x1xf32>
    %c0_334 = arith.constant 0 : index
    %c64_335 = arith.constant 64 : index
    %c0_336 = arith.constant 0 : index
    %591 = vector.load %arg3[%c0_334, %c64_335, %c0_336] : memref<1x128x128xf32, #tpu.memory_space<vmem>>, vector<1x1x128xf32>
    %592 = vector.shape_cast %591 : vector<1x1x128xf32> to vector<1x128xf32>
    %593 = vector.broadcast %590 : vector<8x1xf32> to vector<8x128xf32>
    %594 = vector.broadcast %592 : vector<1x128xf32> to vector<8x128xf32>
    %595 = arith.subf %593, %594 : vector<8x128xf32>
    %596 = math.absf %595 : vector<8x128xf32>
    %c0_337 = arith.constant 0 : index
    %c0_338 = arith.constant 0 : index
    %c65 = arith.constant 65 : index
    %597 = vector.load %arg4[%c0_337, %c0_338, %c65] : memref<1x8x128xf32, #tpu.memory_space<vmem>>, vector<1x8x1xf32>
    %598 = vector.shape_cast %597 : vector<1x8x1xf32> to vector<8x1xf32>
    %c0_339 = arith.constant 0 : index
    %c65_340 = arith.constant 65 : index
    %c0_341 = arith.constant 0 : index
    %599 = vector.load %arg3[%c0_339, %c65_340, %c0_341] : memref<1x128x128xf32, #tpu.memory_space<vmem>>, vector<1x1x128xf32>
    %600 = vector.shape_cast %599 : vector<1x1x128xf32> to vector<1x128xf32>
    %601 = vector.broadcast %598 : vector<8x1xf32> to vector<8x128xf32>
    %602 = vector.broadcast %600 : vector<1x128xf32> to vector<8x128xf32>
    %603 = arith.subf %601, %602 : vector<8x128xf32>
    %604 = math.absf %603 : vector<8x128xf32>
    %605 = arith.addf %596, %604 : vector<8x128xf32>
    %606 = arith.addf %588, %605 : vector<8x128xf32>
    %c0_342 = arith.constant 0 : index
    %c0_343 = arith.constant 0 : index
    %c66 = arith.constant 66 : index
    %607 = vector.load %arg4[%c0_342, %c0_343, %c66] : memref<1x8x128xf32, #tpu.memory_space<vmem>>, vector<1x8x1xf32>
    %608 = vector.shape_cast %607 : vector<1x8x1xf32> to vector<8x1xf32>
    %c0_344 = arith.constant 0 : index
    %c66_345 = arith.constant 66 : index
    %c0_346 = arith.constant 0 : index
    %609 = vector.load %arg3[%c0_344, %c66_345, %c0_346] : memref<1x128x128xf32, #tpu.memory_space<vmem>>, vector<1x1x128xf32>
    %610 = vector.shape_cast %609 : vector<1x1x128xf32> to vector<1x128xf32>
    %611 = vector.broadcast %608 : vector<8x1xf32> to vector<8x128xf32>
    %612 = vector.broadcast %610 : vector<1x128xf32> to vector<8x128xf32>
    %613 = arith.subf %611, %612 : vector<8x128xf32>
    %614 = math.absf %613 : vector<8x128xf32>
    %c0_347 = arith.constant 0 : index
    %c0_348 = arith.constant 0 : index
    %c67 = arith.constant 67 : index
    %615 = vector.load %arg4[%c0_347, %c0_348, %c67] : memref<1x8x128xf32, #tpu.memory_space<vmem>>, vector<1x8x1xf32>
    %616 = vector.shape_cast %615 : vector<1x8x1xf32> to vector<8x1xf32>
    %c0_349 = arith.constant 0 : index
    %c67_350 = arith.constant 67 : index
    %c0_351 = arith.constant 0 : index
    %617 = vector.load %arg3[%c0_349, %c67_350, %c0_351] : memref<1x128x128xf32, #tpu.memory_space<vmem>>, vector<1x1x128xf32>
    %618 = vector.shape_cast %617 : vector<1x1x128xf32> to vector<1x128xf32>
    %619 = vector.broadcast %616 : vector<8x1xf32> to vector<8x128xf32>
    %620 = vector.broadcast %618 : vector<1x128xf32> to vector<8x128xf32>
    %621 = arith.subf %619, %620 : vector<8x128xf32>
    %622 = math.absf %621 : vector<8x128xf32>
    %623 = arith.addf %614, %622 : vector<8x128xf32>
    %624 = arith.addf %606, %623 : vector<8x128xf32>
    %c0_352 = arith.constant 0 : index
    %c0_353 = arith.constant 0 : index
    %c68 = arith.constant 68 : index
    %625 = vector.load %arg4[%c0_352, %c0_353, %c68] : memref<1x8x128xf32, #tpu.memory_space<vmem>>, vector<1x8x1xf32>
    %626 = vector.shape_cast %625 : vector<1x8x1xf32> to vector<8x1xf32>
    %c0_354 = arith.constant 0 : index
    %c68_355 = arith.constant 68 : index
    %c0_356 = arith.constant 0 : index
    %627 = vector.load %arg3[%c0_354, %c68_355, %c0_356] : memref<1x128x128xf32, #tpu.memory_space<vmem>>, vector<1x1x128xf32>
    %628 = vector.shape_cast %627 : vector<1x1x128xf32> to vector<1x128xf32>
    %629 = vector.broadcast %626 : vector<8x1xf32> to vector<8x128xf32>
    %630 = vector.broadcast %628 : vector<1x128xf32> to vector<8x128xf32>
    %631 = arith.subf %629, %630 : vector<8x128xf32>
    %632 = math.absf %631 : vector<8x128xf32>
    %c0_357 = arith.constant 0 : index
    %c0_358 = arith.constant 0 : index
    %c69 = arith.constant 69 : index
    %633 = vector.load %arg4[%c0_357, %c0_358, %c69] : memref<1x8x128xf32, #tpu.memory_space<vmem>>, vector<1x8x1xf32>
    %634 = vector.shape_cast %633 : vector<1x8x1xf32> to vector<8x1xf32>
    %c0_359 = arith.constant 0 : index
    %c69_360 = arith.constant 69 : index
    %c0_361 = arith.constant 0 : index
    %635 = vector.load %arg3[%c0_359, %c69_360, %c0_361] : memref<1x128x128xf32, #tpu.memory_space<vmem>>, vector<1x1x128xf32>
    %636 = vector.shape_cast %635 : vector<1x1x128xf32> to vector<1x128xf32>
    %637 = vector.broadcast %634 : vector<8x1xf32> to vector<8x128xf32>
    %638 = vector.broadcast %636 : vector<1x128xf32> to vector<8x128xf32>
    %639 = arith.subf %637, %638 : vector<8x128xf32>
    %640 = math.absf %639 : vector<8x128xf32>
    %641 = arith.addf %632, %640 : vector<8x128xf32>
    %642 = arith.addf %624, %641 : vector<8x128xf32>
    %c0_362 = arith.constant 0 : index
    %c0_363 = arith.constant 0 : index
    %c70 = arith.constant 70 : index
    %643 = vector.load %arg4[%c0_362, %c0_363, %c70] : memref<1x8x128xf32, #tpu.memory_space<vmem>>, vector<1x8x1xf32>
    %644 = vector.shape_cast %643 : vector<1x8x1xf32> to vector<8x1xf32>
    %c0_364 = arith.constant 0 : index
    %c70_365 = arith.constant 70 : index
    %c0_366 = arith.constant 0 : index
    %645 = vector.load %arg3[%c0_364, %c70_365, %c0_366] : memref<1x128x128xf32, #tpu.memory_space<vmem>>, vector<1x1x128xf32>
    %646 = vector.shape_cast %645 : vector<1x1x128xf32> to vector<1x128xf32>
    %647 = vector.broadcast %644 : vector<8x1xf32> to vector<8x128xf32>
    %648 = vector.broadcast %646 : vector<1x128xf32> to vector<8x128xf32>
    %649 = arith.subf %647, %648 : vector<8x128xf32>
    %650 = math.absf %649 : vector<8x128xf32>
    %c0_367 = arith.constant 0 : index
    %c0_368 = arith.constant 0 : index
    %c71 = arith.constant 71 : index
    %651 = vector.load %arg4[%c0_367, %c0_368, %c71] : memref<1x8x128xf32, #tpu.memory_space<vmem>>, vector<1x8x1xf32>
    %652 = vector.shape_cast %651 : vector<1x8x1xf32> to vector<8x1xf32>
    %c0_369 = arith.constant 0 : index
    %c71_370 = arith.constant 71 : index
    %c0_371 = arith.constant 0 : index
    %653 = vector.load %arg3[%c0_369, %c71_370, %c0_371] : memref<1x128x128xf32, #tpu.memory_space<vmem>>, vector<1x1x128xf32>
    %654 = vector.shape_cast %653 : vector<1x1x128xf32> to vector<1x128xf32>
    %655 = vector.broadcast %652 : vector<8x1xf32> to vector<8x128xf32>
    %656 = vector.broadcast %654 : vector<1x128xf32> to vector<8x128xf32>
    %657 = arith.subf %655, %656 : vector<8x128xf32>
    %658 = math.absf %657 : vector<8x128xf32>
    %659 = arith.addf %650, %658 : vector<8x128xf32>
    %660 = arith.addf %642, %659 : vector<8x128xf32>
    %c0_372 = arith.constant 0 : index
    %c0_373 = arith.constant 0 : index
    %c72 = arith.constant 72 : index
    %661 = vector.load %arg4[%c0_372, %c0_373, %c72] : memref<1x8x128xf32, #tpu.memory_space<vmem>>, vector<1x8x1xf32>
    %662 = vector.shape_cast %661 : vector<1x8x1xf32> to vector<8x1xf32>
    %c0_374 = arith.constant 0 : index
    %c72_375 = arith.constant 72 : index
    %c0_376 = arith.constant 0 : index
    %663 = vector.load %arg3[%c0_374, %c72_375, %c0_376] : memref<1x128x128xf32, #tpu.memory_space<vmem>>, vector<1x1x128xf32>
    %664 = vector.shape_cast %663 : vector<1x1x128xf32> to vector<1x128xf32>
    %665 = vector.broadcast %662 : vector<8x1xf32> to vector<8x128xf32>
    %666 = vector.broadcast %664 : vector<1x128xf32> to vector<8x128xf32>
    %667 = arith.subf %665, %666 : vector<8x128xf32>
    %668 = math.absf %667 : vector<8x128xf32>
    %c0_377 = arith.constant 0 : index
    %c0_378 = arith.constant 0 : index
    %c73 = arith.constant 73 : index
    %669 = vector.load %arg4[%c0_377, %c0_378, %c73] : memref<1x8x128xf32, #tpu.memory_space<vmem>>, vector<1x8x1xf32>
    %670 = vector.shape_cast %669 : vector<1x8x1xf32> to vector<8x1xf32>
    %c0_379 = arith.constant 0 : index
    %c73_380 = arith.constant 73 : index
    %c0_381 = arith.constant 0 : index
    %671 = vector.load %arg3[%c0_379, %c73_380, %c0_381] : memref<1x128x128xf32, #tpu.memory_space<vmem>>, vector<1x1x128xf32>
    %672 = vector.shape_cast %671 : vector<1x1x128xf32> to vector<1x128xf32>
    %673 = vector.broadcast %670 : vector<8x1xf32> to vector<8x128xf32>
    %674 = vector.broadcast %672 : vector<1x128xf32> to vector<8x128xf32>
    %675 = arith.subf %673, %674 : vector<8x128xf32>
    %676 = math.absf %675 : vector<8x128xf32>
    %677 = arith.addf %668, %676 : vector<8x128xf32>
    %678 = arith.addf %660, %677 : vector<8x128xf32>
    %c0_382 = arith.constant 0 : index
    %c0_383 = arith.constant 0 : index
    %c74 = arith.constant 74 : index
    %679 = vector.load %arg4[%c0_382, %c0_383, %c74] : memref<1x8x128xf32, #tpu.memory_space<vmem>>, vector<1x8x1xf32>
    %680 = vector.shape_cast %679 : vector<1x8x1xf32> to vector<8x1xf32>
    %c0_384 = arith.constant 0 : index
    %c74_385 = arith.constant 74 : index
    %c0_386 = arith.constant 0 : index
    %681 = vector.load %arg3[%c0_384, %c74_385, %c0_386] : memref<1x128x128xf32, #tpu.memory_space<vmem>>, vector<1x1x128xf32>
    %682 = vector.shape_cast %681 : vector<1x1x128xf32> to vector<1x128xf32>
    %683 = vector.broadcast %680 : vector<8x1xf32> to vector<8x128xf32>
    %684 = vector.broadcast %682 : vector<1x128xf32> to vector<8x128xf32>
    %685 = arith.subf %683, %684 : vector<8x128xf32>
    %686 = math.absf %685 : vector<8x128xf32>
    %c0_387 = arith.constant 0 : index
    %c0_388 = arith.constant 0 : index
    %c75 = arith.constant 75 : index
    %687 = vector.load %arg4[%c0_387, %c0_388, %c75] : memref<1x8x128xf32, #tpu.memory_space<vmem>>, vector<1x8x1xf32>
    %688 = vector.shape_cast %687 : vector<1x8x1xf32> to vector<8x1xf32>
    %c0_389 = arith.constant 0 : index
    %c75_390 = arith.constant 75 : index
    %c0_391 = arith.constant 0 : index
    %689 = vector.load %arg3[%c0_389, %c75_390, %c0_391] : memref<1x128x128xf32, #tpu.memory_space<vmem>>, vector<1x1x128xf32>
    %690 = vector.shape_cast %689 : vector<1x1x128xf32> to vector<1x128xf32>
    %691 = vector.broadcast %688 : vector<8x1xf32> to vector<8x128xf32>
    %692 = vector.broadcast %690 : vector<1x128xf32> to vector<8x128xf32>
    %693 = arith.subf %691, %692 : vector<8x128xf32>
    %694 = math.absf %693 : vector<8x128xf32>
    %695 = arith.addf %686, %694 : vector<8x128xf32>
    %696 = arith.addf %678, %695 : vector<8x128xf32>
    %c0_392 = arith.constant 0 : index
    %c0_393 = arith.constant 0 : index
    %c76 = arith.constant 76 : index
    %697 = vector.load %arg4[%c0_392, %c0_393, %c76] : memref<1x8x128xf32, #tpu.memory_space<vmem>>, vector<1x8x1xf32>
    %698 = vector.shape_cast %697 : vector<1x8x1xf32> to vector<8x1xf32>
    %c0_394 = arith.constant 0 : index
    %c76_395 = arith.constant 76 : index
    %c0_396 = arith.constant 0 : index
    %699 = vector.load %arg3[%c0_394, %c76_395, %c0_396] : memref<1x128x128xf32, #tpu.memory_space<vmem>>, vector<1x1x128xf32>
    %700 = vector.shape_cast %699 : vector<1x1x128xf32> to vector<1x128xf32>
    %701 = vector.broadcast %698 : vector<8x1xf32> to vector<8x128xf32>
    %702 = vector.broadcast %700 : vector<1x128xf32> to vector<8x128xf32>
    %703 = arith.subf %701, %702 : vector<8x128xf32>
    %704 = math.absf %703 : vector<8x128xf32>
    %c0_397 = arith.constant 0 : index
    %c0_398 = arith.constant 0 : index
    %c77 = arith.constant 77 : index
    %705 = vector.load %arg4[%c0_397, %c0_398, %c77] : memref<1x8x128xf32, #tpu.memory_space<vmem>>, vector<1x8x1xf32>
    %706 = vector.shape_cast %705 : vector<1x8x1xf32> to vector<8x1xf32>
    %c0_399 = arith.constant 0 : index
    %c77_400 = arith.constant 77 : index
    %c0_401 = arith.constant 0 : index
    %707 = vector.load %arg3[%c0_399, %c77_400, %c0_401] : memref<1x128x128xf32, #tpu.memory_space<vmem>>, vector<1x1x128xf32>
    %708 = vector.shape_cast %707 : vector<1x1x128xf32> to vector<1x128xf32>
    %709 = vector.broadcast %706 : vector<8x1xf32> to vector<8x128xf32>
    %710 = vector.broadcast %708 : vector<1x128xf32> to vector<8x128xf32>
    %711 = arith.subf %709, %710 : vector<8x128xf32>
    %712 = math.absf %711 : vector<8x128xf32>
    %713 = arith.addf %704, %712 : vector<8x128xf32>
    %714 = arith.addf %696, %713 : vector<8x128xf32>
    %c0_402 = arith.constant 0 : index
    %c0_403 = arith.constant 0 : index
    %c78 = arith.constant 78 : index
    %715 = vector.load %arg4[%c0_402, %c0_403, %c78] : memref<1x8x128xf32, #tpu.memory_space<vmem>>, vector<1x8x1xf32>
    %716 = vector.shape_cast %715 : vector<1x8x1xf32> to vector<8x1xf32>
    %c0_404 = arith.constant 0 : index
    %c78_405 = arith.constant 78 : index
    %c0_406 = arith.constant 0 : index
    %717 = vector.load %arg3[%c0_404, %c78_405, %c0_406] : memref<1x128x128xf32, #tpu.memory_space<vmem>>, vector<1x1x128xf32>
    %718 = vector.shape_cast %717 : vector<1x1x128xf32> to vector<1x128xf32>
    %719 = vector.broadcast %716 : vector<8x1xf32> to vector<8x128xf32>
    %720 = vector.broadcast %718 : vector<1x128xf32> to vector<8x128xf32>
    %721 = arith.subf %719, %720 : vector<8x128xf32>
    %722 = math.absf %721 : vector<8x128xf32>
    %c0_407 = arith.constant 0 : index
    %c0_408 = arith.constant 0 : index
    %c79 = arith.constant 79 : index
    %723 = vector.load %arg4[%c0_407, %c0_408, %c79] : memref<1x8x128xf32, #tpu.memory_space<vmem>>, vector<1x8x1xf32>
    %724 = vector.shape_cast %723 : vector<1x8x1xf32> to vector<8x1xf32>
    %c0_409 = arith.constant 0 : index
    %c79_410 = arith.constant 79 : index
    %c0_411 = arith.constant 0 : index
    %725 = vector.load %arg3[%c0_409, %c79_410, %c0_411] : memref<1x128x128xf32, #tpu.memory_space<vmem>>, vector<1x1x128xf32>
    %726 = vector.shape_cast %725 : vector<1x1x128xf32> to vector<1x128xf32>
    %727 = vector.broadcast %724 : vector<8x1xf32> to vector<8x128xf32>
    %728 = vector.broadcast %726 : vector<1x128xf32> to vector<8x128xf32>
    %729 = arith.subf %727, %728 : vector<8x128xf32>
    %730 = math.absf %729 : vector<8x128xf32>
    %731 = arith.addf %722, %730 : vector<8x128xf32>
    %732 = arith.addf %714, %731 : vector<8x128xf32>
    %c0_412 = arith.constant 0 : index
    %c0_413 = arith.constant 0 : index
    %c80 = arith.constant 80 : index
    %733 = vector.load %arg4[%c0_412, %c0_413, %c80] : memref<1x8x128xf32, #tpu.memory_space<vmem>>, vector<1x8x1xf32>
    %734 = vector.shape_cast %733 : vector<1x8x1xf32> to vector<8x1xf32>
    %c0_414 = arith.constant 0 : index
    %c80_415 = arith.constant 80 : index
    %c0_416 = arith.constant 0 : index
    %735 = vector.load %arg3[%c0_414, %c80_415, %c0_416] : memref<1x128x128xf32, #tpu.memory_space<vmem>>, vector<1x1x128xf32>
    %736 = vector.shape_cast %735 : vector<1x1x128xf32> to vector<1x128xf32>
    %737 = vector.broadcast %734 : vector<8x1xf32> to vector<8x128xf32>
    %738 = vector.broadcast %736 : vector<1x128xf32> to vector<8x128xf32>
    %739 = arith.subf %737, %738 : vector<8x128xf32>
    %740 = math.absf %739 : vector<8x128xf32>
    %c0_417 = arith.constant 0 : index
    %c0_418 = arith.constant 0 : index
    %c81 = arith.constant 81 : index
    %741 = vector.load %arg4[%c0_417, %c0_418, %c81] : memref<1x8x128xf32, #tpu.memory_space<vmem>>, vector<1x8x1xf32>
    %742 = vector.shape_cast %741 : vector<1x8x1xf32> to vector<8x1xf32>
    %c0_419 = arith.constant 0 : index
    %c81_420 = arith.constant 81 : index
    %c0_421 = arith.constant 0 : index
    %743 = vector.load %arg3[%c0_419, %c81_420, %c0_421] : memref<1x128x128xf32, #tpu.memory_space<vmem>>, vector<1x1x128xf32>
    %744 = vector.shape_cast %743 : vector<1x1x128xf32> to vector<1x128xf32>
    %745 = vector.broadcast %742 : vector<8x1xf32> to vector<8x128xf32>
    %746 = vector.broadcast %744 : vector<1x128xf32> to vector<8x128xf32>
    %747 = arith.subf %745, %746 : vector<8x128xf32>
    %748 = math.absf %747 : vector<8x128xf32>
    %749 = arith.addf %740, %748 : vector<8x128xf32>
    %750 = arith.addf %732, %749 : vector<8x128xf32>
    %c0_422 = arith.constant 0 : index
    %c0_423 = arith.constant 0 : index
    %c82 = arith.constant 82 : index
    %751 = vector.load %arg4[%c0_422, %c0_423, %c82] : memref<1x8x128xf32, #tpu.memory_space<vmem>>, vector<1x8x1xf32>
    %752 = vector.shape_cast %751 : vector<1x8x1xf32> to vector<8x1xf32>
    %c0_424 = arith.constant 0 : index
    %c82_425 = arith.constant 82 : index
    %c0_426 = arith.constant 0 : index
    %753 = vector.load %arg3[%c0_424, %c82_425, %c0_426] : memref<1x128x128xf32, #tpu.memory_space<vmem>>, vector<1x1x128xf32>
    %754 = vector.shape_cast %753 : vector<1x1x128xf32> to vector<1x128xf32>
    %755 = vector.broadcast %752 : vector<8x1xf32> to vector<8x128xf32>
    %756 = vector.broadcast %754 : vector<1x128xf32> to vector<8x128xf32>
    %757 = arith.subf %755, %756 : vector<8x128xf32>
    %758 = math.absf %757 : vector<8x128xf32>
    %c0_427 = arith.constant 0 : index
    %c0_428 = arith.constant 0 : index
    %c83 = arith.constant 83 : index
    %759 = vector.load %arg4[%c0_427, %c0_428, %c83] : memref<1x8x128xf32, #tpu.memory_space<vmem>>, vector<1x8x1xf32>
    %760 = vector.shape_cast %759 : vector<1x8x1xf32> to vector<8x1xf32>
    %c0_429 = arith.constant 0 : index
    %c83_430 = arith.constant 83 : index
    %c0_431 = arith.constant 0 : index
    %761 = vector.load %arg3[%c0_429, %c83_430, %c0_431] : memref<1x128x128xf32, #tpu.memory_space<vmem>>, vector<1x1x128xf32>
    %762 = vector.shape_cast %761 : vector<1x1x128xf32> to vector<1x128xf32>
    %763 = vector.broadcast %760 : vector<8x1xf32> to vector<8x128xf32>
    %764 = vector.broadcast %762 : vector<1x128xf32> to vector<8x128xf32>
    %765 = arith.subf %763, %764 : vector<8x128xf32>
    %766 = math.absf %765 : vector<8x128xf32>
    %767 = arith.addf %758, %766 : vector<8x128xf32>
    %768 = arith.addf %750, %767 : vector<8x128xf32>
    %c0_432 = arith.constant 0 : index
    %c0_433 = arith.constant 0 : index
    %c84 = arith.constant 84 : index
    %769 = vector.load %arg4[%c0_432, %c0_433, %c84] : memref<1x8x128xf32, #tpu.memory_space<vmem>>, vector<1x8x1xf32>
    %770 = vector.shape_cast %769 : vector<1x8x1xf32> to vector<8x1xf32>
    %c0_434 = arith.constant 0 : index
    %c84_435 = arith.constant 84 : index
    %c0_436 = arith.constant 0 : index
    %771 = vector.load %arg3[%c0_434, %c84_435, %c0_436] : memref<1x128x128xf32, #tpu.memory_space<vmem>>, vector<1x1x128xf32>
    %772 = vector.shape_cast %771 : vector<1x1x128xf32> to vector<1x128xf32>
    %773 = vector.broadcast %770 : vector<8x1xf32> to vector<8x128xf32>
    %774 = vector.broadcast %772 : vector<1x128xf32> to vector<8x128xf32>
    %775 = arith.subf %773, %774 : vector<8x128xf32>
    %776 = math.absf %775 : vector<8x128xf32>
    %c0_437 = arith.constant 0 : index
    %c0_438 = arith.constant 0 : index
    %c85 = arith.constant 85 : index
    %777 = vector.load %arg4[%c0_437, %c0_438, %c85] : memref<1x8x128xf32, #tpu.memory_space<vmem>>, vector<1x8x1xf32>
    %778 = vector.shape_cast %777 : vector<1x8x1xf32> to vector<8x1xf32>
    %c0_439 = arith.constant 0 : index
    %c85_440 = arith.constant 85 : index
    %c0_441 = arith.constant 0 : index
    %779 = vector.load %arg3[%c0_439, %c85_440, %c0_441] : memref<1x128x128xf32, #tpu.memory_space<vmem>>, vector<1x1x128xf32>
    %780 = vector.shape_cast %779 : vector<1x1x128xf32> to vector<1x128xf32>
    %781 = vector.broadcast %778 : vector<8x1xf32> to vector<8x128xf32>
    %782 = vector.broadcast %780 : vector<1x128xf32> to vector<8x128xf32>
    %783 = arith.subf %781, %782 : vector<8x128xf32>
    %784 = math.absf %783 : vector<8x128xf32>
    %785 = arith.addf %776, %784 : vector<8x128xf32>
    %786 = arith.addf %768, %785 : vector<8x128xf32>
    %c0_442 = arith.constant 0 : index
    %c0_443 = arith.constant 0 : index
    %c86 = arith.constant 86 : index
    %787 = vector.load %arg4[%c0_442, %c0_443, %c86] : memref<1x8x128xf32, #tpu.memory_space<vmem>>, vector<1x8x1xf32>
    %788 = vector.shape_cast %787 : vector<1x8x1xf32> to vector<8x1xf32>
    %c0_444 = arith.constant 0 : index
    %c86_445 = arith.constant 86 : index
    %c0_446 = arith.constant 0 : index
    %789 = vector.load %arg3[%c0_444, %c86_445, %c0_446] : memref<1x128x128xf32, #tpu.memory_space<vmem>>, vector<1x1x128xf32>
    %790 = vector.shape_cast %789 : vector<1x1x128xf32> to vector<1x128xf32>
    %791 = vector.broadcast %788 : vector<8x1xf32> to vector<8x128xf32>
    %792 = vector.broadcast %790 : vector<1x128xf32> to vector<8x128xf32>
    %793 = arith.subf %791, %792 : vector<8x128xf32>
    %794 = math.absf %793 : vector<8x128xf32>
    %c0_447 = arith.constant 0 : index
    %c0_448 = arith.constant 0 : index
    %c87 = arith.constant 87 : index
    %795 = vector.load %arg4[%c0_447, %c0_448, %c87] : memref<1x8x128xf32, #tpu.memory_space<vmem>>, vector<1x8x1xf32>
    %796 = vector.shape_cast %795 : vector<1x8x1xf32> to vector<8x1xf32>
    %c0_449 = arith.constant 0 : index
    %c87_450 = arith.constant 87 : index
    %c0_451 = arith.constant 0 : index
    %797 = vector.load %arg3[%c0_449, %c87_450, %c0_451] : memref<1x128x128xf32, #tpu.memory_space<vmem>>, vector<1x1x128xf32>
    %798 = vector.shape_cast %797 : vector<1x1x128xf32> to vector<1x128xf32>
    %799 = vector.broadcast %796 : vector<8x1xf32> to vector<8x128xf32>
    %800 = vector.broadcast %798 : vector<1x128xf32> to vector<8x128xf32>
    %801 = arith.subf %799, %800 : vector<8x128xf32>
    %802 = math.absf %801 : vector<8x128xf32>
    %803 = arith.addf %794, %802 : vector<8x128xf32>
    %804 = arith.addf %786, %803 : vector<8x128xf32>
    %c0_452 = arith.constant 0 : index
    %c0_453 = arith.constant 0 : index
    %c88 = arith.constant 88 : index
    %805 = vector.load %arg4[%c0_452, %c0_453, %c88] : memref<1x8x128xf32, #tpu.memory_space<vmem>>, vector<1x8x1xf32>
    %806 = vector.shape_cast %805 : vector<1x8x1xf32> to vector<8x1xf32>
    %c0_454 = arith.constant 0 : index
    %c88_455 = arith.constant 88 : index
    %c0_456 = arith.constant 0 : index
    %807 = vector.load %arg3[%c0_454, %c88_455, %c0_456] : memref<1x128x128xf32, #tpu.memory_space<vmem>>, vector<1x1x128xf32>
    %808 = vector.shape_cast %807 : vector<1x1x128xf32> to vector<1x128xf32>
    %809 = vector.broadcast %806 : vector<8x1xf32> to vector<8x128xf32>
    %810 = vector.broadcast %808 : vector<1x128xf32> to vector<8x128xf32>
    %811 = arith.subf %809, %810 : vector<8x128xf32>
    %812 = math.absf %811 : vector<8x128xf32>
    %c0_457 = arith.constant 0 : index
    %c0_458 = arith.constant 0 : index
    %c89 = arith.constant 89 : index
    %813 = vector.load %arg4[%c0_457, %c0_458, %c89] : memref<1x8x128xf32, #tpu.memory_space<vmem>>, vector<1x8x1xf32>
    %814 = vector.shape_cast %813 : vector<1x8x1xf32> to vector<8x1xf32>
    %c0_459 = arith.constant 0 : index
    %c89_460 = arith.constant 89 : index
    %c0_461 = arith.constant 0 : index
    %815 = vector.load %arg3[%c0_459, %c89_460, %c0_461] : memref<1x128x128xf32, #tpu.memory_space<vmem>>, vector<1x1x128xf32>
    %816 = vector.shape_cast %815 : vector<1x1x128xf32> to vector<1x128xf32>
    %817 = vector.broadcast %814 : vector<8x1xf32> to vector<8x128xf32>
    %818 = vector.broadcast %816 : vector<1x128xf32> to vector<8x128xf32>
    %819 = arith.subf %817, %818 : vector<8x128xf32>
    %820 = math.absf %819 : vector<8x128xf32>
    %821 = arith.addf %812, %820 : vector<8x128xf32>
    %822 = arith.addf %804, %821 : vector<8x128xf32>
    %c0_462 = arith.constant 0 : index
    %c0_463 = arith.constant 0 : index
    %c90 = arith.constant 90 : index
    %823 = vector.load %arg4[%c0_462, %c0_463, %c90] : memref<1x8x128xf32, #tpu.memory_space<vmem>>, vector<1x8x1xf32>
    %824 = vector.shape_cast %823 : vector<1x8x1xf32> to vector<8x1xf32>
    %c0_464 = arith.constant 0 : index
    %c90_465 = arith.constant 90 : index
    %c0_466 = arith.constant 0 : index
    %825 = vector.load %arg3[%c0_464, %c90_465, %c0_466] : memref<1x128x128xf32, #tpu.memory_space<vmem>>, vector<1x1x128xf32>
    %826 = vector.shape_cast %825 : vector<1x1x128xf32> to vector<1x128xf32>
    %827 = vector.broadcast %824 : vector<8x1xf32> to vector<8x128xf32>
    %828 = vector.broadcast %826 : vector<1x128xf32> to vector<8x128xf32>
    %829 = arith.subf %827, %828 : vector<8x128xf32>
    %830 = math.absf %829 : vector<8x128xf32>
    %c0_467 = arith.constant 0 : index
    %c0_468 = arith.constant 0 : index
    %c91 = arith.constant 91 : index
    %831 = vector.load %arg4[%c0_467, %c0_468, %c91] : memref<1x8x128xf32, #tpu.memory_space<vmem>>, vector<1x8x1xf32>
    %832 = vector.shape_cast %831 : vector<1x8x1xf32> to vector<8x1xf32>
    %c0_469 = arith.constant 0 : index
    %c91_470 = arith.constant 91 : index
    %c0_471 = arith.constant 0 : index
    %833 = vector.load %arg3[%c0_469, %c91_470, %c0_471] : memref<1x128x128xf32, #tpu.memory_space<vmem>>, vector<1x1x128xf32>
    %834 = vector.shape_cast %833 : vector<1x1x128xf32> to vector<1x128xf32>
    %835 = vector.broadcast %832 : vector<8x1xf32> to vector<8x128xf32>
    %836 = vector.broadcast %834 : vector<1x128xf32> to vector<8x128xf32>
    %837 = arith.subf %835, %836 : vector<8x128xf32>
    %838 = math.absf %837 : vector<8x128xf32>
    %839 = arith.addf %830, %838 : vector<8x128xf32>
    %840 = arith.addf %822, %839 : vector<8x128xf32>
    %c0_472 = arith.constant 0 : index
    %c0_473 = arith.constant 0 : index
    %c92 = arith.constant 92 : index
    %841 = vector.load %arg4[%c0_472, %c0_473, %c92] : memref<1x8x128xf32, #tpu.memory_space<vmem>>, vector<1x8x1xf32>
    %842 = vector.shape_cast %841 : vector<1x8x1xf32> to vector<8x1xf32>
    %c0_474 = arith.constant 0 : index
    %c92_475 = arith.constant 92 : index
    %c0_476 = arith.constant 0 : index
    %843 = vector.load %arg3[%c0_474, %c92_475, %c0_476] : memref<1x128x128xf32, #tpu.memory_space<vmem>>, vector<1x1x128xf32>
    %844 = vector.shape_cast %843 : vector<1x1x128xf32> to vector<1x128xf32>
    %845 = vector.broadcast %842 : vector<8x1xf32> to vector<8x128xf32>
    %846 = vector.broadcast %844 : vector<1x128xf32> to vector<8x128xf32>
    %847 = arith.subf %845, %846 : vector<8x128xf32>
    %848 = math.absf %847 : vector<8x128xf32>
    %c0_477 = arith.constant 0 : index
    %c0_478 = arith.constant 0 : index
    %c93 = arith.constant 93 : index
    %849 = vector.load %arg4[%c0_477, %c0_478, %c93] : memref<1x8x128xf32, #tpu.memory_space<vmem>>, vector<1x8x1xf32>
    %850 = vector.shape_cast %849 : vector<1x8x1xf32> to vector<8x1xf32>
    %c0_479 = arith.constant 0 : index
    %c93_480 = arith.constant 93 : index
    %c0_481 = arith.constant 0 : index
    %851 = vector.load %arg3[%c0_479, %c93_480, %c0_481] : memref<1x128x128xf32, #tpu.memory_space<vmem>>, vector<1x1x128xf32>
    %852 = vector.shape_cast %851 : vector<1x1x128xf32> to vector<1x128xf32>
    %853 = vector.broadcast %850 : vector<8x1xf32> to vector<8x128xf32>
    %854 = vector.broadcast %852 : vector<1x128xf32> to vector<8x128xf32>
    %855 = arith.subf %853, %854 : vector<8x128xf32>
    %856 = math.absf %855 : vector<8x128xf32>
    %857 = arith.addf %848, %856 : vector<8x128xf32>
    %858 = arith.addf %840, %857 : vector<8x128xf32>
    %c0_482 = arith.constant 0 : index
    %c0_483 = arith.constant 0 : index
    %c94 = arith.constant 94 : index
    %859 = vector.load %arg4[%c0_482, %c0_483, %c94] : memref<1x8x128xf32, #tpu.memory_space<vmem>>, vector<1x8x1xf32>
    %860 = vector.shape_cast %859 : vector<1x8x1xf32> to vector<8x1xf32>
    %c0_484 = arith.constant 0 : index
    %c94_485 = arith.constant 94 : index
    %c0_486 = arith.constant 0 : index
    %861 = vector.load %arg3[%c0_484, %c94_485, %c0_486] : memref<1x128x128xf32, #tpu.memory_space<vmem>>, vector<1x1x128xf32>
    %862 = vector.shape_cast %861 : vector<1x1x128xf32> to vector<1x128xf32>
    %863 = vector.broadcast %860 : vector<8x1xf32> to vector<8x128xf32>
    %864 = vector.broadcast %862 : vector<1x128xf32> to vector<8x128xf32>
    %865 = arith.subf %863, %864 : vector<8x128xf32>
    %866 = math.absf %865 : vector<8x128xf32>
    %c0_487 = arith.constant 0 : index
    %c0_488 = arith.constant 0 : index
    %c95 = arith.constant 95 : index
    %867 = vector.load %arg4[%c0_487, %c0_488, %c95] : memref<1x8x128xf32, #tpu.memory_space<vmem>>, vector<1x8x1xf32>
    %868 = vector.shape_cast %867 : vector<1x8x1xf32> to vector<8x1xf32>
    %c0_489 = arith.constant 0 : index
    %c95_490 = arith.constant 95 : index
    %c0_491 = arith.constant 0 : index
    %869 = vector.load %arg3[%c0_489, %c95_490, %c0_491] : memref<1x128x128xf32, #tpu.memory_space<vmem>>, vector<1x1x128xf32>
    %870 = vector.shape_cast %869 : vector<1x1x128xf32> to vector<1x128xf32>
    %871 = vector.broadcast %868 : vector<8x1xf32> to vector<8x128xf32>
    %872 = vector.broadcast %870 : vector<1x128xf32> to vector<8x128xf32>
    %873 = arith.subf %871, %872 : vector<8x128xf32>
    %874 = math.absf %873 : vector<8x128xf32>
    %875 = arith.addf %866, %874 : vector<8x128xf32>
    %876 = arith.addf %858, %875 : vector<8x128xf32>
    %cst_492 = arith.constant -0.176776692 : f32
    %877 = vector.broadcast %cst_492 : f32 to vector<8x128xf32>
    %878 = arith.mulf %876, %877 : vector<8x128xf32>
    %c0_493 = arith.constant 0 : index
    %c2_494 = arith.constant 2 : index
    %c0_495 = arith.constant 0 : index
    %c0_496 = arith.constant 0 : index
    %879 = vector.load %arg5[%c0_493, %c2_494, %c0_495, %c0_496] : memref<1x4x8x128xf32, #tpu.memory_space<vmem>>, vector<1x1x8x128xf32>
    %880 = vector.shape_cast %879 : vector<1x1x8x128xf32> to vector<8x128xf32>
    %881 = vector.shape_cast %878 : vector<8x128xf32> to vector<1x1x8x128xf32>
    tpu.vector_store %arg5[%c0_493, %c2_494, %c0_495, %c0_496], %881 {strides = array<i32>} : memref<1x4x8x128xf32, #tpu.memory_space<vmem>>, vector<1x1x8x128xf32>,
    %cst_497 = arith.constant 0.000000e+00 : f32
    %882 = vector.broadcast %cst_497 : f32 to vector<8x128xf32>
    %c0_498 = arith.constant 0 : index
    %c0_499 = arith.constant 0 : index
    %c96 = arith.constant 96 : index
    %883 = vector.load %arg4[%c0_498, %c0_499, %c96] : memref<1x8x128xf32, #tpu.memory_space<vmem>>, vector<1x8x1xf32>
    %884 = vector.shape_cast %883 : vector<1x8x1xf32> to vector<8x1xf32>
    %c0_500 = arith.constant 0 : index
    %c96_501 = arith.constant 96 : index
    %c0_502 = arith.constant 0 : index
    %885 = vector.load %arg3[%c0_500, %c96_501, %c0_502] : memref<1x128x128xf32, #tpu.memory_space<vmem>>, vector<1x1x128xf32>
    %886 = vector.shape_cast %885 : vector<1x1x128xf32> to vector<1x128xf32>
    %887 = vector.broadcast %884 : vector<8x1xf32> to vector<8x128xf32>
    %888 = vector.broadcast %886 : vector<1x128xf32> to vector<8x128xf32>
    %889 = arith.subf %887, %888 : vector<8x128xf32>
    %890 = math.absf %889 : vector<8x128xf32>
    %c0_503 = arith.constant 0 : index
    %c0_504 = arith.constant 0 : index
    %c97 = arith.constant 97 : index
    %891 = vector.load %arg4[%c0_503, %c0_504, %c97] : memref<1x8x128xf32, #tpu.memory_space<vmem>>, vector<1x8x1xf32>
    %892 = vector.shape_cast %891 : vector<1x8x1xf32> to vector<8x1xf32>
    %c0_505 = arith.constant 0 : index
    %c97_506 = arith.constant 97 : index
    %c0_507 = arith.constant 0 : index
    %893 = vector.load %arg3[%c0_505, %c97_506, %c0_507] : memref<1x128x128xf32, #tpu.memory_space<vmem>>, vector<1x1x128xf32>
    %894 = vector.shape_cast %893 : vector<1x1x128xf32> to vector<1x128xf32>
    %895 = vector.broadcast %892 : vector<8x1xf32> to vector<8x128xf32>
    %896 = vector.broadcast %894 : vector<1x128xf32> to vector<8x128xf32>
    %897 = arith.subf %895, %896 : vector<8x128xf32>
    %898 = math.absf %897 : vector<8x128xf32>
    %899 = arith.addf %890, %898 : vector<8x128xf32>
    %900 = arith.addf %882, %899 : vector<8x128xf32>
    %c0_508 = arith.constant 0 : index
    %c0_509 = arith.constant 0 : index
    %c98 = arith.constant 98 : index
    %901 = vector.load %arg4[%c0_508, %c0_509, %c98] : memref<1x8x128xf32, #tpu.memory_space<vmem>>, vector<1x8x1xf32>
    %902 = vector.shape_cast %901 : vector<1x8x1xf32> to vector<8x1xf32>
    %c0_510 = arith.constant 0 : index
    %c98_511 = arith.constant 98 : index
    %c0_512 = arith.constant 0 : index
    %903 = vector.load %arg3[%c0_510, %c98_511, %c0_512] : memref<1x128x128xf32, #tpu.memory_space<vmem>>, vector<1x1x128xf32>
    %904 = vector.shape_cast %903 : vector<1x1x128xf32> to vector<1x128xf32>
    %905 = vector.broadcast %902 : vector<8x1xf32> to vector<8x128xf32>
    %906 = vector.broadcast %904 : vector<1x128xf32> to vector<8x128xf32>
    %907 = arith.subf %905, %906 : vector<8x128xf32>
    %908 = math.absf %907 : vector<8x128xf32>
    %c0_513 = arith.constant 0 : index
    %c0_514 = arith.constant 0 : index
    %c99 = arith.constant 99 : index
    %909 = vector.load %arg4[%c0_513, %c0_514, %c99] : memref<1x8x128xf32, #tpu.memory_space<vmem>>, vector<1x8x1xf32>
    %910 = vector.shape_cast %909 : vector<1x8x1xf32> to vector<8x1xf32>
    %c0_515 = arith.constant 0 : index
    %c99_516 = arith.constant 99 : index
    %c0_517 = arith.constant 0 : index
    %911 = vector.load %arg3[%c0_515, %c99_516, %c0_517] : memref<1x128x128xf32, #tpu.memory_space<vmem>>, vector<1x1x128xf32>
    %912 = vector.shape_cast %911 : vector<1x1x128xf32> to vector<1x128xf32>
    %913 = vector.broadcast %910 : vector<8x1xf32> to vector<8x128xf32>
    %914 = vector.broadcast %912 : vector<1x128xf32> to vector<8x128xf32>
    %915 = arith.subf %913, %914 : vector<8x128xf32>
    %916 = math.absf %915 : vector<8x128xf32>
    %917 = arith.addf %908, %916 : vector<8x128xf32>
    %918 = arith.addf %900, %917 : vector<8x128xf32>
    %c0_518 = arith.constant 0 : index
    %c0_519 = arith.constant 0 : index
    %c100 = arith.constant 100 : index
    %919 = vector.load %arg4[%c0_518, %c0_519, %c100] : memref<1x8x128xf32, #tpu.memory_space<vmem>>, vector<1x8x1xf32>
    %920 = vector.shape_cast %919 : vector<1x8x1xf32> to vector<8x1xf32>
    %c0_520 = arith.constant 0 : index
    %c100_521 = arith.constant 100 : index
    %c0_522 = arith.constant 0 : index
    %921 = vector.load %arg3[%c0_520, %c100_521, %c0_522] : memref<1x128x128xf32, #tpu.memory_space<vmem>>, vector<1x1x128xf32>
    %922 = vector.shape_cast %921 : vector<1x1x128xf32> to vector<1x128xf32>
    %923 = vector.broadcast %920 : vector<8x1xf32> to vector<8x128xf32>
    %924 = vector.broadcast %922 : vector<1x128xf32> to vector<8x128xf32>
    %925 = arith.subf %923, %924 : vector<8x128xf32>
    %926 = math.absf %925 : vector<8x128xf32>
    %c0_523 = arith.constant 0 : index
    %c0_524 = arith.constant 0 : index
    %c101 = arith.constant 101 : index
    %927 = vector.load %arg4[%c0_523, %c0_524, %c101] : memref<1x8x128xf32, #tpu.memory_space<vmem>>, vector<1x8x1xf32>
    %928 = vector.shape_cast %927 : vector<1x8x1xf32> to vector<8x1xf32>
    %c0_525 = arith.constant 0 : index
    %c101_526 = arith.constant 101 : index
    %c0_527 = arith.constant 0 : index
    %929 = vector.load %arg3[%c0_525, %c101_526, %c0_527] : memref<1x128x128xf32, #tpu.memory_space<vmem>>, vector<1x1x128xf32>
    %930 = vector.shape_cast %929 : vector<1x1x128xf32> to vector<1x128xf32>
    %931 = vector.broadcast %928 : vector<8x1xf32> to vector<8x128xf32>
    %932 = vector.broadcast %930 : vector<1x128xf32> to vector<8x128xf32>
    %933 = arith.subf %931, %932 : vector<8x128xf32>
    %934 = math.absf %933 : vector<8x128xf32>
    %935 = arith.addf %926, %934 : vector<8x128xf32>
    %936 = arith.addf %918, %935 : vector<8x128xf32>
    %c0_528 = arith.constant 0 : index
    %c0_529 = arith.constant 0 : index
    %c102 = arith.constant 102 : index
    %937 = vector.load %arg4[%c0_528, %c0_529, %c102] : memref<1x8x128xf32, #tpu.memory_space<vmem>>, vector<1x8x1xf32>
    %938 = vector.shape_cast %937 : vector<1x8x1xf32> to vector<8x1xf32>
    %c0_530 = arith.constant 0 : index
    %c102_531 = arith.constant 102 : index
    %c0_532 = arith.constant 0 : index
    %939 = vector.load %arg3[%c0_530, %c102_531, %c0_532] : memref<1x128x128xf32, #tpu.memory_space<vmem>>, vector<1x1x128xf32>
    %940 = vector.shape_cast %939 : vector<1x1x128xf32> to vector<1x128xf32>
    %941 = vector.broadcast %938 : vector<8x1xf32> to vector<8x128xf32>
    %942 = vector.broadcast %940 : vector<1x128xf32> to vector<8x128xf32>
    %943 = arith.subf %941, %942 : vector<8x128xf32>
    %944 = math.absf %943 : vector<8x128xf32>
    %c0_533 = arith.constant 0 : index
    %c0_534 = arith.constant 0 : index
    %c103 = arith.constant 103 : index
    %945 = vector.load %arg4[%c0_533, %c0_534, %c103] : memref<1x8x128xf32, #tpu.memory_space<vmem>>, vector<1x8x1xf32>
    %946 = vector.shape_cast %945 : vector<1x8x1xf32> to vector<8x1xf32>
    %c0_535 = arith.constant 0 : index
    %c103_536 = arith.constant 103 : index
    %c0_537 = arith.constant 0 : index
    %947 = vector.load %arg3[%c0_535, %c103_536, %c0_537] : memref<1x128x128xf32, #tpu.memory_space<vmem>>, vector<1x1x128xf32>
    %948 = vector.shape_cast %947 : vector<1x1x128xf32> to vector<1x128xf32>
    %949 = vector.broadcast %946 : vector<8x1xf32> to vector<8x128xf32>
    %950 = vector.broadcast %948 : vector<1x128xf32> to vector<8x128xf32>
    %951 = arith.subf %949, %950 : vector<8x128xf32>
    %952 = math.absf %951 : vector<8x128xf32>
    %953 = arith.addf %944, %952 : vector<8x128xf32>
    %954 = arith.addf %936, %953 : vector<8x128xf32>
    %c0_538 = arith.constant 0 : index
    %c0_539 = arith.constant 0 : index
    %c104 = arith.constant 104 : index
    %955 = vector.load %arg4[%c0_538, %c0_539, %c104] : memref<1x8x128xf32, #tpu.memory_space<vmem>>, vector<1x8x1xf32>
    %956 = vector.shape_cast %955 : vector<1x8x1xf32> to vector<8x1xf32>
    %c0_540 = arith.constant 0 : index
    %c104_541 = arith.constant 104 : index
    %c0_542 = arith.constant 0 : index
    %957 = vector.load %arg3[%c0_540, %c104_541, %c0_542] : memref<1x128x128xf32, #tpu.memory_space<vmem>>, vector<1x1x128xf32>
    %958 = vector.shape_cast %957 : vector<1x1x128xf32> to vector<1x128xf32>
    %959 = vector.broadcast %956 : vector<8x1xf32> to vector<8x128xf32>
    %960 = vector.broadcast %958 : vector<1x128xf32> to vector<8x128xf32>
    %961 = arith.subf %959, %960 : vector<8x128xf32>
    %962 = math.absf %961 : vector<8x128xf32>
    %c0_543 = arith.constant 0 : index
    %c0_544 = arith.constant 0 : index
    %c105 = arith.constant 105 : index
    %963 = vector.load %arg4[%c0_543, %c0_544, %c105] : memref<1x8x128xf32, #tpu.memory_space<vmem>>, vector<1x8x1xf32>
    %964 = vector.shape_cast %963 : vector<1x8x1xf32> to vector<8x1xf32>
    %c0_545 = arith.constant 0 : index
    %c105_546 = arith.constant 105 : index
    %c0_547 = arith.constant 0 : index
    %965 = vector.load %arg3[%c0_545, %c105_546, %c0_547] : memref<1x128x128xf32, #tpu.memory_space<vmem>>, vector<1x1x128xf32>
    %966 = vector.shape_cast %965 : vector<1x1x128xf32> to vector<1x128xf32>
    %967 = vector.broadcast %964 : vector<8x1xf32> to vector<8x128xf32>
    %968 = vector.broadcast %966 : vector<1x128xf32> to vector<8x128xf32>
    %969 = arith.subf %967, %968 : vector<8x128xf32>
    %970 = math.absf %969 : vector<8x128xf32>
    %971 = arith.addf %962, %970 : vector<8x128xf32>
    %972 = arith.addf %954, %971 : vector<8x128xf32>
    %c0_548 = arith.constant 0 : index
    %c0_549 = arith.constant 0 : index
    %c106 = arith.constant 106 : index
    %973 = vector.load %arg4[%c0_548, %c0_549, %c106] : memref<1x8x128xf32, #tpu.memory_space<vmem>>, vector<1x8x1xf32>
    %974 = vector.shape_cast %973 : vector<1x8x1xf32> to vector<8x1xf32>
    %c0_550 = arith.constant 0 : index
    %c106_551 = arith.constant 106 : index
    %c0_552 = arith.constant 0 : index
    %975 = vector.load %arg3[%c0_550, %c106_551, %c0_552] : memref<1x128x128xf32, #tpu.memory_space<vmem>>, vector<1x1x128xf32>
    %976 = vector.shape_cast %975 : vector<1x1x128xf32> to vector<1x128xf32>
    %977 = vector.broadcast %974 : vector<8x1xf32> to vector<8x128xf32>
    %978 = vector.broadcast %976 : vector<1x128xf32> to vector<8x128xf32>
    %979 = arith.subf %977, %978 : vector<8x128xf32>
    %980 = math.absf %979 : vector<8x128xf32>
    %c0_553 = arith.constant 0 : index
    %c0_554 = arith.constant 0 : index
    %c107 = arith.constant 107 : index
    %981 = vector.load %arg4[%c0_553, %c0_554, %c107] : memref<1x8x128xf32, #tpu.memory_space<vmem>>, vector<1x8x1xf32>
    %982 = vector.shape_cast %981 : vector<1x8x1xf32> to vector<8x1xf32>
    %c0_555 = arith.constant 0 : index
    %c107_556 = arith.constant 107 : index
    %c0_557 = arith.constant 0 : index
    %983 = vector.load %arg3[%c0_555, %c107_556, %c0_557] : memref<1x128x128xf32, #tpu.memory_space<vmem>>, vector<1x1x128xf32>
    %984 = vector.shape_cast %983 : vector<1x1x128xf32> to vector<1x128xf32>
    %985 = vector.broadcast %982 : vector<8x1xf32> to vector<8x128xf32>
    %986 = vector.broadcast %984 : vector<1x128xf32> to vector<8x128xf32>
    %987 = arith.subf %985, %986 : vector<8x128xf32>
    %988 = math.absf %987 : vector<8x128xf32>
    %989 = arith.addf %980, %988 : vector<8x128xf32>
    %990 = arith.addf %972, %989 : vector<8x128xf32>
    %c0_558 = arith.constant 0 : index
    %c0_559 = arith.constant 0 : index
    %c108 = arith.constant 108 : index
    %991 = vector.load %arg4[%c0_558, %c0_559, %c108] : memref<1x8x128xf32, #tpu.memory_space<vmem>>, vector<1x8x1xf32>
    %992 = vector.shape_cast %991 : vector<1x8x1xf32> to vector<8x1xf32>
    %c0_560 = arith.constant 0 : index
    %c108_561 = arith.constant 108 : index
    %c0_562 = arith.constant 0 : index
    %993 = vector.load %arg3[%c0_560, %c108_561, %c0_562] : memref<1x128x128xf32, #tpu.memory_space<vmem>>, vector<1x1x128xf32>
    %994 = vector.shape_cast %993 : vector<1x1x128xf32> to vector<1x128xf32>
    %995 = vector.broadcast %992 : vector<8x1xf32> to vector<8x128xf32>
    %996 = vector.broadcast %994 : vector<1x128xf32> to vector<8x128xf32>
    %997 = arith.subf %995, %996 : vector<8x128xf32>
    %998 = math.absf %997 : vector<8x128xf32>
    %c0_563 = arith.constant 0 : index
    %c0_564 = arith.constant 0 : index
    %c109 = arith.constant 109 : index
    %999 = vector.load %arg4[%c0_563, %c0_564, %c109] : memref<1x8x128xf32, #tpu.memory_space<vmem>>, vector<1x8x1xf32>
    %1000 = vector.shape_cast %999 : vector<1x8x1xf32> to vector<8x1xf32>
    %c0_565 = arith.constant 0 : index
    %c109_566 = arith.constant 109 : index
    %c0_567 = arith.constant 0 : index
    %1001 = vector.load %arg3[%c0_565, %c109_566, %c0_567] : memref<1x128x128xf32, #tpu.memory_space<vmem>>, vector<1x1x128xf32>
    %1002 = vector.shape_cast %1001 : vector<1x1x128xf32> to vector<1x128xf32>
    %1003 = vector.broadcast %1000 : vector<8x1xf32> to vector<8x128xf32>
    %1004 = vector.broadcast %1002 : vector<1x128xf32> to vector<8x128xf32>
    %1005 = arith.subf %1003, %1004 : vector<8x128xf32>
    %1006 = math.absf %1005 : vector<8x128xf32>
    %1007 = arith.addf %998, %1006 : vector<8x128xf32>
    %1008 = arith.addf %990, %1007 : vector<8x128xf32>
    %c0_568 = arith.constant 0 : index
    %c0_569 = arith.constant 0 : index
    %c110 = arith.constant 110 : index
    %1009 = vector.load %arg4[%c0_568, %c0_569, %c110] : memref<1x8x128xf32, #tpu.memory_space<vmem>>, vector<1x8x1xf32>
    %1010 = vector.shape_cast %1009 : vector<1x8x1xf32> to vector<8x1xf32>
    %c0_570 = arith.constant 0 : index
    %c110_571 = arith.constant 110 : index
    %c0_572 = arith.constant 0 : index
    %1011 = vector.load %arg3[%c0_570, %c110_571, %c0_572] : memref<1x128x128xf32, #tpu.memory_space<vmem>>, vector<1x1x128xf32>
    %1012 = vector.shape_cast %1011 : vector<1x1x128xf32> to vector<1x128xf32>
    %1013 = vector.broadcast %1010 : vector<8x1xf32> to vector<8x128xf32>
    %1014 = vector.broadcast %1012 : vector<1x128xf32> to vector<8x128xf32>
    %1015 = arith.subf %1013, %1014 : vector<8x128xf32>
    %1016 = math.absf %1015 : vector<8x128xf32>
    %c0_573 = arith.constant 0 : index
    %c0_574 = arith.constant 0 : index
    %c111 = arith.constant 111 : index
    %1017 = vector.load %arg4[%c0_573, %c0_574, %c111] : memref<1x8x128xf32, #tpu.memory_space<vmem>>, vector<1x8x1xf32>
    %1018 = vector.shape_cast %1017 : vector<1x8x1xf32> to vector<8x1xf32>
    %c0_575 = arith.constant 0 : index
    %c111_576 = arith.constant 111 : index
    %c0_577 = arith.constant 0 : index
    %1019 = vector.load %arg3[%c0_575, %c111_576, %c0_577] : memref<1x128x128xf32, #tpu.memory_space<vmem>>, vector<1x1x128xf32>
    %1020 = vector.shape_cast %1019 : vector<1x1x128xf32> to vector<1x128xf32>
    %1021 = vector.broadcast %1018 : vector<8x1xf32> to vector<8x128xf32>
    %1022 = vector.broadcast %1020 : vector<1x128xf32> to vector<8x128xf32>
    %1023 = arith.subf %1021, %1022 : vector<8x128xf32>
    %1024 = math.absf %1023 : vector<8x128xf32>
    %1025 = arith.addf %1016, %1024 : vector<8x128xf32>
    %1026 = arith.addf %1008, %1025 : vector<8x128xf32>
    %c0_578 = arith.constant 0 : index
    %c0_579 = arith.constant 0 : index
    %c112 = arith.constant 112 : index
    %1027 = vector.load %arg4[%c0_578, %c0_579, %c112] : memref<1x8x128xf32, #tpu.memory_space<vmem>>, vector<1x8x1xf32>
    %1028 = vector.shape_cast %1027 : vector<1x8x1xf32> to vector<8x1xf32>
    %c0_580 = arith.constant 0 : index
    %c112_581 = arith.constant 112 : index
    %c0_582 = arith.constant 0 : index
    %1029 = vector.load %arg3[%c0_580, %c112_581, %c0_582] : memref<1x128x128xf32, #tpu.memory_space<vmem>>, vector<1x1x128xf32>
    %1030 = vector.shape_cast %1029 : vector<1x1x128xf32> to vector<1x128xf32>
    %1031 = vector.broadcast %1028 : vector<8x1xf32> to vector<8x128xf32>
    %1032 = vector.broadcast %1030 : vector<1x128xf32> to vector<8x128xf32>
    %1033 = arith.subf %1031, %1032 : vector<8x128xf32>
    %1034 = math.absf %1033 : vector<8x128xf32>
    %c0_583 = arith.constant 0 : index
    %c0_584 = arith.constant 0 : index
    %c113 = arith.constant 113 : index
    %1035 = vector.load %arg4[%c0_583, %c0_584, %c113] : memref<1x8x128xf32, #tpu.memory_space<vmem>>, vector<1x8x1xf32>
    %1036 = vector.shape_cast %1035 : vector<1x8x1xf32> to vector<8x1xf32>
    %c0_585 = arith.constant 0 : index
    %c113_586 = arith.constant 113 : index
    %c0_587 = arith.constant 0 : index
    %1037 = vector.load %arg3[%c0_585, %c113_586, %c0_587] : memref<1x128x128xf32, #tpu.memory_space<vmem>>, vector<1x1x128xf32>
    %1038 = vector.shape_cast %1037 : vector<1x1x128xf32> to vector<1x128xf32>
    %1039 = vector.broadcast %1036 : vector<8x1xf32> to vector<8x128xf32>
    %1040 = vector.broadcast %1038 : vector<1x128xf32> to vector<8x128xf32>
    %1041 = arith.subf %1039, %1040 : vector<8x128xf32>
    %1042 = math.absf %1041 : vector<8x128xf32>
    %1043 = arith.addf %1034, %1042 : vector<8x128xf32>
    %1044 = arith.addf %1026, %1043 : vector<8x128xf32>
    %c0_588 = arith.constant 0 : index
    %c0_589 = arith.constant 0 : index
    %c114 = arith.constant 114 : index
    %1045 = vector.load %arg4[%c0_588, %c0_589, %c114] : memref<1x8x128xf32, #tpu.memory_space<vmem>>, vector<1x8x1xf32>
    %1046 = vector.shape_cast %1045 : vector<1x8x1xf32> to vector<8x1xf32>
    %c0_590 = arith.constant 0 : index
    %c114_591 = arith.constant 114 : index
    %c0_592 = arith.constant 0 : index
    %1047 = vector.load %arg3[%c0_590, %c114_591, %c0_592] : memref<1x128x128xf32, #tpu.memory_space<vmem>>, vector<1x1x128xf32>
    %1048 = vector.shape_cast %1047 : vector<1x1x128xf32> to vector<1x128xf32>
    %1049 = vector.broadcast %1046 : vector<8x1xf32> to vector<8x128xf32>
    %1050 = vector.broadcast %1048 : vector<1x128xf32> to vector<8x128xf32>
    %1051 = arith.subf %1049, %1050 : vector<8x128xf32>
    %1052 = math.absf %1051 : vector<8x128xf32>
    %c0_593 = arith.constant 0 : index
    %c0_594 = arith.constant 0 : index
    %c115 = arith.constant 115 : index
    %1053 = vector.load %arg4[%c0_593, %c0_594, %c115] : memref<1x8x128xf32, #tpu.memory_space<vmem>>, vector<1x8x1xf32>
    %1054 = vector.shape_cast %1053 : vector<1x8x1xf32> to vector<8x1xf32>
    %c0_595 = arith.constant 0 : index
    %c115_596 = arith.constant 115 : index
    %c0_597 = arith.constant 0 : index
    %1055 = vector.load %arg3[%c0_595, %c115_596, %c0_597] : memref<1x128x128xf32, #tpu.memory_space<vmem>>, vector<1x1x128xf32>
    %1056 = vector.shape_cast %1055 : vector<1x1x128xf32> to vector<1x128xf32>
    %1057 = vector.broadcast %1054 : vector<8x1xf32> to vector<8x128xf32>
    %1058 = vector.broadcast %1056 : vector<1x128xf32> to vector<8x128xf32>
    %1059 = arith.subf %1057, %1058 : vector<8x128xf32>
    %1060 = math.absf %1059 : vector<8x128xf32>
    %1061 = arith.addf %1052, %1060 : vector<8x128xf32>
    %1062 = arith.addf %1044, %1061 : vector<8x128xf32>
    %c0_598 = arith.constant 0 : index
    %c0_599 = arith.constant 0 : index
    %c116 = arith.constant 116 : index
    %1063 = vector.load %arg4[%c0_598, %c0_599, %c116] : memref<1x8x128xf32, #tpu.memory_space<vmem>>, vector<1x8x1xf32>
    %1064 = vector.shape_cast %1063 : vector<1x8x1xf32> to vector<8x1xf32>
    %c0_600 = arith.constant 0 : index
    %c116_601 = arith.constant 116 : index
    %c0_602 = arith.constant 0 : index
    %1065 = vector.load %arg3[%c0_600, %c116_601, %c0_602] : memref<1x128x128xf32, #tpu.memory_space<vmem>>, vector<1x1x128xf32>
    %1066 = vector.shape_cast %1065 : vector<1x1x128xf32> to vector<1x128xf32>
    %1067 = vector.broadcast %1064 : vector<8x1xf32> to vector<8x128xf32>
    %1068 = vector.broadcast %1066 : vector<1x128xf32> to vector<8x128xf32>
    %1069 = arith.subf %1067, %1068 : vector<8x128xf32>
    %1070 = math.absf %1069 : vector<8x128xf32>
    %c0_603 = arith.constant 0 : index
    %c0_604 = arith.constant 0 : index
    %c117 = arith.constant 117 : index
    %1071 = vector.load %arg4[%c0_603, %c0_604, %c117] : memref<1x8x128xf32, #tpu.memory_space<vmem>>, vector<1x8x1xf32>
    %1072 = vector.shape_cast %1071 : vector<1x8x1xf32> to vector<8x1xf32>
    %c0_605 = arith.constant 0 : index
    %c117_606 = arith.constant 117 : index
    %c0_607 = arith.constant 0 : index
    %1073 = vector.load %arg3[%c0_605, %c117_606, %c0_607] : memref<1x128x128xf32, #tpu.memory_space<vmem>>, vector<1x1x128xf32>
    %1074 = vector.shape_cast %1073 : vector<1x1x128xf32> to vector<1x128xf32>
    %1075 = vector.broadcast %1072 : vector<8x1xf32> to vector<8x128xf32>
    %1076 = vector.broadcast %1074 : vector<1x128xf32> to vector<8x128xf32>
    %1077 = arith.subf %1075, %1076 : vector<8x128xf32>
    %1078 = math.absf %1077 : vector<8x128xf32>
    %1079 = arith.addf %1070, %1078 : vector<8x128xf32>
    %1080 = arith.addf %1062, %1079 : vector<8x128xf32>
    %c0_608 = arith.constant 0 : index
    %c0_609 = arith.constant 0 : index
    %c118 = arith.constant 118 : index
    %1081 = vector.load %arg4[%c0_608, %c0_609, %c118] : memref<1x8x128xf32, #tpu.memory_space<vmem>>, vector<1x8x1xf32>
    %1082 = vector.shape_cast %1081 : vector<1x8x1xf32> to vector<8x1xf32>
    %c0_610 = arith.constant 0 : index
    %c118_611 = arith.constant 118 : index
    %c0_612 = arith.constant 0 : index
    %1083 = vector.load %arg3[%c0_610, %c118_611, %c0_612] : memref<1x128x128xf32, #tpu.memory_space<vmem>>, vector<1x1x128xf32>
    %1084 = vector.shape_cast %1083 : vector<1x1x128xf32> to vector<1x128xf32>
    %1085 = vector.broadcast %1082 : vector<8x1xf32> to vector<8x128xf32>
    %1086 = vector.broadcast %1084 : vector<1x128xf32> to vector<8x128xf32>
    %1087 = arith.subf %1085, %1086 : vector<8x128xf32>
    %1088 = math.absf %1087 : vector<8x128xf32>
    %c0_613 = arith.constant 0 : index
    %c0_614 = arith.constant 0 : index
    %c119 = arith.constant 119 : index
    %1089 = vector.load %arg4[%c0_613, %c0_614, %c119] : memref<1x8x128xf32, #tpu.memory_space<vmem>>, vector<1x8x1xf32>
    %1090 = vector.shape_cast %1089 : vector<1x8x1xf32> to vector<8x1xf32>
    %c0_615 = arith.constant 0 : index
    %c119_616 = arith.constant 119 : index
    %c0_617 = arith.constant 0 : index
    %1091 = vector.load %arg3[%c0_615, %c119_616, %c0_617] : memref<1x128x128xf32, #tpu.memory_space<vmem>>, vector<1x1x128xf32>
    %1092 = vector.shape_cast %1091 : vector<1x1x128xf32> to vector<1x128xf32>
    %1093 = vector.broadcast %1090 : vector<8x1xf32> to vector<8x128xf32>
    %1094 = vector.broadcast %1092 : vector<1x128xf32> to vector<8x128xf32>
    %1095 = arith.subf %1093, %1094 : vector<8x128xf32>
    %1096 = math.absf %1095 : vector<8x128xf32>
    %1097 = arith.addf %1088, %1096 : vector<8x128xf32>
    %1098 = arith.addf %1080, %1097 : vector<8x128xf32>
    %c0_618 = arith.constant 0 : index
    %c0_619 = arith.constant 0 : index
    %c120 = arith.constant 120 : index
    %1099 = vector.load %arg4[%c0_618, %c0_619, %c120] : memref<1x8x128xf32, #tpu.memory_space<vmem>>, vector<1x8x1xf32>
    %1100 = vector.shape_cast %1099 : vector<1x8x1xf32> to vector<8x1xf32>
    %c0_620 = arith.constant 0 : index
    %c120_621 = arith.constant 120 : index
    %c0_622 = arith.constant 0 : index
    %1101 = vector.load %arg3[%c0_620, %c120_621, %c0_622] : memref<1x128x128xf32, #tpu.memory_space<vmem>>, vector<1x1x128xf32>
    %1102 = vector.shape_cast %1101 : vector<1x1x128xf32> to vector<1x128xf32>
    %1103 = vector.broadcast %1100 : vector<8x1xf32> to vector<8x128xf32>
    %1104 = vector.broadcast %1102 : vector<1x128xf32> to vector<8x128xf32>
    %1105 = arith.subf %1103, %1104 : vector<8x128xf32>
    %1106 = math.absf %1105 : vector<8x128xf32>
    %c0_623 = arith.constant 0 : index
    %c0_624 = arith.constant 0 : index
    %c121 = arith.constant 121 : index
    %1107 = vector.load %arg4[%c0_623, %c0_624, %c121] : memref<1x8x128xf32, #tpu.memory_space<vmem>>, vector<1x8x1xf32>
    %1108 = vector.shape_cast %1107 : vector<1x8x1xf32> to vector<8x1xf32>
    %c0_625 = arith.constant 0 : index
    %c121_626 = arith.constant 121 : index
    %c0_627 = arith.constant 0 : index
    %1109 = vector.load %arg3[%c0_625, %c121_626, %c0_627] : memref<1x128x128xf32, #tpu.memory_space<vmem>>, vector<1x1x128xf32>
    %1110 = vector.shape_cast %1109 : vector<1x1x128xf32> to vector<1x128xf32>
    %1111 = vector.broadcast %1108 : vector<8x1xf32> to vector<8x128xf32>
    %1112 = vector.broadcast %1110 : vector<1x128xf32> to vector<8x128xf32>
    %1113 = arith.subf %1111, %1112 : vector<8x128xf32>
    %1114 = math.absf %1113 : vector<8x128xf32>
    %1115 = arith.addf %1106, %1114 : vector<8x128xf32>
    %1116 = arith.addf %1098, %1115 : vector<8x128xf32>
    %c0_628 = arith.constant 0 : index
    %c0_629 = arith.constant 0 : index
    %c122 = arith.constant 122 : index
    %1117 = vector.load %arg4[%c0_628, %c0_629, %c122] : memref<1x8x128xf32, #tpu.memory_space<vmem>>, vector<1x8x1xf32>
    %1118 = vector.shape_cast %1117 : vector<1x8x1xf32> to vector<8x1xf32>
    %c0_630 = arith.constant 0 : index
    %c122_631 = arith.constant 122 : index
    %c0_632 = arith.constant 0 : index
    %1119 = vector.load %arg3[%c0_630, %c122_631, %c0_632] : memref<1x128x128xf32, #tpu.memory_space<vmem>>, vector<1x1x128xf32>
    %1120 = vector.shape_cast %1119 : vector<1x1x128xf32> to vector<1x128xf32>
    %1121 = vector.broadcast %1118 : vector<8x1xf32> to vector<8x128xf32>
    %1122 = vector.broadcast %1120 : vector<1x128xf32> to vector<8x128xf32>
    %1123 = arith.subf %1121, %1122 : vector<8x128xf32>
    %1124 = math.absf %1123 : vector<8x128xf32>
    %c0_633 = arith.constant 0 : index
    %c0_634 = arith.constant 0 : index
    %c123 = arith.constant 123 : index
    %1125 = vector.load %arg4[%c0_633, %c0_634, %c123] : memref<1x8x128xf32, #tpu.memory_space<vmem>>, vector<1x8x1xf32>
    %1126 = vector.shape_cast %1125 : vector<1x8x1xf32> to vector<8x1xf32>
    %c0_635 = arith.constant 0 : index
    %c123_636 = arith.constant 123 : index
    %c0_637 = arith.constant 0 : index
    %1127 = vector.load %arg3[%c0_635, %c123_636, %c0_637] : memref<1x128x128xf32, #tpu.memory_space<vmem>>, vector<1x1x128xf32>
    %1128 = vector.shape_cast %1127 : vector<1x1x128xf32> to vector<1x128xf32>
    %1129 = vector.broadcast %1126 : vector<8x1xf32> to vector<8x128xf32>
    %1130 = vector.broadcast %1128 : vector<1x128xf32> to vector<8x128xf32>
    %1131 = arith.subf %1129, %1130 : vector<8x128xf32>
    %1132 = math.absf %1131 : vector<8x128xf32>
    %1133 = arith.addf %1124, %1132 : vector<8x128xf32>
    %1134 = arith.addf %1116, %1133 : vector<8x128xf32>
    %c0_638 = arith.constant 0 : index
    %c0_639 = arith.constant 0 : index
    %c124 = arith.constant 124 : index
    %1135 = vector.load %arg4[%c0_638, %c0_639, %c124] : memref<1x8x128xf32, #tpu.memory_space<vmem>>, vector<1x8x1xf32>
    %1136 = vector.shape_cast %1135 : vector<1x8x1xf32> to vector<8x1xf32>
    %c0_640 = arith.constant 0 : index
    %c124_641 = arith.constant 124 : index
    %c0_642 = arith.constant 0 : index
    %1137 = vector.load %arg3[%c0_640, %c124_641, %c0_642] : memref<1x128x128xf32, #tpu.memory_space<vmem>>, vector<1x1x128xf32>
    %1138 = vector.shape_cast %1137 : vector<1x1x128xf32> to vector<1x128xf32>
    %1139 = vector.broadcast %1136 : vector<8x1xf32> to vector<8x128xf32>
    %1140 = vector.broadcast %1138 : vector<1x128xf32> to vector<8x128xf32>
    %1141 = arith.subf %1139, %1140 : vector<8x128xf32>
    %1142 = math.absf %1141 : vector<8x128xf32>
    %c0_643 = arith.constant 0 : index
    %c0_644 = arith.constant 0 : index
    %c125 = arith.constant 125 : index
    %1143 = vector.load %arg4[%c0_643, %c0_644, %c125] : memref<1x8x128xf32, #tpu.memory_space<vmem>>, vector<1x8x1xf32>
    %1144 = vector.shape_cast %1143 : vector<1x8x1xf32> to vector<8x1xf32>
    %c0_645 = arith.constant 0 : index
    %c125_646 = arith.constant 125 : index
    %c0_647 = arith.constant 0 : index
    %1145 = vector.load %arg3[%c0_645, %c125_646, %c0_647] : memref<1x128x128xf32, #tpu.memory_space<vmem>>, vector<1x1x128xf32>
    %1146 = vector.shape_cast %1145 : vector<1x1x128xf32> to vector<1x128xf32>
    %1147 = vector.broadcast %1144 : vector<8x1xf32> to vector<8x128xf32>
    %1148 = vector.broadcast %1146 : vector<1x128xf32> to vector<8x128xf32>
    %1149 = arith.subf %1147, %1148 : vector<8x128xf32>
    %1150 = math.absf %1149 : vector<8x128xf32>
    %1151 = arith.addf %1142, %1150 : vector<8x128xf32>
    %1152 = arith.addf %1134, %1151 : vector<8x128xf32>
    %c0_648 = arith.constant 0 : index
    %c0_649 = arith.constant 0 : index
    %c126 = arith.constant 126 : index
    %1153 = vector.load %arg4[%c0_648, %c0_649, %c126] : memref<1x8x128xf32, #tpu.memory_space<vmem>>, vector<1x8x1xf32>
    %1154 = vector.shape_cast %1153 : vector<1x8x1xf32> to vector<8x1xf32>
    %c0_650 = arith.constant 0 : index
    %c126_651 = arith.constant 126 : index
    %c0_652 = arith.constant 0 : index
    %1155 = vector.load %arg3[%c0_650, %c126_651, %c0_652] : memref<1x128x128xf32, #tpu.memory_space<vmem>>, vector<1x1x128xf32>
    %1156 = vector.shape_cast %1155 : vector<1x1x128xf32> to vector<1x128xf32>
    %1157 = vector.broadcast %1154 : vector<8x1xf32> to vector<8x128xf32>
    %1158 = vector.broadcast %1156 : vector<1x128xf32> to vector<8x128xf32>
    %1159 = arith.subf %1157, %1158 : vector<8x128xf32>
    %1160 = math.absf %1159 : vector<8x128xf32>
    %c0_653 = arith.constant 0 : index
    %c0_654 = arith.constant 0 : index
    %c127 = arith.constant 127 : index
    %1161 = vector.load %arg4[%c0_653, %c0_654, %c127] : memref<1x8x128xf32, #tpu.memory_space<vmem>>, vector<1x8x1xf32>
    %1162 = vector.shape_cast %1161 : vector<1x8x1xf32> to vector<8x1xf32>
    %c0_655 = arith.constant 0 : index
    %c127_656 = arith.constant 127 : index
    %c0_657 = arith.constant 0 : index
    %1163 = vector.load %arg3[%c0_655, %c127_656, %c0_657] : memref<1x128x128xf32, #tpu.memory_space<vmem>>, vector<1x1x128xf32>
    %1164 = vector.shape_cast %1163 : vector<1x1x128xf32> to vector<1x128xf32>
    %1165 = vector.broadcast %1162 : vector<8x1xf32> to vector<8x128xf32>
    %1166 = vector.broadcast %1164 : vector<1x128xf32> to vector<8x128xf32>
    %1167 = arith.subf %1165, %1166 : vector<8x128xf32>
    %1168 = math.absf %1167 : vector<8x128xf32>
    %1169 = arith.addf %1160, %1168 : vector<8x128xf32>
    %1170 = arith.addf %1152, %1169 : vector<8x128xf32>
    %cst_658 = arith.constant -0.176776692 : f32
    %1171 = vector.broadcast %cst_658 : f32 to vector<8x128xf32>
    %1172 = arith.mulf %1170, %1171 : vector<8x128xf32>
    %c0_659 = arith.constant 0 : index
    %c3_660 = arith.constant 3 : index
    %c0_661 = arith.constant 0 : index
    %c0_662 = arith.constant 0 : index
    %1173 = vector.load %arg5[%c0_659, %c3_660, %c0_661, %c0_662] : memref<1x4x8x128xf32, #tpu.memory_space<vmem>>, vector<1x1x8x128xf32>
    %1174 = vector.shape_cast %1173 : vector<1x1x8x128xf32> to vector<8x128xf32>
    %1175 = vector.shape_cast %1172 : vector<8x128xf32> to vector<1x1x8x128xf32>
    tpu.vector_store %arg5[%c0_659, %c3_660, %c0_661, %c0_662], %1175 {strides = array<i32>} : memref<1x4x8x128xf32, #tpu.memory_space<vmem>>, vector<1x1x8x128xf32>,
    return
  }
  func.func @transform_0(%arg0: i32, %arg1: i32, %arg2: i32) -> (i32, i32, i32) {
    %c0_i32 = arith.constant 0 : i32
    %c0_i32_0 = arith.constant 0 : i32
    return %arg0, %c0_i32, %arg2 : i32, i32, i32
  }
  func.func @transform_1(%arg0: i32, %arg1: i32, %arg2: i32) -> (i32, i32, i32) {
    %c0_i32 = arith.constant 0 : i32
    %c0_i32_0 = arith.constant 0 : i32
    return %arg0, %arg1, %c0_i32 : i32, i32, i32
  }
  func.func @transform_2(%arg0: i32, %arg1: i32, %arg2: i32) -> (i32, i32, i32, i32) {
    %c0_i32 = arith.constant 0 : i32
    %c0_i32_0 = arith.constant 0 : i32
    return %arg0, %c0_i32, %arg1, %arg2 : i32, i32, i32, i32
  }
}

</mosaic_0001>

<llo_original>
// kernel: tpu_custom_call.1
$region0: #{tpu_custom_call.1}
  #allocation0 [shape = 'u32[]', space=smem, size = 0x4, offset = 0x4, fixed_abs, tag = 'smem constant byte address 0x4 - core index']
  #allocation1 [shape = 'u32[72,128]{1,0:T(1,128)}', space=vmem, size = 0x9000, scoped, tag = 'internal scratch']
  %s0 = inlined_call_operand.hbm [shape: f32[2,128,128], index: 0, kind: input, shape index: {}]
  %s1 = inlined_call_operand.hbm [shape: f32[2,8,128], index: 1, kind: input, shape index: {}]
  %s2 = inlined_call_operand.hbm [shape: f32[2,4,8,128], index: 2, kind: output, shape index: {}]
  %s3 = sld [smem:[#allocation0]]
  $region49: #{tpu_custom_call.1} parent=0
    _
  %s5 = ssub.s32 1, %s3
  %s6 = scalar_select 0, %s5, %s3
  $region1: #{tpu_custom_call.1} parent=0
    #allocation2 [shape = 'u8[131072]{0}', space=vmem, size = 0x20000, scoped, tag = 'input window, operand 0']
    #allocation3 [shape = 's32[2]{0}', space=sflag, size = 0x8, scoped, tag = 'scoped memory for tpu_custom_call.1']
    #allocation4 [shape = 's32[2]{0}', space=sflag, size = 0x8, scoped, tag = 'scoped memory for tpu_custom_call.1']
    #allocation5 [shape = 'u8[8192]{0}', space=vmem, size = 0x2000, scoped, tag = 'input window, operand 1']
    #allocation6 [shape = 's32[2]{0}', space=sflag, size = 0x8, scoped, tag = 'scoped memory for tpu_custom_call.1']
    #allocation7 [shape = 'u8[32768]{0}', space=vmem, size = 0x8000, scoped, tag = 'output window, operand 0']
    %7 = vsyncpa [#allocation3], 0
    %s8 = scalar_lea.sflag [#allocation3], 1
    %9 = vsyncpa %s8, 0
    %10 = vsyncpa [#allocation6], 0
    %s11 = scalar_lea.sflag [#allocation6], 1
    %12 = vsyncpa %s11, 0
    %13 = vsyncpa [#allocation4], 0
    %s14 = scalar_lea.sflag [#allocation4], 1
    %15 = vsyncpa %s14, 0
    loop: start=0, step=1, limit=4
    $region2: #{tpu_custom_call.1} parent=1 // loop_pre_header
      _
    $region3: #{tpu_custom_call.1} parent=1 // loop_header
      %s17 = sphi 0, %s21
      %p18 = scmp.ge.s32.totalorder %s17, 4
      %s24 = sphi 0, %s43
      %s25 = sphi 0, %s39
      %s26 = sphi 0, %s35
      %s27 = sphi 0, %s24
      %s28 = sphi 0, %s25
      %s29 = sphi 0, %s26
      %s30 = sphi 0, %s27
      %s31 = sphi 0, %s28
      %s32 = sphi 0, %s29
      %s48 = sphi 0, %s50
      %s51 = sphi 0, %s48
      %s52 = sphi 0, %s51
      %s68 = sphi 0, %s52
      %s76 = sphi 0, %s78
      %s79 = sphi 0, %s76
      %s80 = sphi 0, %s79
      %s96 = sphi 0, %s80
      %s106 = sphi 0, %s108
      %s109 = sphi 0, %s106
      %s110 = sphi 0, %s109
      %s126 = sphi 0, %s110
    $region4: #{tpu_custom_call.1} parent=1 // loop_header_branch
      %20 = sbr.rel (%p18) target = $region8
    $region5: #{tpu_custom_call.1} parent=1 // loop_body
      %s22 = ssub.s32 %s17, 1
      %s23 = ssub.s32 %s17, 2
      %s33 = sadd.s32 1, %s26
      %p34 = scmp.ge.s32.totalorder %s33, 1
      %s35 = scalar_select %p34, 0, %s33
      %s36 = sadd.s32 1, %s25
      %s37 = scalar_select %p34, %s36, %s25
      %p38 = scmp.ge.s32.totalorder %s37, 1
      %s39 = scalar_select %p38, 0, %s37
      %s40 = sadd.s32 1, %s24
      %s41 = scalar_select %p38, %s40, %s24
      %p42 = scmp.ge.s32.totalorder %s41, 2
      %s43 = scalar_select %p42, 0, %s41
      %s44 = ssub.s32 %s24, %s43
      %s45 = ssub.s32 %s26, %s35
      %s46 = sor.u32 %s44, %s45
      %p47 = scmp.eq.s32.totalorder %s46, 0
      %s49 = sadd.s32 %s48, 1
      %s50 = scalar_select %p47, %s48, %s49
      %p53 = pneg %p47
      %p54 = scmp.eq.s32.totalorder %s17, 1
      %p55 = por %p53, %p54
      %p56 = scmp.ne.s32.totalorder %s48, %s51
      %p57 = scmp.eq.s32.totalorder %s17, 0
      %p58 = por %p56, %p57
      %p59 = scmp.ne.s32.totalorder %s48, %s51
      %p60 = scmp.eq.s32.totalorder %s22, 1
      %p61 = por %p59, %p60
      %p62 = scmp.ne.s32.totalorder %s51, %s52
      %p63 = scmp.eq.s32.totalorder %s22, 0
      %p64 = por %p62, %p63
      %p65 = scmp.ne.s32.totalorder %s51, %s52
      %p66 = scmp.eq.s32.totalorder %s23, 1
      %p67 = por %p65, %p66
      %p69 = scmp.ne.s32.totalorder %s52, %s68
      %p70 = scmp.eq.s32.totalorder %s23, 0
      %p71 = por %p69, %p70
      %s72 = ssub.s32 %s24, %s43
      %s73 = ssub.s32 %s25, %s39
      %s74 = sor.u32 %s72, %s73
      %p75 = scmp.eq.s32.totalorder %s74, 0
      %s77 = sadd.s32 %s76, 1
      %s78 = scalar_select %p75, %s76, %s77
      %p81 = pneg %p75
      %p82 = scmp.eq.s32.totalorder %s17, 1
      %p83 = por %p81, %p82
      %p84 = scmp.ne.s32.totalorder %s76, %s79
      %p85 = scmp.eq.s32.totalorder %s17, 0
      %p86 = por %p84, %p85
      %p87 = scmp.ne.s32.totalorder %s76, %s79
      %p88 = scmp.eq.s32.totalorder %s22, 1
      %p89 = por %p87, %p88
      %p90 = scmp.ne.s32.totalorder %s79, %s80
      %p91 = scmp.eq.s32.totalorder %s22, 0
      %p92 = por %p90, %p91
      %p93 = scmp.ne.s32.totalorder %s79, %s80
      %p94 = scmp.eq.s32.totalorder %s23, 1
      %p95 = por %p93, %p94
      %p97 = scmp.ne.s32.totalorder %s80, %s96
      %p98 = scmp.eq.s32.totalorder %s23, 0
      %p99 = por %p97, %p98
      %s100 = ssub.s32 %s24, %s43
      %s101 = ssub.s32 %s25, %s39
      %s102 = sor.u32 %s100, %s101
      %s103 = ssub.s32 %s26, %s35
      %s104 = sor.u32 %s102, %s103
      %p105 = scmp.eq.s32.totalorder %s104, 0
      %s107 = sadd.s32 %s106, 1
      %s108 = scalar_select %p105, %s106, %s107
      %p111 = pneg %p105
      %p112 = scmp.eq.s32.totalorder %s17, 1
      %p113 = por %p111, %p112
      %p114 = scmp.ne.s32.totalorder %s106, %s109
      %p115 = scmp.eq.s32.totalorder %s17, 0
      %p116 = por %p114, %p115
      %p117 = scmp.ne.s32.totalorder %s106, %s109
      %p118 = scmp.eq.s32.totalorder %s22, 1
      %p119 = por %p117, %p118
      %p120 = scmp.ne.s32.totalorder %s109, %s110
      %p121 = scmp.eq.s32.totalorder %s22, 0
      %p122 = por %p120, %p121
      %p123 = scmp.ne.s32.totalorder %s109, %s110
      %p124 = scmp.eq.s32.totalorder %s23, 1
      %p125 = por %p123, %p124
      %p127 = scmp.ne.s32.totalorder %s110, %s126
      %p128 = scmp.eq.s32.totalorder %s23, 0
      %p129 = por %p127, %p128
      %p130 = scmp.le.s32.totalorder 1, %s17
      %p131 = scmp.lt.s32.totalorder %s17, 3
      %p132 = pnand %p130, %p131
      %p133 = pneg %p132
      // Predicated region
      $region9: #{tpu_custom_call.1} parent=5 // pred_check
        _
      $region10: #{tpu_custom_call.1} parent=5 // pred_check_branch
        %135 = sbr.rel (%p132) target = $region12
      $region11: #{tpu_custom_call.1} parent=5 // pred_region
        %s136 = ssub.s32 %s17, 1
      $region12: #{tpu_custom_call.1} parent=5 // pred_fallthru
        _
      %p137 = scmp.lt.s32.totalorder %s17, 2
      // Predicated region
      $region13: #{tpu_custom_call.1} parent=5 // pred_check
        %p138 = pneg %p137
      $region14: #{tpu_custom_call.1} parent=5 // pred_check_branch
        %140 = sbr.rel (%p138) target = $region16
      $region15: #{tpu_custom_call.1} parent=5 // pred_region
        // Predicated region
        $region17: #{tpu_custom_call.1} parent=15 // pred_check
          %p141 = pneg %p58
        $region18: #{tpu_custom_call.1} parent=15 // pred_check_branch
          %143 = sbr.rel (%p141) target = $region20
        $region19: #{tpu_custom_call.1} parent=15 // pred_region
          %s144 = sand.u32 %s48, 1
          %s145 = scalar_lea.sflag [#allocation3], %s144
          %s146 = sand.u32 %s48, 1
          %s147 = smul.addr %s146, 128
          %s148 = scalar_lea.vmem [#allocation2], %s147
          %150 = vsyncadd %s145, 0
          %s151 = smul.addr %s24, 16
          %s152 = sadd.s32 %s26, %s151
          %s153 = smul.addr %s152, 8
          %s154 = scalar_lea.hbm %s0, %s153
          %s155 = sshll.u32 %s154, 4
          %s156 = int_to_ptr.hbm [resolvable:$true] %s155
          %s157 = sshll.u32 %s148, 4
          %s158 = int_to_ptr.vmem [resolvable:$true] %s157
          %163 = dma.hbm_to_vmem [thread:$0]  %s156, 2048, %s158, %s145, 128, 128, 8
        $region20: #{tpu_custom_call.1} parent=15 // pred_fallthru
          _
        // Predicated region
        $region21: #{tpu_custom_call.1} parent=15 // pred_check
          %p164 = pneg %p86
        $region22: #{tpu_custom_call.1} parent=15 // pred_check_branch
          %166 = sbr.rel (%p164) target = $region24
        $region23: #{tpu_custom_call.1} parent=15 // pred_region
          %s167 = sand.u32 %s76, 1
          %s168 = scalar_lea.sflag [#allocation6], %s167
          %s169 = sand.u32 %s76, 1
          %s170 = smul.addr %s169, 8
          %s171 = scalar_lea.vmem [#allocation5], %s170
          %173 = vsyncadd %s168, 0
          %s174 = sadd.s32 %s25, %s24
          %s175 = smul.addr %s174, 8
          %s176 = scalar_lea.hbm %s1, %s175
          %s178 = sshll.u32 %s176, 4
          %s179 = int_to_ptr.hbm [resolvable:$true] %s178
          %s180 = sshll.u32 %s171, 4
          %s181 = int_to_ptr.vmem [resolvable:$true] %s180
          %183 = dma.hbm_to_vmem [thread:$0]  %s179, 128, %s181, %s168
        $region24: #{tpu_custom_call.1} parent=15 // pred_fallthru
          _
      $region16: #{tpu_custom_call.1} parent=5 // pred_fallthru
        _
      %p184 = scmp.le.s32.totalorder 1, %s17
      %p185 = scmp.lt.s32.totalorder %s17, 3
      %p186 = pnand %p184, %p185
      %p187 = pneg %p186
      // Predicated region
      $region25: #{tpu_custom_call.1} parent=5 // pred_check
        _
      $region26: #{tpu_custom_call.1} parent=5 // pred_check_branch
        %189 = sbr.rel (%p186) target = $region28
      $region27: #{tpu_custom_call.1} parent=5 // pred_region
        %s190 = ssub.s32 %s17, 1
        %s191 = sand.u32 %s51, 1
        %s192 = scalar_lea.sflag [#allocation3], %s191
        %s193 = sand.u32 %s51, 1
        %s194 = smul.addr %s193, 128
        %s195 = scalar_lea.vmem [#allocation2], %s194
        // Predicated region
        $region29: #{tpu_custom_call.1} parent=27 // pred_check
          %p196 = pneg %p64
        $region30: #{tpu_custom_call.1} parent=27 // pred_check_branch
          %198 = sbr.rel (%p196) target = $region32
        $region31: #{tpu_custom_call.1} parent=27 // pred_region
          %200 = dma.done %s192, 2048
        $region32: #{tpu_custom_call.1} parent=27 // pred_fallthru
          _
        %s201 = sand.u32 %s79, 1
        %s202 = scalar_lea.sflag [#allocation6], %s201
        %s203 = sand.u32 %s79, 1
        %s204 = smul.addr %s203, 8
        %s205 = scalar_lea.vmem [#allocation5], %s204
        // Predicated region
        $region33: #{tpu_custom_call.1} parent=27 // pred_check
          %p206 = pneg %p92
        $region34: #{tpu_custom_call.1} parent=27 // pred_check_branch
          %208 = sbr.rel (%p206) target = $region36
        $region35: #{tpu_custom_call.1} parent=27 // pred_region
          %210 = dma.done %s202, 128
        $region36: #{tpu_custom_call.1} parent=27 // pred_fallthru
          _
        %s211 = sand.u32 %s51, 1
        %s212 = scalar_lea.sflag [#allocation3], %s211
        %s213 = sand.u32 %s51, 1
        %s214 = smul.addr %s213, 128
        %s215 = scalar_lea.vmem [#allocation2], %s214
        %p216 = pneg %p64
        %p217 = pneg %p61
        %s218 = sand.u32 %s79, 1
        %s219 = scalar_lea.sflag [#allocation6], %s218
        %s220 = sand.u32 %s79, 1
        %s221 = smul.addr %s220, 8
        %s222 = scalar_lea.vmem [#allocation5], %s221
        %p223 = pneg %p92
        %p224 = pneg %p89
        %p225 = pneg %p122
        %p226 = pneg %p119
        %s227 = sand.u32 %s109, 1
        %s228 = scalar_lea.sflag [#allocation4], %s227
        %s229 = sand.u32 %s109, 1
        %s230 = smul.addr %s229, 32
        %s231 = scalar_lea.vmem [#allocation7], %s230
        %v232 = vld [vmem:[%s205] sm:$0xff]
        %v233 = vld [vmem:[%s195] sm:$0x1]
        %235 = vset.pattern.permute.xlu0 0
        %236 = vperm.xlu0 %235, %v232
        %v237 = vpop.permute.xlu0 %236
        %v239 = vperm.slane %v233, 0
        %v240 = vsub.f32 %v237, %v239
        %v241 = vand.u32 2147483647, %v240
        %v242 = vld [vmem:[%s195 + $0x1] sm:$0x1]
        %243 = vset.pattern.permute.xlu0 1
        %244 = vperm.xlu0 %243, %v232
        %v245 = vpop.permute.xlu0 %244
        %v247 = vperm.slane %v242, 0
        %v248 = vsub.f32 %v245, %v247
        %v249 = vand.u32 2147483647, %v248
        %v250 = vadd.f32 %v241, %v249
        %v251 = vadd.f32 %v250, 0.0
        %v252 = vld [vmem:[%s195 + $0x2] sm:$0x1]
        %253 = vset.pattern.permute.xlu0 2
        %254 = vperm.xlu0 %253, %v232
        %v255 = vpop.permute.xlu0 %254
        %v257 = vperm.slane %v252, 0
        %v258 = vsub.f32 %v255, %v257
        %v259 = vand.u32 2147483647, %v258
        %v260 = vld [vmem:[%s195 + $0x3] sm:$0x1]
        %261 = vset.pattern.permute.xlu0 3
        %262 = vperm.xlu0 %261, %v232
        %v263 = vpop.permute.xlu0 %262
        %v265 = vperm.slane %v260, 0
        %v266 = vsub.f32 %v263, %v265
        %v267 = vand.u32 2147483647, %v266
        %v268 = vadd.f32 %v259, %v267
        %v269 = vadd.f32 %v251, %v268
        %v270 = vld [vmem:[%s195 + $0x4] sm:$0x1]
        %271 = vset.pattern.permute.xlu0 4
        %272 = vperm.xlu0 %271, %v232
        %v273 = vpop.permute.xlu0 %272
        %v275 = vperm.slane %v270, 0
        %v276 = vsub.f32 %v273, %v275
        %v277 = vand.u32 2147483647, %v276
        %v278 = vld [vmem:[%s195 + $0x5] sm:$0x1]
        %279 = vset.pattern.permute.xlu0 5
        %280 = vperm.xlu0 %279, %v232
        %v281 = vpop.permute.xlu0 %280
        %v283 = vperm.slane %v278, 0
        %v284 = vsub.f32 %v281, %v283
        %v285 = vand.u32 2147483647, %v284
        %v286 = vadd.f32 %v277, %v285
        %v287 = vadd.f32 %v269, %v286
        %v288 = vld [vmem:[%s195 + $0x6] sm:$0x1]
        %289 = vset.pattern.permute.xlu0 6
        %290 = vperm.xlu0 %289, %v232
        %v291 = vpop.permute.xlu0 %290
        %v293 = vperm.slane %v288, 0
        %v294 = vsub.f32 %v291, %v293
        %v295 = vand.u32 2147483647, %v294
        %v296 = vld [vmem:[%s195 + $0x7] sm:$0x1]
        %297 = vset.pattern.permute.xlu0 7
        %298 = vperm.xlu0 %297, %v232
        %v299 = vpop.permute.xlu0 %298
        %v301 = vperm.slane %v296, 0
        %v302 = vsub.f32 %v299, %v301
        %v303 = vand.u32 2147483647, %v302
        %v304 = vadd.f32 %v295, %v303
        %v305 = vadd.f32 %v287, %v304
        %v306 = vld [vmem:[%s195 + $0x8] sm:$0x1]
        %307 = vset.pattern.permute.xlu0 8
        %308 = vperm.xlu0 %307, %v232
        %v309 = vpop.permute.xlu0 %308
        %v311 = vperm.slane %v306, 0
        %v312 = vsub.f32 %v309, %v311
        %v313 = vand.u32 2147483647, %v312
        %v314 = vld [vmem:[%s195 + $0x9] sm:$0x1]
        %315 = vset.pattern.permute.xlu0 9
        %316 = vperm.xlu0 %315, %v232
        %v317 = vpop.permute.xlu0 %316
        %v319 = vperm.slane %v314, 0
        %v320 = vsub.f32 %v317, %v319
        %v321 = vand.u32 2147483647, %v320
        %v322 = vadd.f32 %v313, %v321
        %v323 = vadd.f32 %v305, %v322
        %v324 = vld [vmem:[%s195 + $0xa] sm:$0x1]
        %325 = vset.pattern.permute.xlu0 10
        %326 = vperm.xlu0 %325, %v232
        %v327 = vpop.permute.xlu0 %326
        %v329 = vperm.slane %v324, 0
        %v330 = vsub.f32 %v327, %v329
        %v331 = vand.u32 2147483647, %v330
        %v332 = vld [vmem:[%s195 + $0xb] sm:$0x1]
        %333 = vset.pattern.permute.xlu0 11
        %334 = vperm.xlu0 %333, %v232
        %v335 = vpop.permute.xlu0 %334
        %v337 = vperm.slane %v332, 0
        %v338 = vsub.f32 %v335, %v337
        %v339 = vand.u32 2147483647, %v338
        %v340 = vadd.f32 %v331, %v339
        %v341 = vadd.f32 %v323, %v340
        %v342 = vld [vmem:[%s195 + $0xc] sm:$0x1]
        %343 = vset.pattern.permute.xlu0 12
        %344 = vperm.xlu0 %343, %v232
        %v345 = vpop.permute.xlu0 %344
        %v347 = vperm.slane %v342, 0
        %v348 = vsub.f32 %v345, %v347
        %v349 = vand.u32 2147483647, %v348
        %v350 = vld [vmem:[%s195 + $0xd] sm:$0x1]
        %351 = vset.pattern.permute.xlu0 13
        %352 = vperm.xlu0 %351, %v232
        %v353 = vpop.permute.xlu0 %352
        %v355 = vperm.slane %v350, 0
        %v356 = vsub.f32 %v353, %v355
        %v357 = vand.u32 2147483647, %v356
        %v358 = vadd.f32 %v349, %v357
        %v359 = vadd.f32 %v341, %v358
        %v360 = vld [vmem:[%s195 + $0xe] sm:$0x1]
        %361 = vset.pattern.permute.xlu0 14
        %362 = vperm.xlu0 %361, %v232
        %v363 = vpop.permute.xlu0 %362
        %v365 = vperm.slane %v360, 0
        %v366 = vsub.f32 %v363, %v365
        %v367 = vand.u32 2147483647, %v366
        %v368 = vld [vmem:[%s195 + $0xf] sm:$0x1]
        %369 = vset.pattern.permute.xlu0 15
        %370 = vperm.xlu0 %369, %v232
        %v371 = vpop.permute.xlu0 %370
        %v373 = vperm.slane %v368, 0
        %v374 = vsub.f32 %v371, %v373
        %v375 = vand.u32 2147483647, %v374
        %v376 = vadd.f32 %v367, %v375
        %v377 = vadd.f32 %v359, %v376
        %v378 = vld [vmem:[%s195 + $0x10] sm:$0x1]
        %379 = vset.pattern.permute.xlu0 16
        %380 = vperm.xlu0 %379, %v232
        %v381 = vpop.permute.xlu0 %380
        %v383 = vperm.slane %v378, 0
        %v384 = vsub.f32 %v381, %v383
        %v385 = vand.u32 2147483647, %v384
        %v386 = vld [vmem:[%s195 + $0x11] sm:$0x1]
        %387 = vset.pattern.permute.xlu0 17
        %388 = vperm.xlu0 %387, %v232
        %v389 = vpop.permute.xlu0 %388
        %v391 = vperm.slane %v386, 0
        %v392 = vsub.f32 %v389, %v391
        %v393 = vand.u32 2147483647, %v392
        %v394 = vadd.f32 %v385, %v393
        %v395 = vadd.f32 %v377, %v394
        %v396 = vld [vmem:[%s195 + $0x12] sm:$0x1]
        %397 = vset.pattern.permute.xlu0 18
        %398 = vperm.xlu0 %397, %v232
        %v399 = vpop.permute.xlu0 %398
        %v401 = vperm.slane %v396, 0
        %v402 = vsub.f32 %v399, %v401
        %v403 = vand.u32 2147483647, %v402
        %v404 = vld [vmem:[%s195 + $0x13] sm:$0x1]
        %405 = vset.pattern.permute.xlu0 19
        %406 = vperm.xlu0 %405, %v232
        %v407 = vpop.permute.xlu0 %406
        %v409 = vperm.slane %v404, 0
        %v410 = vsub.f32 %v407, %v409
        %v411 = vand.u32 2147483647, %v410
        %v412 = vadd.f32 %v403, %v411
        %v413 = vadd.f32 %v395, %v412
        %v414 = vld [vmem:[%s195 + $0x14] sm:$0x1]
        %415 = vset.pattern.permute.xlu0 20
        %416 = vperm.xlu0 %415, %v232
        %v417 = vpop.permute.xlu0 %416
        %v419 = vperm.slane %v414, 0
        %v420 = vsub.f32 %v417, %v419
        %v421 = vand.u32 2147483647, %v420
        %v422 = vld [vmem:[%s195 + $0x15] sm:$0x1]
        %423 = vset.pattern.permute.xlu0 21
        %424 = vperm.xlu0 %423, %v232
        %v425 = vpop.permute.xlu0 %424
        %v427 = vperm.slane %v422, 0
        %v428 = vsub.f32 %v425, %v427
        %v429 = vand.u32 2147483647, %v428
        %v430 = vadd.f32 %v421, %v429
        %v431 = vadd.f32 %v413, %v430
        %v432 = vld [vmem:[%s195 + $0x16] sm:$0x1]
        %433 = vset.pattern.permute.xlu0 22
        %434 = vperm.xlu0 %433, %v232
        %v435 = vpop.permute.xlu0 %434
        %v437 = vperm.slane %v432, 0
        %v438 = vsub.f32 %v435, %v437
        %v439 = vand.u32 2147483647, %v438
        %v440 = vld [vmem:[%s195 + $0x17] sm:$0x1]
        %441 = vset.pattern.permute.xlu0 23
        %442 = vperm.xlu0 %441, %v232
        %v443 = vpop.permute.xlu0 %442
        %v445 = vperm.slane %v440, 0
        %v446 = vsub.f32 %v443, %v445
        %v447 = vand.u32 2147483647, %v446
        %v448 = vadd.f32 %v439, %v447
        %v449 = vadd.f32 %v431, %v448
        %v450 = vld [vmem:[%s195 + $0x18] sm:$0x1]
        %451 = vset.pattern.permute.xlu0 24
        %452 = vperm.xlu0 %451, %v232
        %v453 = vpop.permute.xlu0 %452
        %v455 = vperm.slane %v450, 0
        %v456 = vsub.f32 %v453, %v455
        %v457 = vand.u32 2147483647, %v456
        %v458 = vld [vmem:[%s195 + $0x19] sm:$0x1]
        %459 = vset.pattern.permute.xlu0 25
        %460 = vperm.xlu0 %459, %v232
        %v461 = vpop.permute.xlu0 %460
        %v463 = vperm.slane %v458, 0
        %v464 = vsub.f32 %v461, %v463
        %v465 = vand.u32 2147483647, %v464
        %v466 = vadd.f32 %v457, %v465
        %v467 = vadd.f32 %v449, %v466
        %v468 = vld [vmem:[%s195 + $0x1a] sm:$0x1]
        %469 = vset.pattern.permute.xlu0 26
        %470 = vperm.xlu0 %469, %v232
        %v471 = vpop.permute.xlu0 %470
        %v473 = vperm.slane %v468, 0
        %v474 = vsub.f32 %v471, %v473
        %v475 = vand.u32 2147483647, %v474
        %v476 = vld [vmem:[%s195 + $0x1b] sm:$0x1]
        %477 = vset.pattern.permute.xlu0 27
        %478 = vperm.xlu0 %477, %v232
        %v479 = vpop.permute.xlu0 %478
        %v481 = vperm.slane %v476, 0
        %v482 = vsub.f32 %v479, %v481
        %v483 = vand.u32 2147483647, %v482
        %v484 = vadd.f32 %v475, %v483
        %v485 = vadd.f32 %v467, %v484
        %v486 = vld [vmem:[%s195 + $0x1c] sm:$0x1]
        %487 = vset.pattern.permute.xlu0 28
        %488 = vperm.xlu0 %487, %v232
        %v489 = vpop.permute.xlu0 %488
        %v491 = vperm.slane %v486, 0
        %v492 = vsub.f32 %v489, %v491
        %v493 = vand.u32 2147483647, %v492
        %v494 = vld [vmem:[%s195 + $0x1d] sm:$0x1]
        %495 = vset.pattern.permute.xlu0 29
        %496 = vperm.xlu0 %495, %v232
        %v497 = vpop.permute.xlu0 %496
        %v499 = vperm.slane %v494, 0
        %v500 = vsub.f32 %v497, %v499
        %v501 = vand.u32 2147483647, %v500
        %v502 = vadd.f32 %v493, %v501
        %v503 = vadd.f32 %v485, %v502
        %v504 = vld [vmem:[%s195 + $0x1e] sm:$0x1]
        %505 = vset.pattern.permute.xlu0 30
        %506 = vperm.xlu0 %505, %v232
        %v507 = vpop.permute.xlu0 %506
        %v509 = vperm.slane %v504, 0
        %v510 = vsub.f32 %v507, %v509
        %v511 = vand.u32 2147483647, %v510
        %v512 = vld [vmem:[%s195 + $0x1f] sm:$0x1]
        %513 = vset.pattern.permute.xlu0 31
        %514 = vperm.xlu0 %513, %v232
        %v515 = vpop.permute.xlu0 %514
        %v517 = vperm.slane %v512, 0
        %v518 = vsub.f32 %v515, %v517
        %v519 = vand.u32 2147483647, %v518
        %v520 = vadd.f32 %v511, %v519
        %v521 = vadd.f32 %v503, %v520
        %v522 = vmul.f32 %v521, -0.17677669
        %523 = vst [vmem:[%s231] sm:$0xff] %v522
        %v524 = vld [vmem:[%s205] sm:$0xff]
        %v525 = vld [vmem:[%s195 + $0x20] sm:$0x1]
        %527 = vset.pattern.permute.xlu0 32
        %528 = vperm.xlu0 %527, %v524
        %v529 = vpop.permute.xlu0 %528
        %v531 = vperm.slane %v525, 0
        %v532 = vsub.f32 %v529, %v531
        %v533 = vand.u32 2147483647, %v532
        %v534 = vld [vmem:[%s195 + $0x21] sm:$0x1]
        %535 = vset.pattern.permute.xlu0 33
        %536 = vperm.xlu0 %535, %v524
        %v537 = vpop.permute.xlu0 %536
        %v539 = vperm.slane %v534, 0
        %v540 = vsub.f32 %v537, %v539
        %v541 = vand.u32 2147483647, %v540
        %v542 = vadd.f32 %v533, %v541
        %v543 = vadd.f32 %v542, 0.0
        %v544 = vld [vmem:[%s195 + $0x22] sm:$0x1]
        %545 = vset.pattern.permute.xlu0 34
        %546 = vperm.xlu0 %545, %v524
        %v547 = vpop.permute.xlu0 %546
        %v549 = vperm.slane %v544, 0
        %v550 = vsub.f32 %v547, %v549
        %v551 = vand.u32 2147483647, %v550
        %v552 = vld [vmem:[%s195 + $0x23] sm:$0x1]
        %553 = vset.pattern.permute.xlu0 35
        %554 = vperm.xlu0 %553, %v524
        %v555 = vpop.permute.xlu0 %554
        %v557 = vperm.slane %v552, 0
        %v558 = vsub.f32 %v555, %v557
        %v559 = vand.u32 2147483647, %v558
        %v560 = vadd.f32 %v551, %v559
        %v561 = vadd.f32 %v543, %v560
        %v562 = vld [vmem:[%s195 + $0x24] sm:$0x1]
        %563 = vset.pattern.permute.xlu0 36
        %564 = vperm.xlu0 %563, %v524
        %v565 = vpop.permute.xlu0 %564
        %v567 = vperm.slane %v562, 0
        %v568 = vsub.f32 %v565, %v567
        %v569 = vand.u32 2147483647, %v568
        %v570 = vld [vmem:[%s195 + $0x25] sm:$0x1]
        %571 = vset.pattern.permute.xlu0 37
        %572 = vperm.xlu0 %571, %v524
        %v573 = vpop.permute.xlu0 %572
        %v575 = vperm.slane %v570, 0
        %v576 = vsub.f32 %v573, %v575
        %v577 = vand.u32 2147483647, %v576
        %v578 = vadd.f32 %v569, %v577
        %v579 = vadd.f32 %v561, %v578
        %v580 = vld [vmem:[%s195 + $0x26] sm:$0x1]
        %581 = vset.pattern.permute.xlu0 38
        %582 = vperm.xlu0 %581, %v524
        %v583 = vpop.permute.xlu0 %582
        %v585 = vperm.slane %v580, 0
        %v586 = vsub.f32 %v583, %v585
        %v587 = vand.u32 2147483647, %v586
        %v588 = vld [vmem:[%s195 + $0x27] sm:$0x1]
        %589 = vset.pattern.permute.xlu0 39
        %590 = vperm.xlu0 %589, %v524
        %v591 = vpop.permute.xlu0 %590
        %v593 = vperm.slane %v588, 0
        %v594 = vsub.f32 %v591, %v593
        %v595 = vand.u32 2147483647, %v594
        %v596 = vadd.f32 %v587, %v595
        %v597 = vadd.f32 %v579, %v596
        %v598 = vld [vmem:[%s195 + $0x28] sm:$0x1]
        %599 = vset.pattern.permute.xlu0 40
        %600 = vperm.xlu0 %599, %v524
        %v601 = vpop.permute.xlu0 %600
        %v603 = vperm.slane %v598, 0
        %v604 = vsub.f32 %v601, %v603
        %v605 = vand.u32 2147483647, %v604
        %v606 = vld [vmem:[%s195 + $0x29] sm:$0x1]
        %607 = vset.pattern.permute.xlu0 41
        %608 = vperm.xlu0 %607, %v524
        %v609 = vpop.permute.xlu0 %608
        %v611 = vperm.slane %v606, 0
        %v612 = vsub.f32 %v609, %v611
        %v613 = vand.u32 2147483647, %v612
        %v614 = vadd.f32 %v605, %v613
        %v615 = vadd.f32 %v597, %v614
        %v616 = vld [vmem:[%s195 + $0x2a] sm:$0x1]
        %617 = vset.pattern.permute.xlu0 42
        %618 = vperm.xlu0 %617, %v524
        %v619 = vpop.permute.xlu0 %618
        %v621 = vperm.slane %v616, 0
        %v622 = vsub.f32 %v619, %v621
        %v623 = vand.u32 2147483647, %v622
        %v624 = vld [vmem:[%s195 + $0x2b] sm:$0x1]
        %625 = vset.pattern.permute.xlu0 43
        %626 = vperm.xlu0 %625, %v524
        %v627 = vpop.permute.xlu0 %626
        %v629 = vperm.slane %v624, 0
        %v630 = vsub.f32 %v627, %v629
        %v631 = vand.u32 2147483647, %v630
        %v632 = vadd.f32 %v623, %v631
        %v633 = vadd.f32 %v615, %v632
        %v634 = vld [vmem:[%s195 + $0x2c] sm:$0x1]
        %635 = vset.pattern.permute.xlu0 44
        %636 = vperm.xlu0 %635, %v524
        %v637 = vpop.permute.xlu0 %636
        %v639 = vperm.slane %v634, 0
        %v640 = vsub.f32 %v637, %v639
        %v641 = vand.u32 2147483647, %v640
        %v642 = vld [vmem:[%s195 + $0x2d] sm:$0x1]
        %643 = vset.pattern.permute.xlu0 45
        %644 = vperm.xlu0 %643, %v524
        %v645 = vpop.permute.xlu0 %644
        %v647 = vperm.slane %v642, 0
        %v648 = vsub.f32 %v645, %v647
        %v649 = vand.u32 2147483647, %v648
        %v650 = vadd.f32 %v641, %v649
        %v651 = vadd.f32 %v633, %v650
        %v652 = vld [vmem:[%s195 + $0x2e] sm:$0x1]
        %653 = vset.pattern.permute.xlu0 46
        %654 = vperm.xlu0 %653, %v524
        %v655 = vpop.permute.xlu0 %654
        %v657 = vperm.slane %v652, 0
        %v658 = vsub.f32 %v655, %v657
        %v659 = vand.u32 2147483647, %v658
        %v660 = vld [vmem:[%s195 + $0x2f] sm:$0x1]
        %661 = vset.pattern.permute.xlu0 47
        %662 = vperm.xlu0 %661, %v524
        %v663 = vpop.permute.xlu0 %662
        %v665 = vperm.slane %v660, 0
        %v666 = vsub.f32 %v663, %v665
        %v667 = vand.u32 2147483647, %v666
        %v668 = vadd.f32 %v659, %v667
        %v669 = vadd.f32 %v651, %v668
        %v670 = vld [vmem:[%s195 + $0x30] sm:$0x1]
        %671 = vset.pattern.permute.xlu0 48
        %672 = vperm.xlu0 %671, %v524
        %v673 = vpop.permute.xlu0 %672
        %v675 = vperm.slane %v670, 0
        %v676 = vsub.f32 %v673, %v675
        %v677 = vand.u32 2147483647, %v676
        %v678 = vld [vmem:[%s195 + $0x31] sm:$0x1]
        %679 = vset.pattern.permute.xlu0 49
        %680 = vperm.xlu0 %679, %v524
        %v681 = vpop.permute.xlu0 %680
        %v683 = vperm.slane %v678, 0
        %v684 = vsub.f32 %v681, %v683
        %v685 = vand.u32 2147483647, %v684
        %v686 = vadd.f32 %v677, %v685
        %v687 = vadd.f32 %v669, %v686
        %v688 = vld [vmem:[%s195 + $0x32] sm:$0x1]
        %689 = vset.pattern.permute.xlu0 50
        %690 = vperm.xlu0 %689, %v524
        %v691 = vpop.permute.xlu0 %690
        %v693 = vperm.slane %v688, 0
        %v694 = vsub.f32 %v691, %v693
        %v695 = vand.u32 2147483647, %v694
        %v696 = vld [vmem:[%s195 + $0x33] sm:$0x1]
        %697 = vset.pattern.permute.xlu0 51
        %698 = vperm.xlu0 %697, %v524
        %v699 = vpop.permute.xlu0 %698
        %v701 = vperm.slane %v696, 0
        %v702 = vsub.f32 %v699, %v701
        %v703 = vand.u32 2147483647, %v702
        %v704 = vadd.f32 %v695, %v703
        %v705 = vadd.f32 %v687, %v704
        %v706 = vld [vmem:[%s195 + $0x34] sm:$0x1]
        %707 = vset.pattern.permute.xlu0 52
        %708 = vperm.xlu0 %707, %v524
        %v709 = vpop.permute.xlu0 %708
        %v711 = vperm.slane %v706, 0
        %v712 = vsub.f32 %v709, %v711
        %v713 = vand.u32 2147483647, %v712
        %v714 = vld [vmem:[%s195 + $0x35] sm:$0x1]
        %715 = vset.pattern.permute.xlu0 53
        %716 = vperm.xlu0 %715, %v524
        %v717 = vpop.permute.xlu0 %716
        %v719 = vperm.slane %v714, 0
        %v720 = vsub.f32 %v717, %v719
        %v721 = vand.u32 2147483647, %v720
        %v722 = vadd.f32 %v713, %v721
        %v723 = vadd.f32 %v705, %v722
        %v724 = vld [vmem:[%s195 + $0x36] sm:$0x1]
        %725 = vset.pattern.permute.xlu0 54
        %726 = vperm.xlu0 %725, %v524
        %v727 = vpop.permute.xlu0 %726
        %v729 = vperm.slane %v724, 0
        %v730 = vsub.f32 %v727, %v729
        %v731 = vand.u32 2147483647, %v730
        %v732 = vld [vmem:[%s195 + $0x37] sm:$0x1]
        %733 = vset.pattern.permute.xlu0 55
        %734 = vperm.xlu0 %733, %v524
        %v735 = vpop.permute.xlu0 %734
        %v737 = vperm.slane %v732, 0
        %v738 = vsub.f32 %v735, %v737
        %v739 = vand.u32 2147483647, %v738
        %v740 = vadd.f32 %v731, %v739
        %v741 = vadd.f32 %v723, %v740
        %v742 = vld [vmem:[%s195 + $0x38] sm:$0x1]
        %743 = vset.pattern.permute.xlu0 56
        %744 = vperm.xlu0 %743, %v524
        %v745 = vpop.permute.xlu0 %744
        %v747 = vperm.slane %v742, 0
        %v748 = vsub.f32 %v745, %v747
        %v749 = vand.u32 2147483647, %v748
        %v750 = vld [vmem:[%s195 + $0x39] sm:$0x1]
        %751 = vset.pattern.permute.xlu0 57
        %752 = vperm.xlu0 %751, %v524
        %v753 = vpop.permute.xlu0 %752
        %v755 = vperm.slane %v750, 0
        %v756 = vsub.f32 %v753, %v755
        %v757 = vand.u32 2147483647, %v756
        %v758 = vadd.f32 %v749, %v757
        %v759 = vadd.f32 %v741, %v758
        %v760 = vld [vmem:[%s195 + $0x3a] sm:$0x1]
        %761 = vset.pattern.permute.xlu0 58
        %762 = vperm.xlu0 %761, %v524
        %v763 = vpop.permute.xlu0 %762
        %v765 = vperm.slane %v760, 0
        %v766 = vsub.f32 %v763, %v765
        %v767 = vand.u32 2147483647, %v766
        %v768 = vld [vmem:[%s195 + $0x3b] sm:$0x1]
        %769 = vset.pattern.permute.xlu0 59
        %770 = vperm.xlu0 %769, %v524
        %v771 = vpop.permute.xlu0 %770
        %v773 = vperm.slane %v768, 0
        %v774 = vsub.f32 %v771, %v773
        %v775 = vand.u32 2147483647, %v774
        %v776 = vadd.f32 %v767, %v775
        %v777 = vadd.f32 %v759, %v776
        %v778 = vld [vmem:[%s195 + $0x3c] sm:$0x1]
        %779 = vset.pattern.permute.xlu0 60
        %780 = vperm.xlu0 %779, %v524
        %v781 = vpop.permute.xlu0 %780
        %v783 = vperm.slane %v778, 0
        %v784 = vsub.f32 %v781, %v783
        %v785 = vand.u32 2147483647, %v784
        %v786 = vld [vmem:[%s195 + $0x3d] sm:$0x1]
        %787 = vset.pattern.permute.xlu0 61
        %788 = vperm.xlu0 %787, %v524
        %v789 = vpop.permute.xlu0 %788
        %v791 = vperm.slane %v786, 0
        %v792 = vsub.f32 %v789, %v791
        %v793 = vand.u32 2147483647, %v792
        %v794 = vadd.f32 %v785, %v793
        %v795 = vadd.f32 %v777, %v794
        %v796 = vld [vmem:[%s195 + $0x3e] sm:$0x1]
        %797 = vset.pattern.permute.xlu0 62
        %798 = vperm.xlu0 %797, %v524
        %v799 = vpop.permute.xlu0 %798
        %v801 = vperm.slane %v796, 0
        %v802 = vsub.f32 %v799, %v801
        %v803 = vand.u32 2147483647, %v802
        %v804 = vld [vmem:[%s195 + $0x3f] sm:$0x1]
        %805 = vset.pattern.permute.xlu0 63
        %806 = vperm.xlu0 %805, %v524
        %v807 = vpop.permute.xlu0 %806
        %v809 = vperm.slane %v804, 0
        %v810 = vsub.f32 %v807, %v809
        %v811 = vand.u32 2147483647, %v810
        %v812 = vadd.f32 %v803, %v811
        %v813 = vadd.f32 %v795, %v812
        %v814 = vmul.f32 %v813, -0.17677669
        %s815 = scalar_lea.vmem %s231, 8 [#allocation7]
        %816 = vst [vmem:[%s815] sm:$0xff] %v814
        %v817 = vld [vmem:[%s205] sm:$0xff]
        %v818 = vld [vmem:[%s195 + $0x40] sm:$0x1]
        %820 = vset.pattern.permute.xlu0 64
        %821 = vperm.xlu0 %820, %v817
        %v822 = vpop.permute.xlu0 %821
        %v824 = vperm.slane %v818, 0
        %v825 = vsub.f32 %v822, %v824
        %v826 = vand.u32 2147483647, %v825
        %v827 = vld [vmem:[%s195 + $0x41] sm:$0x1]
        %828 = vset.pattern.permute.xlu0 65
        %829 = vperm.xlu0 %828, %v817
        %v830 = vpop.permute.xlu0 %829
        %v832 = vperm.slane %v827, 0
        %v833 = vsub.f32 %v830, %v832
        %v834 = vand.u32 2147483647, %v833
        %v835 = vadd.f32 %v826, %v834
        %v836 = vadd.f32 %v835, 0.0
        %v837 = vld [vmem:[%s195 + $0x42] sm:$0x1]
        %838 = vset.pattern.permute.xlu0 66
        %839 = vperm.xlu0 %838, %v817
        %v840 = vpop.permute.xlu0 %839
        %v842 = vperm.slane %v837, 0
        %v843 = vsub.f32 %v840, %v842
        %v844 = vand.u32 2147483647, %v843
        %v845 = vld [vmem:[%s195 + $0x43] sm:$0x1]
        %846 = vset.pattern.permute.xlu0 67
        %847 = vperm.xlu0 %846, %v817
        %v848 = vpop.permute.xlu0 %847
        %v850 = vperm.slane %v845, 0
        %v851 = vsub.f32 %v848, %v850
        %v852 = vand.u32 2147483647, %v851
        %v853 = vadd.f32 %v844, %v852
        %v854 = vadd.f32 %v836, %v853
        %v855 = vld [vmem:[%s195 + $0x44] sm:$0x1]
        %856 = vset.pattern.permute.xlu0 68
        %857 = vperm.xlu0 %856, %v817
        %v858 = vpop.permute.xlu0 %857
        %v860 = vperm.slane %v855, 0
        %v861 = vsub.f32 %v858, %v860
        %v862 = vand.u32 2147483647, %v861
        %v863 = vld [vmem:[%s195 + $0x45] sm:$0x1]
        %864 = vset.pattern.permute.xlu0 69
        %865 = vperm.xlu0 %864, %v817
        %v866 = vpop.permute.xlu0 %865
        %v868 = vperm.slane %v863, 0
        %v869 = vsub.f32 %v866, %v868
        %v870 = vand.u32 2147483647, %v869
        %v871 = vadd.f32 %v862, %v870
        %v872 = vadd.f32 %v854, %v871
        %v873 = vld [vmem:[%s195 + $0x46] sm:$0x1]
        %874 = vset.pattern.permute.xlu0 70
        %875 = vperm.xlu0 %874, %v817
        %v876 = vpop.permute.xlu0 %875
        %v878 = vperm.slane %v873, 0
        %v879 = vsub.f32 %v876, %v878
        %v880 = vand.u32 2147483647, %v879
        %v881 = vld [vmem:[%s195 + $0x47] sm:$0x1]
        %882 = vset.pattern.permute.xlu0 71
        %883 = vperm.xlu0 %882, %v817
        %v884 = vpop.permute.xlu0 %883
        %v886 = vperm.slane %v881, 0
        %v887 = vsub.f32 %v884, %v886
        %v888 = vand.u32 2147483647, %v887
        %v889 = vadd.f32 %v880, %v888
        %v890 = vadd.f32 %v872, %v889
        %v891 = vld [vmem:[%s195 + $0x48] sm:$0x1]
        %892 = vset.pattern.permute.xlu0 72
        %893 = vperm.xlu0 %892, %v817
        %v894 = vpop.permute.xlu0 %893
        %v896 = vperm.slane %v891, 0
        %v897 = vsub.f32 %v894, %v896
        %v898 = vand.u32 2147483647, %v897
        %v899 = vld [vmem:[%s195 + $0x49] sm:$0x1]
        %900 = vset.pattern.permute.xlu0 73
        %901 = vperm.xlu0 %900, %v817
        %v902 = vpop.permute.xlu0 %901
        %v904 = vperm.slane %v899, 0
        %v905 = vsub.f32 %v902, %v904
        %v906 = vand.u32 2147483647, %v905
        %v907 = vadd.f32 %v898, %v906
        %v908 = vadd.f32 %v890, %v907
        %v909 = vld [vmem:[%s195 + $0x4a] sm:$0x1]
        %910 = vset.pattern.permute.xlu0 74
        %911 = vperm.xlu0 %910, %v817
        %v912 = vpop.permute.xlu0 %911
        %v914 = vperm.slane %v909, 0
        %v915 = vsub.f32 %v912, %v914
        %v916 = vand.u32 2147483647, %v915
        %v917 = vld [vmem:[%s195 + $0x4b] sm:$0x1]
        %918 = vset.pattern.permute.xlu0 75
        %919 = vperm.xlu0 %918, %v817
        %v920 = vpop.permute.xlu0 %919
        %v922 = vperm.slane %v917, 0
        %v923 = vsub.f32 %v920, %v922
        %v924 = vand.u32 2147483647, %v923
        %v925 = vadd.f32 %v916, %v924
        %v926 = vadd.f32 %v908, %v925
        %v927 = vld [vmem:[%s195 + $0x4c] sm:$0x1]
        %928 = vset.pattern.permute.xlu0 76
        %929 = vperm.xlu0 %928, %v817
        %v930 = vpop.permute.xlu0 %929
        %v932 = vperm.slane %v927, 0
        %v933 = vsub.f32 %v930, %v932
        %v934 = vand.u32 2147483647, %v933
        %v935 = vld [vmem:[%s195 + $0x4d] sm:$0x1]
        %936 = vset.pattern.permute.xlu0 77
        %937 = vperm.xlu0 %936, %v817
        %v938 = vpop.permute.xlu0 %937
        %v940 = vperm.slane %v935, 0
        %v941 = vsub.f32 %v938, %v940
        %v942 = vand.u32 2147483647, %v941
        %v943 = vadd.f32 %v934, %v942
        %v944 = vadd.f32 %v926, %v943
        %v945 = vld [vmem:[%s195 + $0x4e] sm:$0x1]
        %946 = vset.pattern.permute.xlu0 78
        %947 = vperm.xlu0 %946, %v817
        %v948 = vpop.permute.xlu0 %947
        %v950 = vperm.slane %v945, 0
        %v951 = vsub.f32 %v948, %v950
        %v952 = vand.u32 2147483647, %v951
        %v953 = vld [vmem:[%s195 + $0x4f] sm:$0x1]
        %954 = vset.pattern.permute.xlu0 79
        %955 = vperm.xlu0 %954, %v817
        %v956 = vpop.permute.xlu0 %955
        %v958 = vperm.slane %v953, 0
        %v959 = vsub.f32 %v956, %v958
        %v960 = vand.u32 2147483647, %v959
        %v961 = vadd.f32 %v952, %v960
        %v962 = vadd.f32 %v944, %v961
        %v963 = vld [vmem:[%s195 + $0x50] sm:$0x1]
        %964 = vset.pattern.permute.xlu0 80
        %965 = vperm.xlu0 %964, %v817
        %v966 = vpop.permute.xlu0 %965
        %v968 = vperm.slane %v963, 0
        %v969 = vsub.f32 %v966, %v968
        %v970 = vand.u32 2147483647, %v969
        %v971 = vld [vmem:[%s195 + $0x51] sm:$0x1]
        %972 = vset.pattern.permute.xlu0 81
        %973 = vperm.xlu0 %972, %v817
        %v974 = vpop.permute.xlu0 %973
        %v976 = vperm.slane %v971, 0
        %v977 = vsub.f32 %v974, %v976
        %v978 = vand.u32 2147483647, %v977
        %v979 = vadd.f32 %v970, %v978
        %v980 = vadd.f32 %v962, %v979
        %v981 = vld [vmem:[%s195 + $0x52] sm:$0x1]
        %982 = vset.pattern.permute.xlu0 82
        %983 = vperm.xlu0 %982, %v817
        %v984 = vpop.permute.xlu0 %983
        %v986 = vperm.slane %v981, 0
        %v987 = vsub.f32 %v984, %v986
        %v988 = vand.u32 2147483647, %v987
        %v989 = vld [vmem:[%s195 + $0x53] sm:$0x1]
        %990 = vset.pattern.permute.xlu0 83
        %991 = vperm.xlu0 %990, %v817
        %v992 = vpop.permute.xlu0 %991
        %v994 = vperm.slane %v989, 0
        %v995 = vsub.f32 %v992, %v994
        %v996 = vand.u32 2147483647, %v995
        %v997 = vadd.f32 %v988, %v996
        %v998 = vadd.f32 %v980, %v997
        %v999 = vld [vmem:[%s195 + $0x54] sm:$0x1]
        %1000 = vset.pattern.permute.xlu0 84
        %1001 = vperm.xlu0 %1000, %v817
        %v1002 = vpop.permute.xlu0 %1001
        %v1004 = vperm.slane %v999, 0
        %v1005 = vsub.f32 %v1002, %v1004
        %v1006 = vand.u32 2147483647, %v1005
        %v1007 = vld [vmem:[%s195 + $0x55] sm:$0x1]
        %1008 = vset.pattern.permute.xlu0 85
        %1009 = vperm.xlu0 %1008, %v817
        %v1010 = vpop.permute.xlu0 %1009
        %v1012 = vperm.slane %v1007, 0
        %v1013 = vsub.f32 %v1010, %v1012
        %v1014 = vand.u32 2147483647, %v1013
        %v1015 = vadd.f32 %v1006, %v1014
        %v1016 = vadd.f32 %v998, %v1015
        %v1017 = vld [vmem:[%s195 + $0x56] sm:$0x1]
        %1018 = vset.pattern.permute.xlu0 86
        %1019 = vperm.xlu0 %1018, %v817
        %v1020 = vpop.permute.xlu0 %1019
        %v1022 = vperm.slane %v1017, 0
        %v1023 = vsub.f32 %v1020, %v1022
        %v1024 = vand.u32 2147483647, %v1023
        %v1025 = vld [vmem:[%s195 + $0x57] sm:$0x1]
        %1026 = vset.pattern.permute.xlu0 87
        %1027 = vperm.xlu0 %1026, %v817
        %v1028 = vpop.permute.xlu0 %1027
        %v1030 = vperm.slane %v1025, 0
        %v1031 = vsub.f32 %v1028, %v1030
        %v1032 = vand.u32 2147483647, %v1031
        %v1033 = vadd.f32 %v1024, %v1032
        %v1034 = vadd.f32 %v1016, %v1033
        %v1035 = vld [vmem:[%s195 + $0x58] sm:$0x1]
        %1036 = vset.pattern.permute.xlu0 88
        %1037 = vperm.xlu0 %1036, %v817
        %v1038 = vpop.permute.xlu0 %1037
        %v1040 = vperm.slane %v1035, 0
        %v1041 = vsub.f32 %v1038, %v1040
        %v1042 = vand.u32 2147483647, %v1041
        %v1043 = vld [vmem:[%s195 + $0x59] sm:$0x1]
        %1044 = vset.pattern.permute.xlu0 89
        %1045 = vperm.xlu0 %1044, %v817
        %v1046 = vpop.permute.xlu0 %1045
        %v1048 = vperm.slane %v1043, 0
        %v1049 = vsub.f32 %v1046, %v1048
        %v1050 = vand.u32 2147483647, %v1049
        %v1051 = vadd.f32 %v1042, %v1050
        %v1052 = vadd.f32 %v1034, %v1051
        %v1053 = vld [vmem:[%s195 + $0x5a] sm:$0x1]
        %1054 = vset.pattern.permute.xlu0 90
        %1055 = vperm.xlu0 %1054, %v817
        %v1056 = vpop.permute.xlu0 %1055
        %v1058 = vperm.slane %v1053, 0
        %v1059 = vsub.f32 %v1056, %v1058
        %v1060 = vand.u32 2147483647, %v1059
        %v1061 = vld [vmem:[%s195 + $0x5b] sm:$0x1]
        %1062 = vset.pattern.permute.xlu0 91
        %1063 = vperm.xlu0 %1062, %v817
        %v1064 = vpop.permute.xlu0 %1063
        %v1066 = vperm.slane %v1061, 0
        %v1067 = vsub.f32 %v1064, %v1066
        %v1068 = vand.u32 2147483647, %v1067
        %v1069 = vadd.f32 %v1060, %v1068
        %v1070 = vadd.f32 %v1052, %v1069
        %v1071 = vld [vmem:[%s195 + $0x5c] sm:$0x1]
        %1072 = vset.pattern.permute.xlu0 92
        %1073 = vperm.xlu0 %1072, %v817
        %v1074 = vpop.permute.xlu0 %1073
        %v1076 = vperm.slane %v1071, 0
        %v1077 = vsub.f32 %v1074, %v1076
        %v1078 = vand.u32 2147483647, %v1077
        %v1079 = vld [vmem:[%s195 + $0x5d] sm:$0x1]
        %1080 = vset.pattern.permute.xlu0 93
        %1081 = vperm.xlu0 %1080, %v817
        %v1082 = vpop.permute.xlu0 %1081
        %v1084 = vperm.slane %v1079, 0
        %v1085 = vsub.f32 %v1082, %v1084
        %v1086 = vand.u32 2147483647, %v1085
        %v1087 = vadd.f32 %v1078, %v1086
        %v1088 = vadd.f32 %v1070, %v1087
        %v1089 = vld [vmem:[%s195 + $0x5e] sm:$0x1]
        %1090 = vset.pattern.permute.xlu0 94
        %1091 = vperm.xlu0 %1090, %v817
        %v1092 = vpop.permute.xlu0 %1091
        %v1094 = vperm.slane %v1089, 0
        %v1095 = vsub.f32 %v1092, %v1094
        %v1096 = vand.u32 2147483647, %v1095
        %v1097 = vld [vmem:[%s195 + $0x5f] sm:$0x1]
        %1098 = vset.pattern.permute.xlu0 95
        %1099 = vperm.xlu0 %1098, %v817
        %v1100 = vpop.permute.xlu0 %1099
        %v1102 = vperm.slane %v1097, 0
        %v1103 = vsub.f32 %v1100, %v1102
        %v1104 = vand.u32 2147483647, %v1103
        %v1105 = vadd.f32 %v1096, %v1104
        %v1106 = vadd.f32 %v1088, %v1105
        %v1107 = vmul.f32 %v1106, -0.17677669
        %s1108 = scalar_lea.vmem %s231, 16 [#allocation7]
        %1109 = vst [vmem:[%s1108] sm:$0xff] %v1107
        %v1110 = vld [vmem:[%s205] sm:$0xff]
        %v1111 = vld [vmem:[%s195 + $0x60] sm:$0x1]
        %1113 = vset.pattern.permute.xlu0 96
        %1114 = vperm.xlu0 %1113, %v1110
        %v1115 = vpop.permute.xlu0 %1114
        %v1117 = vperm.slane %v1111, 0
        %v1118 = vsub.f32 %v1115, %v1117
        %v1119 = vand.u32 2147483647, %v1118
        %v1120 = vld [vmem:[%s195 + $0x61] sm:$0x1]
        %1121 = vset.pattern.permute.xlu0 97
        %1122 = vperm.xlu0 %1121, %v1110
        %v1123 = vpop.permute.xlu0 %1122
        %v1125 = vperm.slane %v1120, 0
        %v1126 = vsub.f32 %v1123, %v1125
        %v1127 = vand.u32 2147483647, %v1126
        %v1128 = vadd.f32 %v1119, %v1127
        %v1129 = vadd.f32 %v1128, 0.0
        %v1130 = vld [vmem:[%s195 + $0x62] sm:$0x1]
        %1131 = vset.pattern.permute.xlu0 98
        %1132 = vperm.xlu0 %1131, %v1110
        %v1133 = vpop.permute.xlu0 %1132
        %v1135 = vperm.slane %v1130, 0
        %v1136 = vsub.f32 %v1133, %v1135
        %v1137 = vand.u32 2147483647, %v1136
        %v1138 = vld [vmem:[%s195 + $0x63] sm:$0x1]
        %1139 = vset.pattern.permute.xlu0 99
        %1140 = vperm.xlu0 %1139, %v1110
        %v1141 = vpop.permute.xlu0 %1140
        %v1143 = vperm.slane %v1138, 0
        %v1144 = vsub.f32 %v1141, %v1143
        %v1145 = vand.u32 2147483647, %v1144
        %v1146 = vadd.f32 %v1137, %v1145
        %v1147 = vadd.f32 %v1129, %v1146
        %v1148 = vld [vmem:[%s195 + $0x64] sm:$0x1]
        %1149 = vset.pattern.permute.xlu0 100
        %1150 = vperm.xlu0 %1149, %v1110
        %v1151 = vpop.permute.xlu0 %1150
        %v1153 = vperm.slane %v1148, 0
        %v1154 = vsub.f32 %v1151, %v1153
        %v1155 = vand.u32 2147483647, %v1154
        %v1156 = vld [vmem:[%s195 + $0x65] sm:$0x1]
        %1157 = vset.pattern.permute.xlu0 101
        %1158 = vperm.xlu0 %1157, %v1110
        %v1159 = vpop.permute.xlu0 %1158
        %v1161 = vperm.slane %v1156, 0
        %v1162 = vsub.f32 %v1159, %v1161
        %v1163 = vand.u32 2147483647, %v1162
        %v1164 = vadd.f32 %v1155, %v1163
        %v1165 = vadd.f32 %v1147, %v1164
        %v1166 = vld [vmem:[%s195 + $0x66] sm:$0x1]
        %1167 = vset.pattern.permute.xlu0 102
        %1168 = vperm.xlu0 %1167, %v1110
        %v1169 = vpop.permute.xlu0 %1168
        %v1171 = vperm.slane %v1166, 0
        %v1172 = vsub.f32 %v1169, %v1171
        %v1173 = vand.u32 2147483647, %v1172
        %v1174 = vld [vmem:[%s195 + $0x67] sm:$0x1]
        %1175 = vset.pattern.permute.xlu0 103
        %1176 = vperm.xlu0 %1175, %v1110
        %v1177 = vpop.permute.xlu0 %1176
        %v1179 = vperm.slane %v1174, 0
        %v1180 = vsub.f32 %v1177, %v1179
        %v1181 = vand.u32 2147483647, %v1180
        %v1182 = vadd.f32 %v1173, %v1181
        %v1183 = vadd.f32 %v1165, %v1182
        %v1184 = vld [vmem:[%s195 + $0x68] sm:$0x1]
        %1185 = vset.pattern.permute.xlu0 104
        %1186 = vperm.xlu0 %1185, %v1110
        %v1187 = vpop.permute.xlu0 %1186
        %v1189 = vperm.slane %v1184, 0
        %v1190 = vsub.f32 %v1187, %v1189
        %v1191 = vand.u32 2147483647, %v1190
        %v1192 = vld [vmem:[%s195 + $0x69] sm:$0x1]
        %1193 = vset.pattern.permute.xlu0 105
        %1194 = vperm.xlu0 %1193, %v1110
        %v1195 = vpop.permute.xlu0 %1194
        %v1197 = vperm.slane %v1192, 0
        %v1198 = vsub.f32 %v1195, %v1197
        %v1199 = vand.u32 2147483647, %v1198
        %v1200 = vadd.f32 %v1191, %v1199
        %v1201 = vadd.f32 %v1183, %v1200
        %v1202 = vld [vmem:[%s195 + $0x6a] sm:$0x1]
        %1203 = vset.pattern.permute.xlu0 106
        %1204 = vperm.xlu0 %1203, %v1110
        %v1205 = vpop.permute.xlu0 %1204
        %v1207 = vperm.slane %v1202, 0
        %v1208 = vsub.f32 %v1205, %v1207
        %v1209 = vand.u32 2147483647, %v1208
        %v1210 = vld [vmem:[%s195 + $0x6b] sm:$0x1]
        %1211 = vset.pattern.permute.xlu0 107
        %1212 = vperm.xlu0 %1211, %v1110
        %v1213 = vpop.permute.xlu0 %1212
        %v1215 = vperm.slane %v1210, 0
        %v1216 = vsub.f32 %v1213, %v1215
        %v1217 = vand.u32 2147483647, %v1216
        %v1218 = vadd.f32 %v1209, %v1217
        %v1219 = vadd.f32 %v1201, %v1218
        %v1220 = vld [vmem:[%s195 + $0x6c] sm:$0x1]
        %1221 = vset.pattern.permute.xlu0 108
        %1222 = vperm.xlu0 %1221, %v1110
        %v1223 = vpop.permute.xlu0 %1222
        %v1225 = vperm.slane %v1220, 0
        %v1226 = vsub.f32 %v1223, %v1225
        %v1227 = vand.u32 2147483647, %v1226
        %v1228 = vld [vmem:[%s195 + $0x6d] sm:$0x1]
        %1229 = vset.pattern.permute.xlu0 109
        %1230 = vperm.xlu0 %1229, %v1110
        %v1231 = vpop.permute.xlu0 %1230
        %v1233 = vperm.slane %v1228, 0
        %v1234 = vsub.f32 %v1231, %v1233
        %v1235 = vand.u32 2147483647, %v1234
        %v1236 = vadd.f32 %v1227, %v1235
        %v1237 = vadd.f32 %v1219, %v1236
        %v1238 = vld [vmem:[%s195 + $0x6e] sm:$0x1]
        %1239 = vset.pattern.permute.xlu0 110
        %1240 = vperm.xlu0 %1239, %v1110
        %v1241 = vpop.permute.xlu0 %1240
        %v1243 = vperm.slane %v1238, 0
        %v1244 = vsub.f32 %v1241, %v1243
        %v1245 = vand.u32 2147483647, %v1244
        %v1246 = vld [vmem:[%s195 + $0x6f] sm:$0x1]
        %1247 = vset.pattern.permute.xlu0 111
        %1248 = vperm.xlu0 %1247, %v1110
        %v1249 = vpop.permute.xlu0 %1248
        %v1251 = vperm.slane %v1246, 0
        %v1252 = vsub.f32 %v1249, %v1251
        %v1253 = vand.u32 2147483647, %v1252
        %v1254 = vadd.f32 %v1245, %v1253
        %v1255 = vadd.f32 %v1237, %v1254
        %v1256 = vld [vmem:[%s195 + $0x70] sm:$0x1]
        %1257 = vset.pattern.permute.xlu0 112
        %1258 = vperm.xlu0 %1257, %v1110
        %v1259 = vpop.permute.xlu0 %1258
        %v1261 = vperm.slane %v1256, 0
        %v1262 = vsub.f32 %v1259, %v1261
        %v1263 = vand.u32 2147483647, %v1262
        %v1264 = vld [vmem:[%s195 + $0x71] sm:$0x1]
        %1265 = vset.pattern.permute.xlu0 113
        %1266 = vperm.xlu0 %1265, %v1110
        %v1267 = vpop.permute.xlu0 %1266
        %v1269 = vperm.slane %v1264, 0
        %v1270 = vsub.f32 %v1267, %v1269
        %v1271 = vand.u32 2147483647, %v1270
        %v1272 = vadd.f32 %v1263, %v1271
        %v1273 = vadd.f32 %v1255, %v1272
        %v1274 = vld [vmem:[%s195 + $0x72] sm:$0x1]
        %1275 = vset.pattern.permute.xlu0 114
        %1276 = vperm.xlu0 %1275, %v1110
        %v1277 = vpop.permute.xlu0 %1276
        %v1279 = vperm.slane %v1274, 0
        %v1280 = vsub.f32 %v1277, %v1279
        %v1281 = vand.u32 2147483647, %v1280
        %v1282 = vld [vmem:[%s195 + $0x73] sm:$0x1]
        %1283 = vset.pattern.permute.xlu0 115
        %1284 = vperm.xlu0 %1283, %v1110
        %v1285 = vpop.permute.xlu0 %1284
        %v1287 = vperm.slane %v1282, 0
        %v1288 = vsub.f32 %v1285, %v1287
        %v1289 = vand.u32 2147483647, %v1288
        %v1290 = vadd.f32 %v1281, %v1289
        %v1291 = vadd.f32 %v1273, %v1290
        %v1292 = vld [vmem:[%s195 + $0x74] sm:$0x1]
        %1293 = vset.pattern.permute.xlu0 116
        %1294 = vperm.xlu0 %1293, %v1110
        %v1295 = vpop.permute.xlu0 %1294
        %v1297 = vperm.slane %v1292, 0
        %v1298 = vsub.f32 %v1295, %v1297
        %v1299 = vand.u32 2147483647, %v1298
        %v1300 = vld [vmem:[%s195 + $0x75] sm:$0x1]
        %1301 = vset.pattern.permute.xlu0 117
        %1302 = vperm.xlu0 %1301, %v1110
        %v1303 = vpop.permute.xlu0 %1302
        %v1305 = vperm.slane %v1300, 0
        %v1306 = vsub.f32 %v1303, %v1305
        %v1307 = vand.u32 2147483647, %v1306
        %v1308 = vadd.f32 %v1299, %v1307
        %v1309 = vadd.f32 %v1291, %v1308
        %v1310 = vld [vmem:[%s195 + $0x76] sm:$0x1]
        %1311 = vset.pattern.permute.xlu0 118
        %1312 = vperm.xlu0 %1311, %v1110
        %v1313 = vpop.permute.xlu0 %1312
        %v1315 = vperm.slane %v1310, 0
        %v1316 = vsub.f32 %v1313, %v1315
        %v1317 = vand.u32 2147483647, %v1316
        %v1318 = vld [vmem:[%s195 + $0x77] sm:$0x1]
        %1319 = vset.pattern.permute.xlu0 119
        %1320 = vperm.xlu0 %1319, %v1110
        %v1321 = vpop.permute.xlu0 %1320
        %v1323 = vperm.slane %v1318, 0
        %v1324 = vsub.f32 %v1321, %v1323
        %v1325 = vand.u32 2147483647, %v1324
        %v1326 = vadd.f32 %v1317, %v1325
        %v1327 = vadd.f32 %v1309, %v1326
        %v1328 = vld [vmem:[%s195 + $0x78] sm:$0x1]
        %1329 = vset.pattern.permute.xlu0 120
        %1330 = vperm.xlu0 %1329, %v1110
        %v1331 = vpop.permute.xlu0 %1330
        %v1333 = vperm.slane %v1328, 0
        %v1334 = vsub.f32 %v1331, %v1333
        %v1335 = vand.u32 2147483647, %v1334
        %v1336 = vld [vmem:[%s195 + $0x79] sm:$0x1]
        %1337 = vset.pattern.permute.xlu0 121
        %1338 = vperm.xlu0 %1337, %v1110
        %v1339 = vpop.permute.xlu0 %1338
        %v1341 = vperm.slane %v1336, 0
        %v1342 = vsub.f32 %v1339, %v1341
        %v1343 = vand.u32 2147483647, %v1342
        %v1344 = vadd.f32 %v1335, %v1343
        %v1345 = vadd.f32 %v1327, %v1344
        %v1346 = vld [vmem:[%s195 + $0x7a] sm:$0x1]
        %1347 = vset.pattern.permute.xlu0 122
        %1348 = vperm.xlu0 %1347, %v1110
        %v1349 = vpop.permute.xlu0 %1348
        %v1351 = vperm.slane %v1346, 0
        %v1352 = vsub.f32 %v1349, %v1351
        %v1353 = vand.u32 2147483647, %v1352
        %v1354 = vld [vmem:[%s195 + $0x7b] sm:$0x1]
        %1355 = vset.pattern.permute.xlu0 123
        %1356 = vperm.xlu0 %1355, %v1110
        %v1357 = vpop.permute.xlu0 %1356
        %v1359 = vperm.slane %v1354, 0
        %v1360 = vsub.f32 %v1357, %v1359
        %v1361 = vand.u32 2147483647, %v1360
        %v1362 = vadd.f32 %v1353, %v1361
        %v1363 = vadd.f32 %v1345, %v1362
        %v1364 = vld [vmem:[%s195 + $0x7c] sm:$0x1]
        %1365 = vset.pattern.permute.xlu0 124
        %1366 = vperm.xlu0 %1365, %v1110
        %v1367 = vpop.permute.xlu0 %1366
        %v1369 = vperm.slane %v1364, 0
        %v1370 = vsub.f32 %v1367, %v1369
        %v1371 = vand.u32 2147483647, %v1370
        %v1372 = vld [vmem:[%s195 + $0x7d] sm:$0x1]
        %1373 = vset.pattern.permute.xlu0 125
        %1374 = vperm.xlu0 %1373, %v1110
        %v1375 = vpop.permute.xlu0 %1374
        %v1377 = vperm.slane %v1372, 0
        %v1378 = vsub.f32 %v1375, %v1377
        %v1379 = vand.u32 2147483647, %v1378
        %v1380 = vadd.f32 %v1371, %v1379
        %v1381 = vadd.f32 %v1363, %v1380
        %v1382 = vld [vmem:[%s195 + $0x7e] sm:$0x1]
        %1383 = vset.pattern.permute.xlu0 126
        %1384 = vperm.xlu0 %1383, %v1110
        %v1385 = vpop.permute.xlu0 %1384
        %v1387 = vperm.slane %v1382, 0
        %v1388 = vsub.f32 %v1385, %v1387
        %v1389 = vand.u32 2147483647, %v1388
        %v1390 = vld [vmem:[%s195 + $0x7f] sm:$0x1]
        %1391 = vset.pattern.permute.xlu0 127
        %1392 = vperm.xlu0 %1391, %v1110
        %v1393 = vpop.permute.xlu0 %1392
        %v1395 = vperm.slane %v1390, 0
        %v1396 = vsub.f32 %v1393, %v1395
        %v1397 = vand.u32 2147483647, %v1396
        %v1398 = vadd.f32 %v1389, %v1397
        %v1399 = vadd.f32 %v1381, %v1398
        %v1400 = vmul.f32 %v1399, -0.17677669
        %s1401 = scalar_lea.vmem %s231, 24 [#allocation7]
        %1402 = vst [vmem:[%s1401] sm:$0xff] %v1400
        %s1403 = sand.u32 %s109, 1
        %s1404 = scalar_lea.sflag [#allocation4], %s1403
        %s1405 = sand.u32 %s109, 1
        %s1406 = smul.addr %s1405, 32
        %s1407 = scalar_lea.vmem [#allocation7], %s1406
        // Predicated region
        $region37: #{tpu_custom_call.1} parent=27 // pred_check
          %p1408 = pneg %p119
        $region38: #{tpu_custom_call.1} parent=27 // pred_check_branch
          %1410 = sbr.rel (%p1408) target = $region40
        $region39: #{tpu_custom_call.1} parent=27 // pred_region
          %1412 = vsyncadd %s1404, 0
          %s1413 = sadd.s32 %s29, %s28
          %s1414 = smul.addr %s27, 4
          %s1415 = sadd.s32 %s1413, %s1414
          %s1416 = smul.addr %s1415, 8
          %s1417 = scalar_lea.hbm %s2, %s1416
          %s1418 = sshll.u32 %s1407, 4
          %s1419 = int_to_ptr.vmem [resolvable:$true] %s1418
          %s1420 = sshll.u32 %s1417, 4
          %s1421 = int_to_ptr.hbm [resolvable:$true] %s1420
          %1426 = dma.vmem_to_hbm [thread:$0]  %s1419, 512, %s1421, %s1404, 128, 128, 8
        $region40: #{tpu_custom_call.1} parent=27 // pred_fallthru
          _
      $region28: #{tpu_custom_call.1} parent=5 // pred_fallthru
        _
      %p1427 = scmp.le.s32.totalorder 2, %s17
      // Predicated region
      $region41: #{tpu_custom_call.1} parent=5 // pred_check
        %p1428 = pneg %p1427
      $region42: #{tpu_custom_call.1} parent=5 // pred_check_branch
        %1430 = sbr.rel (%p1428) target = $region44
      $region43: #{tpu_custom_call.1} parent=5 // pred_region
        %s1431 = ssub.s32 %s17, 2
        // Predicated region
        $region45: #{tpu_custom_call.1} parent=43 // pred_check
          %p1432 = pneg %p125
        $region46: #{tpu_custom_call.1} parent=43 // pred_check_branch
          %1434 = sbr.rel (%p1432) target = $region48
        $region47: #{tpu_custom_call.1} parent=43 // pred_region
          %s1435 = sand.u32 %s110, 1
          %s1436 = scalar_lea.sflag [#allocation4], %s1435
          %s1437 = sand.u32 %s110, 1
          %s1438 = smul.addr %s1437, 32
          %s1439 = scalar_lea.vmem [#allocation7], %s1438
          %1441 = dma.done %s1436, 512
        $region48: #{tpu_custom_call.1} parent=43 // pred_fallthru
          _
      $region44: #{tpu_custom_call.1} parent=5 // pred_fallthru
        _
    $region6: #{tpu_custom_call.1} parent=1 // loop_footer
      %s21 = sadd.s32 1, %s17
    $region7: #{tpu_custom_call.1} parent=1 // loop_footer_branch
      %16 = sbr.rel target = $region3
    $region8: #{tpu_custom_call.1} parent=1 // loop_exit
      _
    %1442 = vsyncpa [#allocation3], 1
    %s1443 = scalar_lea.sflag [#allocation3], 1
    %1444 = vsyncpa %s1443, 1
    %1445 = vsyncpa [#allocation6], 1
    %s1446 = scalar_lea.sflag [#allocation6], 1
    %1447 = vsyncpa %s1446, 1
    %1448 = vsyncpa [#allocation4], 1
    %s1449 = scalar_lea.sflag [#allocation4], 1
    %1450 = vsyncpa %s1449, 1

</llo_original>
